<compile_context>
chip_gen: v7x
topology: tpu7x:2x2x1
jax: 0.10.0
libtpu: 0.0.40
codegen_flags: <defaults>
</compile_context>

<pallas_src>
import jax
import jax.numpy as jnp
from jax.experimental import pallas as pl
from jax.experimental.pallas import tpu as pltpu


# ----------------------------------------------------------------------------
# Static geometry of Net (input 1x32x32, as implied by fc1 = Linear(16*6*6,.)).
# ----------------------------------------------------------------------------
IMG = 32                      # input H = W
K = 3                         # conv kernel size
C1_OUT = 6                    # conv1 output channels
C2_OUT = 16                   # conv2 output channels
TAPS = K * K                  # 9 conv taps
S1_W = 30 * IMG               # conv1 activation, flat spatial (stride 32) = 960
X_W = 1032                    # padded flat input width  (>= 957 + 66 + 1)
M1_W = 926                    # pool1 4-tap-max width    (covers p <= 925)
P1_SP = 15                    # pooled1 spatial side
P1_W = 264                    # pooled1 flat width (stride 15) + zero tail (>=257)
C2_W = P1_SP * P1_SP          # conv2 activation flat width (stride 15) = 225
M2_W = 161                    # pool2 4-tap-max width    (covers p <= 160)
P2_SP = 6                     # pooled2 spatial side
P2_W = 40                     # pooled2 lanes per channel: 36 features + 4 pad
FC1_BLK = P2_W                # per-channel block inside the fc1 weight slab
SLAB_R = TAPS * 8             # 72 im2col rows: each tap's 6 channels padded to 8
FC1_N, FC2_N, FC3_N = 120, 84, 10


# ----------------------------------------------------------------------------
# The fused kernel: one grid step == one sample.
# ----------------------------------------------------------------------------
def _net_kernel(x_ref, w1_ref, b1_ref, w2_ref, b2_ref, e1_ref, s2t_ref,
                fc1w_ref, fc1b_ref, fc2w_ref, fc2b_ref, fc3w_ref, fc3b_ref,
                out_ref,
                s1_ref, m1_ref, p1_ref, slab_ref, s2_ref, diag_ref):
    f32 = jnp.float32

    # ---- conv1 (1->6, 3x3, VALID) + bias + ReLU ------------------------------
    # channels on sublanes, flat spatial (stride 32) on lanes; 9 VPU taps.
    acc1 = jnp.zeros((C1_OUT, S1_W), f32)
    for kh in range(K):
        for kw in range(K):
            t = kh * K + kw
            d = kh * IMG + kw
            xs = x_ref[0, :, pl.ds(d, S1_W)]            # (1, 960) shifted input
            wc = w1_ref[:, pl.ds(t, 1)]                 # (6, 1)   per-tap weights
            acc1 = acc1 + wc * xs                       # broadcast outer product
    s1_ref[...] = jnp.maximum(acc1 + b1_ref[...], 0.0)

    # ---- maxpool1 (2x2, stride 2): 4-tap max over shifted lane windows -------
    m1_ref[...] = jnp.maximum(
        jnp.maximum(s1_ref[:, pl.ds(0, M1_W)], s1_ref[:, pl.ds(1, M1_W)]),
        jnp.maximum(s1_ref[:, pl.ds(IMG, M1_W)], s1_ref[:, pl.ds(IMG + 1, M1_W)]))

    # ---- pool1 compaction to the stride-15 layout ----------------------------
    # 15 tiny (6,30)@(30,15) even-column selections (replaces the old 925x264
    # gather matmul).  The zero-init also makes the tail lanes read by conv2's
    # shifted windows exact zeros.
    p1_ref[...] = jnp.zeros((C1_OUT, P1_W), f32)
    e1 = e1_ref[...]                                    # (30, 15) 0/1 selector
    for r in range(P1_SP):
        win = m1_ref[:, pl.ds(2 * IMG * r, 2 * P1_SP)]  # (6, 30)
        p1_ref[:, pl.ds(P1_SP * r, P1_SP)] = jnp.dot(
            win, e1, preferred_element_type=f32)

    # ---- conv2 (6->16, 3x3) + bias + ReLU: im2col slab + ONE MXU matmul ------
    zpad = jnp.zeros((2, C2_W), f32)
    for kh in range(K):
        for kw in range(K):
            t = kh * K + kw
            d = kh * P1_SP + kw
            slab_ref[pl.ds(8 * t, C1_OUT), :] = p1_ref[:, pl.ds(d, C2_W)]
            slab_ref[pl.ds(8 * t + C1_OUT, 2), :] = zpad   # keep pad rows zero
    acc2 = jnp.dot(w2_ref[...], slab_ref[...], preferred_element_type=f32)
    s2_ref[...] = jnp.maximum(acc2 + b2_ref[...], 0.0)     # (16, 225)

    # ---- maxpool2 + flatten (c*36 + h*6 + w order) via one small selection ---
    m2 = jnp.maximum(
        jnp.maximum(s2_ref[:, pl.ds(0, M2_W)], s2_ref[:, pl.ds(1, M2_W)]),
        jnp.maximum(s2_ref[:, pl.ds(P1_SP, M2_W)],
                    s2_ref[:, pl.ds(P1_SP + 1, M2_W)]))
    p2 = jnp.dot(m2, s2t_ref[...], preferred_element_type=f32)   # (16, 40)

    # ---- fc1 + ReLU: block-diagonal slab -> ONE (16,640)@(640,120) matmul ----
    row_id = jax.lax.broadcasted_iota(jnp.int32, (C2_OUT, FC1_BLK), 0)
    for c in range(C2_OUT):
        diag_ref[:, pl.ds(FC1_BLK * c, FC1_BLK)] = jnp.where(
            row_id == c, p2, 0.0)                       # channel c in block c
    g = jnp.dot(diag_ref[...], fc1w_ref[...], preferred_element_type=f32)
    h = jnp.maximum(jnp.sum(g, axis=0, keepdims=True) + fc1b_ref[...], 0.0)

    # ---- fc2 + ReLU, fc3 ------------------------------------------------------
    h = jnp.maximum(
        jnp.dot(h, fc2w_ref[...], preferred_element_type=f32) + fc2b_ref[...], 0.0)
    out = jnp.dot(h, fc3w_ref[...], preferred_element_type=f32) + fc3b_ref[...]
    out_ref[0] = out


# ----------------------------------------------------------------------------
# Host-side helpers (one-time layout glue, constant-folded under jit).
# ----------------------------------------------------------------------------
def _pool_select_matrix(n_out, row_stride, in_rows, out_cols):
    """0/1 matrix S: S[2*(q//n_out)*row_stride + 2*(q%n_out), q] = 1, q<n_out^2."""
    q = jnp.arange(n_out * n_out)
    src = 2 * (q // n_out) * row_stride + 2 * (q % n_out)
    return jnp.zeros((in_rows, out_cols), jnp.float32).at[src, q].set(1.0)


def _even_selector(n_sel):
    """(2*n_sel, n_sel) 0/1 matrix selecting even columns."""
    q = jnp.arange(n_sel)
    return jnp.zeros((2 * n_sel, n_sel), jnp.float32).at[2 * q, q].set(1.0)


@jax.jit
def net_forward(x, params):
    N = x.shape[0]
    f32 = jnp.float32

    # Input as per-sample flat rows (pad tail so every shifted tap is in-bounds).
    x_rows = jnp.pad(x.astype(f32).reshape(N, 1, IMG * IMG),
                     ((0, 0), (0, 0), (0, X_W - IMG * IMG)))

    # Weight re-layouts (all tiny, done once per call by XLA).
    w1m = params["conv1_w"].reshape(C1_OUT, TAPS)                       # (6, 9)
    b1c = params["conv1_b"].reshape(C1_OUT, 1)
    # conv2 weights, tap-major; each tap's 6 input channels padded to 8 rows.
    w2m = params["conv2_w"].transpose(0, 2, 3, 1).reshape(C2_OUT, TAPS, C1_OUT)
    w2m = jnp.pad(w2m, ((0, 0), (0, 0), (0, 8 - C1_OUT))).reshape(C2_OUT, SLAB_R)
    b2c = params["conv2_b"].reshape(C2_OUT, 1)
    e1 = _even_selector(P1_SP)                                          # (30, 15)
    s2t = _pool_select_matrix(P2_SP, P1_SP, M2_W, P2_W)                 # (161, 40)
    fc1w = params["fc1_w"].T.reshape(C2_OUT, P2_SP * P2_SP, FC1_N)      # (16,36,120)
    fc1w = jnp.pad(fc1w, ((0, 0), (0, FC1_BLK - P2_SP * P2_SP), (0, 0)))
    fc1w = fc1w.reshape(C2_OUT * FC1_BLK, FC1_N)                        # (640, 120)
    fc1b = params["fc1_b"].reshape(1, FC1_N)
    fc2w = params["fc2_w"].T                                            # (120, 84)
    fc2b = params["fc2_b"].reshape(1, FC2_N)
    fc3w = params["fc3_w"].T                                            # (84, 10)
    fc3b = params["fc3_b"].reshape(1, FC3_N)

    def full(shape):
        return pl.BlockSpec(shape, lambda n: (0,) * len(shape))

    macs = (TAPS * C1_OUT * S1_W                    # conv1 (VPU)
            + P1_SP * C1_OUT * 2 * P1_SP * P1_SP    # pool1 compaction
            + C2_OUT * SLAB_R * C2_W                # conv2 (single matmul)
            + C2_OUT * M2_W * P2_W                  # pool2 selection
            + C2_OUT * C2_OUT * FC1_BLK * FC1_N     # fc1 block-diagonal matmul
            + FC1_N * FC2_N + FC2_N * FC3_N)        # fc2, fc3
    inputs = (x_rows, w1m, b1c, w2m, b2c, e1, s2t, fc1w, fc1b,
              fc2w, fc2b, fc3w, fc3b)
    bytes_accessed = 4 * (sum(a.size for a in inputs) + N * FC3_N)

    out = pl.pallas_call(
        _net_kernel,
        out_shape=jax.ShapeDtypeStruct((N, 1, FC3_N), f32),
        grid_spec=pltpu.PrefetchScalarGridSpec(
            num_scalar_prefetch=0,
            grid=(N,),
            in_specs=[
                pl.BlockSpec((1, 1, X_W), lambda n: (n, 0, 0)),   # x (per sample)
                full((C1_OUT, TAPS)),                             # conv1 weights
                full((C1_OUT, 1)),                                # conv1 bias
                full((C2_OUT, SLAB_R)),                           # conv2 weights (padded)
                full((C2_OUT, 1)),                                # conv2 bias
                full((2 * P1_SP, P1_SP)),                         # pool1 even selector
                full((M2_W, P2_W)),                               # pool2 selection
                full((C2_OUT * FC1_BLK, FC1_N)),                  # fc1 weight slab
                full((1, FC1_N)),                                 # fc1 bias
                full((FC1_N, FC2_N)),                             # fc2 weights
                full((1, FC2_N)),                                 # fc2 bias
                full((FC2_N, FC3_N)),                             # fc3 weights
                full((1, FC3_N)),                                 # fc3 bias
            ],
            out_specs=pl.BlockSpec((1, 1, FC3_N), lambda n: (n, 0, 0)),
            scratch_shapes=[
                pltpu.VMEM((C1_OUT, S1_W), f32),          # conv1+relu activation
                pltpu.VMEM((C1_OUT, M1_W), f32),          # pool1 4-tap max
                pltpu.VMEM((C1_OUT, P1_W), f32),          # pooled1 (stride-15 flat)
                pltpu.VMEM((SLAB_R, C2_W), f32),          # conv2 im2col slab
                pltpu.VMEM((C2_OUT, C2_W), f32),          # conv2+relu activation
                pltpu.VMEM((C2_OUT, C2_OUT * FC1_BLK), f32),  # fc1 block-diag slab
            ],
        ),
        compiler_params=pltpu.CompilerParams(
            dimension_semantics=("parallel",)),
        cost_estimate=pl.CostEstimate(
            flops=2 * N * macs, transcendentals=0,
            bytes_accessed=int(bytes_accessed)),
    )(*inputs)

    return out.reshape(N, FC3_N)


# ----------------------------------------------------------------------------
# Pure-JAX reference (for a correctness cross-check) and parameter init.
# ----------------------------------------------------------------------------
def _reference_forward(x, p):
    hp = jax.lax.Precision.HIGHEST

    def conv(z, w, b):
        out = jax.lax.conv_general_dilated(
            z, w, window_strides=(1, 1), padding="VALID",
            dimension_numbers=("NCHW", "OIHW", "NCHW"), precision=hp)
        return out + b.reshape(1, -1, 1, 1)

    def pool(z):
        return jax.lax.reduce_window(z, -jnp.inf, jax.lax.max,
                                     (1, 1, 2, 2), (1, 1, 2, 2), "VALID")

    z = pool(jax.nn.relu(conv(x, p["conv1_w"], p["conv1_b"])))
    z = pool(jax.nn.relu(conv(z, p["conv2_w"], p["conv2_b"])))
    z = z.reshape(z.shape[0], -1)
    z = jax.nn.relu(jnp.dot(z, p["fc1_w"].T, precision=hp) + p["fc1_b"])
    z = jax.nn.relu(jnp.dot(z, p["fc2_w"].T, precision=hp) + p["fc2_b"])
    return jnp.dot(z, p["fc3_w"].T, precision=hp) + p["fc3_b"]


def init_params(key):
    """Deterministic init mimicking PyTorch's default U(-1/sqrt(fan_in), ...)."""
    def uniform(k, shape, fan_in):
        bound = 1.0 / jnp.sqrt(fan_in)
        return jax.random.uniform(k, shape, jnp.float32, -bound, bound)

    ks = jax.random.split(key, 10)
    return {
        "conv1_w": uniform(ks[0], (6, 1, 3, 3), 1 * 3 * 3),
        "conv1_b": uniform(ks[1], (6,), 1 * 3 * 3),
        "conv2_w": uniform(ks[2], (16, 6, 3, 3), 6 * 3 * 3),
        "conv2_b": uniform(ks[3], (16,), 6 * 3 * 3),
        "fc1_w": uniform(ks[4], (120, 16 * 6 * 6), 16 * 6 * 6),
        "fc1_b": uniform(ks[5], (120,), 16 * 6 * 6),
        "fc2_w": uniform(ks[6], (84, 120), 120),
        "fc2_b": uniform(ks[7], (84,), 120),
        "fc3_w": uniform(ks[8], (10, 84), 84),
        "fc3_b": uniform(ks[9], (10,), 84),
    }


if __name__ == "__main__":
    key = jax.random.PRNGKey(0)
    k_x, k_p = jax.random.split(key)
    # Net's flatten (16*6*6) implies 1x32x32 inputs (LeNet). Small batch = 2.
    x = jax.random.normal(k_x, (2, 1, 32, 32), jnp.float32)
    params = init_params(k_p)

    out = jax.block_until_ready(net_forward(x, params))
    assert out.shape == (2, 10), out.shape
    assert bool(jnp.all(jnp.isfinite(out)))

    ref = _reference_forward(x, params)
    err = float(jnp.max(jnp.abs(out - ref)))
    assert bool(jnp.allclose(out, ref, rtol=1e-3, atol=1e-3)), err
    print("KERNEL_OK")
</pallas_src>

<mosaic_0001>
module attributes {stable_mosaic.version = 11 : i64} {
  func.func @_net_kernel(%arg0: i32, %arg1: memref<1x1x1032xf32, #tpu.memory_space<vmem>>, %arg2: memref<6x9xf32, #tpu.memory_space<vmem>>, %arg3: memref<6x1xf32, #tpu.memory_space<vmem>>, %arg4: memref<16x72xf32, #tpu.memory_space<vmem>>, %arg5: memref<16x1xf32, #tpu.memory_space<vmem>>, %arg6: memref<30x15xf32, #tpu.memory_space<vmem>>, %arg7: memref<161x40xf32, #tpu.memory_space<vmem>>, %arg8: memref<640x120xf32, #tpu.memory_space<vmem>>, %arg9: memref<1x120xf32, #tpu.memory_space<vmem>>, %arg10: memref<120x84xf32, #tpu.memory_space<vmem>>, %arg11: memref<1x84xf32, #tpu.memory_space<vmem>>, %arg12: memref<84x10xf32, #tpu.memory_space<vmem>>, %arg13: memref<1x10xf32, #tpu.memory_space<vmem>>, %arg14: memref<1x1x10xf32, #tpu.memory_space<vmem>>, %arg15: memref<6x960xf32, #tpu.memory_space<vmem>>, %arg16: memref<6x926xf32, #tpu.memory_space<vmem>>, %arg17: memref<6x264xf32, #tpu.memory_space<vmem>>, %arg18: memref<72x225xf32, #tpu.memory_space<vmem>>, %arg19: memref<16x225xf32, #tpu.memory_space<vmem>>, %arg20: memref<16x640xf32, #tpu.memory_space<vmem>>) attributes {dimension_semantics = [#tpu.dimension_semantics<parallel>], iteration_bounds = array<i64: 2>, scalar_prefetch = 0 : i64, scratch_operands = 6 : i64, tpu.core_type = #tpu.core_type<tc>, window_params = [{transform_indices = @transform_0, window_bounds = array<i64: 1, 1, 1032>}, {pipeline_mode = #tpu.pipeline_mode<synchronous>, transform_indices = @transform_1, window_bounds = array<i64: 6, 9>}, {pipeline_mode = #tpu.pipeline_mode<synchronous>, transform_indices = @transform_2, window_bounds = array<i64: 6, 1>}, {pipeline_mode = #tpu.pipeline_mode<synchronous>, transform_indices = @transform_3, window_bounds = array<i64: 16, 72>}, {pipeline_mode = #tpu.pipeline_mode<synchronous>, transform_indices = @transform_4, window_bounds = array<i64: 16, 1>}, {pipeline_mode = #tpu.pipeline_mode<synchronous>, transform_indices = @transform_5, window_bounds = array<i64: 30, 15>}, {pipeline_mode = #tpu.pipeline_mode<synchronous>, transform_indices = @transform_6, window_bounds = array<i64: 161, 40>}, {pipeline_mode = #tpu.pipeline_mode<synchronous>, transform_indices = @transform_7, window_bounds = array<i64: 640, 120>}, {pipeline_mode = #tpu.pipeline_mode<synchronous>, transform_indices = @transform_8, window_bounds = array<i64: 1, 120>}, {pipeline_mode = #tpu.pipeline_mode<synchronous>, transform_indices = @transform_9, window_bounds = array<i64: 120, 84>}, {pipeline_mode = #tpu.pipeline_mode<synchronous>, transform_indices = @transform_10, window_bounds = array<i64: 1, 84>}, {pipeline_mode = #tpu.pipeline_mode<synchronous>, transform_indices = @transform_11, window_bounds = array<i64: 84, 10>}, {pipeline_mode = #tpu.pipeline_mode<synchronous>, transform_indices = @transform_12, window_bounds = array<i64: 1, 10>}, {transform_indices = @transform_13, window_bounds = array<i64: 1, 1, 10>}]} {
    %cst = arith.constant 0.000000e+00 : f32
    %0 = vector.broadcast %cst : f32 to vector<6x960xf32>
    %c0 = arith.constant 0 : index
    %c0_0 = arith.constant 0 : index
    %c0_1 = arith.constant 0 : index
    %1 = vector.load %arg1[%c0, %c0_0, %c0_1] : memref<1x1x1032xf32, #tpu.memory_space<vmem>>, vector<1x1x960xf32>
    %2 = vector.shape_cast %1 : vector<1x1x960xf32> to vector<1x960xf32>
    %c0_2 = arith.constant 0 : index
    %c0_3 = arith.constant 0 : index
    %3 = vector.load %arg2[%c0_2, %c0_3] : memref<6x9xf32, #tpu.memory_space<vmem>>, vector<6x1xf32>
    %4 = vector.broadcast %3 : vector<6x1xf32> to vector<6x960xf32>
    %5 = vector.broadcast %2 : vector<1x960xf32> to vector<6x960xf32>
    %6 = arith.mulf %4, %5 : vector<6x960xf32>
    %7 = arith.addf %0, %6 : vector<6x960xf32>
    %c0_4 = arith.constant 0 : index
    %c0_5 = arith.constant 0 : index
    %c1 = arith.constant 1 : index
    %8 = vector.load %arg1[%c0_4, %c0_5, %c1] : memref<1x1x1032xf32, #tpu.memory_space<vmem>>, vector<1x1x960xf32>
    %9 = vector.shape_cast %8 : vector<1x1x960xf32> to vector<1x960xf32>
    %c0_6 = arith.constant 0 : index
    %c1_7 = arith.constant 1 : index
    %10 = vector.load %arg2[%c0_6, %c1_7] : memref<6x9xf32, #tpu.memory_space<vmem>>, vector<6x1xf32>
    %11 = vector.broadcast %10 : vector<6x1xf32> to vector<6x960xf32>
    %12 = vector.broadcast %9 : vector<1x960xf32> to vector<6x960xf32>
    %13 = arith.mulf %11, %12 : vector<6x960xf32>
    %14 = arith.addf %7, %13 : vector<6x960xf32>
    %c0_8 = arith.constant 0 : index
    %c0_9 = arith.constant 0 : index
    %c2 = arith.constant 2 : index
    %15 = vector.load %arg1[%c0_8, %c0_9, %c2] : memref<1x1x1032xf32, #tpu.memory_space<vmem>>, vector<1x1x960xf32>
    %16 = vector.shape_cast %15 : vector<1x1x960xf32> to vector<1x960xf32>
    %c0_10 = arith.constant 0 : index
    %c2_11 = arith.constant 2 : index
    %17 = vector.load %arg2[%c0_10, %c2_11] : memref<6x9xf32, #tpu.memory_space<vmem>>, vector<6x1xf32>
    %18 = vector.broadcast %17 : vector<6x1xf32> to vector<6x960xf32>
    %19 = vector.broadcast %16 : vector<1x960xf32> to vector<6x960xf32>
    %20 = arith.mulf %18, %19 : vector<6x960xf32>
    %21 = arith.addf %14, %20 : vector<6x960xf32>
    %c0_12 = arith.constant 0 : index
    %c0_13 = arith.constant 0 : index
    %c32 = arith.constant 32 : index
    %22 = vector.load %arg1[%c0_12, %c0_13, %c32] : memref<1x1x1032xf32, #tpu.memory_space<vmem>>, vector<1x1x960xf32>
    %23 = vector.shape_cast %22 : vector<1x1x960xf32> to vector<1x960xf32>
    %c0_14 = arith.constant 0 : index
    %c3 = arith.constant 3 : index
    %24 = vector.load %arg2[%c0_14, %c3] : memref<6x9xf32, #tpu.memory_space<vmem>>, vector<6x1xf32>
    %25 = vector.broadcast %24 : vector<6x1xf32> to vector<6x960xf32>
    %26 = vector.broadcast %23 : vector<1x960xf32> to vector<6x960xf32>
    %27 = arith.mulf %25, %26 : vector<6x960xf32>
    %28 = arith.addf %21, %27 : vector<6x960xf32>
    %c0_15 = arith.constant 0 : index
    %c0_16 = arith.constant 0 : index
    %c33 = arith.constant 33 : index
    %29 = vector.load %arg1[%c0_15, %c0_16, %c33] : memref<1x1x1032xf32, #tpu.memory_space<vmem>>, vector<1x1x960xf32>
    %30 = vector.shape_cast %29 : vector<1x1x960xf32> to vector<1x960xf32>
    %c0_17 = arith.constant 0 : index
    %c4 = arith.constant 4 : index
    %31 = vector.load %arg2[%c0_17, %c4] : memref<6x9xf32, #tpu.memory_space<vmem>>, vector<6x1xf32>
    %32 = vector.broadcast %31 : vector<6x1xf32> to vector<6x960xf32>
    %33 = vector.broadcast %30 : vector<1x960xf32> to vector<6x960xf32>
    %34 = arith.mulf %32, %33 : vector<6x960xf32>
    %35 = arith.addf %28, %34 : vector<6x960xf32>
    %c0_18 = arith.constant 0 : index
    %c0_19 = arith.constant 0 : index
    %c34 = arith.constant 34 : index
    %36 = vector.load %arg1[%c0_18, %c0_19, %c34] : memref<1x1x1032xf32, #tpu.memory_space<vmem>>, vector<1x1x960xf32>
    %37 = vector.shape_cast %36 : vector<1x1x960xf32> to vector<1x960xf32>
    %c0_20 = arith.constant 0 : index
    %c5 = arith.constant 5 : index
    %38 = vector.load %arg2[%c0_20, %c5] : memref<6x9xf32, #tpu.memory_space<vmem>>, vector<6x1xf32>
    %39 = vector.broadcast %38 : vector<6x1xf32> to vector<6x960xf32>
    %40 = vector.broadcast %37 : vector<1x960xf32> to vector<6x960xf32>
    %41 = arith.mulf %39, %40 : vector<6x960xf32>
    %42 = arith.addf %35, %41 : vector<6x960xf32>
    %c0_21 = arith.constant 0 : index
    %c0_22 = arith.constant 0 : index
    %c64 = arith.constant 64 : index
    %43 = vector.load %arg1[%c0_21, %c0_22, %c64] : memref<1x1x1032xf32, #tpu.memory_space<vmem>>, vector<1x1x960xf32>
    %44 = vector.shape_cast %43 : vector<1x1x960xf32> to vector<1x960xf32>
    %c0_23 = arith.constant 0 : index
    %c6 = arith.constant 6 : index
    %45 = vector.load %arg2[%c0_23, %c6] : memref<6x9xf32, #tpu.memory_space<vmem>>, vector<6x1xf32>
    %46 = vector.broadcast %45 : vector<6x1xf32> to vector<6x960xf32>
    %47 = vector.broadcast %44 : vector<1x960xf32> to vector<6x960xf32>
    %48 = arith.mulf %46, %47 : vector<6x960xf32>
    %49 = arith.addf %42, %48 : vector<6x960xf32>
    %c0_24 = arith.constant 0 : index
    %c0_25 = arith.constant 0 : index
    %c65 = arith.constant 65 : index
    %50 = vector.load %arg1[%c0_24, %c0_25, %c65] : memref<1x1x1032xf32, #tpu.memory_space<vmem>>, vector<1x1x960xf32>
    %51 = vector.shape_cast %50 : vector<1x1x960xf32> to vector<1x960xf32>
    %c0_26 = arith.constant 0 : index
    %c7 = arith.constant 7 : index
    %52 = vector.load %arg2[%c0_26, %c7] : memref<6x9xf32, #tpu.memory_space<vmem>>, vector<6x1xf32>
    %53 = vector.broadcast %52 : vector<6x1xf32> to vector<6x960xf32>
    %54 = vector.broadcast %51 : vector<1x960xf32> to vector<6x960xf32>
    %55 = arith.mulf %53, %54 : vector<6x960xf32>
    %56 = arith.addf %49, %55 : vector<6x960xf32>
    %c0_27 = arith.constant 0 : index
    %c0_28 = arith.constant 0 : index
    %c66 = arith.constant 66 : index
    %57 = vector.load %arg1[%c0_27, %c0_28, %c66] : memref<1x1x1032xf32, #tpu.memory_space<vmem>>, vector<1x1x960xf32>
    %58 = vector.shape_cast %57 : vector<1x1x960xf32> to vector<1x960xf32>
    %c0_29 = arith.constant 0 : index
    %c8 = arith.constant 8 : index
    %59 = vector.load %arg2[%c0_29, %c8] : memref<6x9xf32, #tpu.memory_space<vmem>>, vector<6x1xf32>
    %60 = vector.broadcast %59 : vector<6x1xf32> to vector<6x960xf32>
    %61 = vector.broadcast %58 : vector<1x960xf32> to vector<6x960xf32>
    %62 = arith.mulf %60, %61 : vector<6x960xf32>
    %63 = arith.addf %56, %62 : vector<6x960xf32>
    %c0_30 = arith.constant 0 : index
    %c0_31 = arith.constant 0 : index
    %64 = vector.load %arg3[%c0_30, %c0_31] : memref<6x1xf32, #tpu.memory_space<vmem>>, vector<6x1xf32>
    %65 = vector.broadcast %64 : vector<6x1xf32> to vector<6x960xf32>
    %66 = arith.addf %63, %65 : vector<6x960xf32>
    %cst_32 = arith.constant 0.000000e+00 : f32
    %67 = vector.broadcast %cst_32 : f32 to vector<6x960xf32>
    %68 = arith.maximumf %66, %67 : vector<6x960xf32>
    %c0_33 = arith.constant 0 : index
    %c0_34 = arith.constant 0 : index
    %69 = vector.load %arg15[%c0_33, %c0_34] : memref<6x960xf32, #tpu.memory_space<vmem>>, vector<6x960xf32>
    tpu.vector_store %arg15[%c0_33, %c0_34], %68 {strides = array<i32>} : memref<6x960xf32, #tpu.memory_space<vmem>>, vector<6x960xf32>,
    %c0_35 = arith.constant 0 : index
    %c0_36 = arith.constant 0 : index
    %70 = vector.load %arg15[%c0_35, %c0_36] : memref<6x960xf32, #tpu.memory_space<vmem>>, vector<6x926xf32>
    %c0_37 = arith.constant 0 : index
    %c1_38 = arith.constant 1 : index
    %71 = vector.load %arg15[%c0_37, %c1_38] : memref<6x960xf32, #tpu.memory_space<vmem>>, vector<6x926xf32>
    %72 = arith.maximumf %70, %71 : vector<6x926xf32>
    %c0_39 = arith.constant 0 : index
    %c32_40 = arith.constant 32 : index
    %73 = vector.load %arg15[%c0_39, %c32_40] : memref<6x960xf32, #tpu.memory_space<vmem>>, vector<6x926xf32>
    %c0_41 = arith.constant 0 : index
    %c33_42 = arith.constant 33 : index
    %74 = vector.load %arg15[%c0_41, %c33_42] : memref<6x960xf32, #tpu.memory_space<vmem>>, vector<6x926xf32>
    %75 = arith.maximumf %73, %74 : vector<6x926xf32>
    %76 = arith.maximumf %72, %75 : vector<6x926xf32>
    %c0_43 = arith.constant 0 : index
    %c0_44 = arith.constant 0 : index
    %77 = vector.load %arg16[%c0_43, %c0_44] : memref<6x926xf32, #tpu.memory_space<vmem>>, vector<6x926xf32>
    tpu.vector_store %arg16[%c0_43, %c0_44], %76 {strides = array<i32>} : memref<6x926xf32, #tpu.memory_space<vmem>>, vector<6x926xf32>,
    %cst_45 = arith.constant 0.000000e+00 : f32
    %78 = vector.broadcast %cst_45 : f32 to vector<6x264xf32>
    %c0_46 = arith.constant 0 : index
    %c0_47 = arith.constant 0 : index
    %79 = vector.load %arg17[%c0_46, %c0_47] : memref<6x264xf32, #tpu.memory_space<vmem>>, vector<6x264xf32>
    tpu.vector_store %arg17[%c0_46, %c0_47], %78 {strides = array<i32>} : memref<6x264xf32, #tpu.memory_space<vmem>>, vector<6x264xf32>,
    %c0_48 = arith.constant 0 : index
    %c0_49 = arith.constant 0 : index
    %80 = vector.load %arg6[%c0_48, %c0_49] : memref<30x15xf32, #tpu.memory_space<vmem>>, vector<30x15xf32>
    %c0_50 = arith.constant 0 : index
    %c0_51 = arith.constant 0 : index
    %81 = vector.load %arg16[%c0_50, %c0_51] : memref<6x926xf32, #tpu.memory_space<vmem>>, vector<6x30xf32>
    %cst_52 = arith.constant dense<0.000000e+00> : vector<6x15xf32>
    %82 = tpu.matmul %81, %80, %cst_52 {dimension_numbers = #tpu.dot_dimension_numbers<[1], [0], [0], [1], [0, 0, 1, 1], [], []>} : vector<6x30xf32>, vector<30x15xf32>, vector<6x15xf32> -> vector<6x15xf32>
    %c0_53 = arith.constant 0 : index
    %c0_54 = arith.constant 0 : index
    %83 = vector.load %arg17[%c0_53, %c0_54] : memref<6x264xf32, #tpu.memory_space<vmem>>, vector<6x15xf32>
    tpu.vector_store %arg17[%c0_53, %c0_54], %82 {strides = array<i32>} : memref<6x264xf32, #tpu.memory_space<vmem>>, vector<6x15xf32>,
    %c0_55 = arith.constant 0 : index
    %c64_56 = arith.constant 64 : index
    %84 = vector.load %arg16[%c0_55, %c64_56] : memref<6x926xf32, #tpu.memory_space<vmem>>, vector<6x30xf32>
    %cst_57 = arith.constant dense<0.000000e+00> : vector<6x15xf32>
    %85 = tpu.matmul %84, %80, %cst_57 {dimension_numbers = #tpu.dot_dimension_numbers<[1], [0], [0], [1], [0, 0, 1, 1], [], []>} : vector<6x30xf32>, vector<30x15xf32>, vector<6x15xf32> -> vector<6x15xf32>
    %c0_58 = arith.constant 0 : index
    %c15 = arith.constant 15 : index
    %86 = vector.load %arg17[%c0_58, %c15] : memref<6x264xf32, #tpu.memory_space<vmem>>, vector<6x15xf32>
    tpu.vector_store %arg17[%c0_58, %c15], %85 {strides = array<i32>} : memref<6x264xf32, #tpu.memory_space<vmem>>, vector<6x15xf32>,
    %c0_59 = arith.constant 0 : index
    %c128 = arith.constant 128 : index
    %87 = vector.load %arg16[%c0_59, %c128] : memref<6x926xf32, #tpu.memory_space<vmem>>, vector<6x30xf32>
    %cst_60 = arith.constant dense<0.000000e+00> : vector<6x15xf32>
    %88 = tpu.matmul %87, %80, %cst_60 {dimension_numbers = #tpu.dot_dimension_numbers<[1], [0], [0], [1], [0, 0, 1, 1], [], []>} : vector<6x30xf32>, vector<30x15xf32>, vector<6x15xf32> -> vector<6x15xf32>
    %c0_61 = arith.constant 0 : index
    %c30 = arith.constant 30 : index
    %89 = vector.load %arg17[%c0_61, %c30] : memref<6x264xf32, #tpu.memory_space<vmem>>, vector<6x15xf32>
    tpu.vector_store %arg17[%c0_61, %c30], %88 {strides = array<i32>} : memref<6x264xf32, #tpu.memory_space<vmem>>, vector<6x15xf32>,
    %c0_62 = arith.constant 0 : index
    %c192 = arith.constant 192 : index
    %90 = vector.load %arg16[%c0_62, %c192] : memref<6x926xf32, #tpu.memory_space<vmem>>, vector<6x30xf32>
    %cst_63 = arith.constant dense<0.000000e+00> : vector<6x15xf32>
    %91 = tpu.matmul %90, %80, %cst_63 {dimension_numbers = #tpu.dot_dimension_numbers<[1], [0], [0], [1], [0, 0, 1, 1], [], []>} : vector<6x30xf32>, vector<30x15xf32>, vector<6x15xf32> -> vector<6x15xf32>
    %c0_64 = arith.constant 0 : index
    %c45 = arith.constant 45 : index
    %92 = vector.load %arg17[%c0_64, %c45] : memref<6x264xf32, #tpu.memory_space<vmem>>, vector<6x15xf32>
    tpu.vector_store %arg17[%c0_64, %c45], %91 {strides = array<i32>} : memref<6x264xf32, #tpu.memory_space<vmem>>, vector<6x15xf32>,
    %c0_65 = arith.constant 0 : index
    %c256 = arith.constant 256 : index
    %93 = vector.load %arg16[%c0_65, %c256] : memref<6x926xf32, #tpu.memory_space<vmem>>, vector<6x30xf32>
    %cst_66 = arith.constant dense<0.000000e+00> : vector<6x15xf32>
    %94 = tpu.matmul %93, %80, %cst_66 {dimension_numbers = #tpu.dot_dimension_numbers<[1], [0], [0], [1], [0, 0, 1, 1], [], []>} : vector<6x30xf32>, vector<30x15xf32>, vector<6x15xf32> -> vector<6x15xf32>
    %c0_67 = arith.constant 0 : index
    %c60 = arith.constant 60 : index
    %95 = vector.load %arg17[%c0_67, %c60] : memref<6x264xf32, #tpu.memory_space<vmem>>, vector<6x15xf32>
    tpu.vector_store %arg17[%c0_67, %c60], %94 {strides = array<i32>} : memref<6x264xf32, #tpu.memory_space<vmem>>, vector<6x15xf32>,
    %c0_68 = arith.constant 0 : index
    %c320 = arith.constant 320 : index
    %96 = vector.load %arg16[%c0_68, %c320] : memref<6x926xf32, #tpu.memory_space<vmem>>, vector<6x30xf32>
    %cst_69 = arith.constant dense<0.000000e+00> : vector<6x15xf32>
    %97 = tpu.matmul %96, %80, %cst_69 {dimension_numbers = #tpu.dot_dimension_numbers<[1], [0], [0], [1], [0, 0, 1, 1], [], []>} : vector<6x30xf32>, vector<30x15xf32>, vector<6x15xf32> -> vector<6x15xf32>
    %c0_70 = arith.constant 0 : index
    %c75 = arith.constant 75 : index
    %98 = vector.load %arg17[%c0_70, %c75] : memref<6x264xf32, #tpu.memory_space<vmem>>, vector<6x15xf32>
    tpu.vector_store %arg17[%c0_70, %c75], %97 {strides = array<i32>} : memref<6x264xf32, #tpu.memory_space<vmem>>, vector<6x15xf32>,
    %c0_71 = arith.constant 0 : index
    %c384 = arith.constant 384 : index
    %99 = vector.load %arg16[%c0_71, %c384] : memref<6x926xf32, #tpu.memory_space<vmem>>, vector<6x30xf32>
    %cst_72 = arith.constant dense<0.000000e+00> : vector<6x15xf32>
    %100 = tpu.matmul %99, %80, %cst_72 {dimension_numbers = #tpu.dot_dimension_numbers<[1], [0], [0], [1], [0, 0, 1, 1], [], []>} : vector<6x30xf32>, vector<30x15xf32>, vector<6x15xf32> -> vector<6x15xf32>
    %c0_73 = arith.constant 0 : index
    %c90 = arith.constant 90 : index
    %101 = vector.load %arg17[%c0_73, %c90] : memref<6x264xf32, #tpu.memory_space<vmem>>, vector<6x15xf32>
    tpu.vector_store %arg17[%c0_73, %c90], %100 {strides = array<i32>} : memref<6x264xf32, #tpu.memory_space<vmem>>, vector<6x15xf32>,
    %c0_74 = arith.constant 0 : index
    %c448 = arith.constant 448 : index
    %102 = vector.load %arg16[%c0_74, %c448] : memref<6x926xf32, #tpu.memory_space<vmem>>, vector<6x30xf32>
    %cst_75 = arith.constant dense<0.000000e+00> : vector<6x15xf32>
    %103 = tpu.matmul %102, %80, %cst_75 {dimension_numbers = #tpu.dot_dimension_numbers<[1], [0], [0], [1], [0, 0, 1, 1], [], []>} : vector<6x30xf32>, vector<30x15xf32>, vector<6x15xf32> -> vector<6x15xf32>
    %c0_76 = arith.constant 0 : index
    %c105 = arith.constant 105 : index
    %104 = vector.load %arg17[%c0_76, %c105] : memref<6x264xf32, #tpu.memory_space<vmem>>, vector<6x15xf32>
    tpu.vector_store %arg17[%c0_76, %c105], %103 {strides = array<i32>} : memref<6x264xf32, #tpu.memory_space<vmem>>, vector<6x15xf32>,
    %c0_77 = arith.constant 0 : index
    %c512 = arith.constant 512 : index
    %105 = vector.load %arg16[%c0_77, %c512] : memref<6x926xf32, #tpu.memory_space<vmem>>, vector<6x30xf32>
    %cst_78 = arith.constant dense<0.000000e+00> : vector<6x15xf32>
    %106 = tpu.matmul %105, %80, %cst_78 {dimension_numbers = #tpu.dot_dimension_numbers<[1], [0], [0], [1], [0, 0, 1, 1], [], []>} : vector<6x30xf32>, vector<30x15xf32>, vector<6x15xf32> -> vector<6x15xf32>
    %c0_79 = arith.constant 0 : index
    %c120 = arith.constant 120 : index
    %107 = vector.load %arg17[%c0_79, %c120] : memref<6x264xf32, #tpu.memory_space<vmem>>, vector<6x15xf32>
    tpu.vector_store %arg17[%c0_79, %c120], %106 {strides = array<i32>} : memref<6x264xf32, #tpu.memory_space<vmem>>, vector<6x15xf32>,
    %c0_80 = arith.constant 0 : index
    %c576 = arith.constant 576 : index
    %108 = vector.load %arg16[%c0_80, %c576] : memref<6x926xf32, #tpu.memory_space<vmem>>, vector<6x30xf32>
    %cst_81 = arith.constant dense<0.000000e+00> : vector<6x15xf32>
    %109 = tpu.matmul %108, %80, %cst_81 {dimension_numbers = #tpu.dot_dimension_numbers<[1], [0], [0], [1], [0, 0, 1, 1], [], []>} : vector<6x30xf32>, vector<30x15xf32>, vector<6x15xf32> -> vector<6x15xf32>
    %c0_82 = arith.constant 0 : index
    %c135 = arith.constant 135 : index
    %110 = vector.load %arg17[%c0_82, %c135] : memref<6x264xf32, #tpu.memory_space<vmem>>, vector<6x15xf32>
    tpu.vector_store %arg17[%c0_82, %c135], %109 {strides = array<i32>} : memref<6x264xf32, #tpu.memory_space<vmem>>, vector<6x15xf32>,
    %c0_83 = arith.constant 0 : index
    %c640 = arith.constant 640 : index
    %111 = vector.load %arg16[%c0_83, %c640] : memref<6x926xf32, #tpu.memory_space<vmem>>, vector<6x30xf32>
    %cst_84 = arith.constant dense<0.000000e+00> : vector<6x15xf32>
    %112 = tpu.matmul %111, %80, %cst_84 {dimension_numbers = #tpu.dot_dimension_numbers<[1], [0], [0], [1], [0, 0, 1, 1], [], []>} : vector<6x30xf32>, vector<30x15xf32>, vector<6x15xf32> -> vector<6x15xf32>
    %c0_85 = arith.constant 0 : index
    %c150 = arith.constant 150 : index
    %113 = vector.load %arg17[%c0_85, %c150] : memref<6x264xf32, #tpu.memory_space<vmem>>, vector<6x15xf32>
    tpu.vector_store %arg17[%c0_85, %c150], %112 {strides = array<i32>} : memref<6x264xf32, #tpu.memory_space<vmem>>, vector<6x15xf32>,
    %c0_86 = arith.constant 0 : index
    %c704 = arith.constant 704 : index
    %114 = vector.load %arg16[%c0_86, %c704] : memref<6x926xf32, #tpu.memory_space<vmem>>, vector<6x30xf32>
    %cst_87 = arith.constant dense<0.000000e+00> : vector<6x15xf32>
    %115 = tpu.matmul %114, %80, %cst_87 {dimension_numbers = #tpu.dot_dimension_numbers<[1], [0], [0], [1], [0, 0, 1, 1], [], []>} : vector<6x30xf32>, vector<30x15xf32>, vector<6x15xf32> -> vector<6x15xf32>
    %c0_88 = arith.constant 0 : index
    %c165 = arith.constant 165 : index
    %116 = vector.load %arg17[%c0_88, %c165] : memref<6x264xf32, #tpu.memory_space<vmem>>, vector<6x15xf32>
    tpu.vector_store %arg17[%c0_88, %c165], %115 {strides = array<i32>} : memref<6x264xf32, #tpu.memory_space<vmem>>, vector<6x15xf32>,
    %c0_89 = arith.constant 0 : index
    %c768 = arith.constant 768 : index
    %117 = vector.load %arg16[%c0_89, %c768] : memref<6x926xf32, #tpu.memory_space<vmem>>, vector<6x30xf32>
    %cst_90 = arith.constant dense<0.000000e+00> : vector<6x15xf32>
    %118 = tpu.matmul %117, %80, %cst_90 {dimension_numbers = #tpu.dot_dimension_numbers<[1], [0], [0], [1], [0, 0, 1, 1], [], []>} : vector<6x30xf32>, vector<30x15xf32>, vector<6x15xf32> -> vector<6x15xf32>
    %c0_91 = arith.constant 0 : index
    %c180 = arith.constant 180 : index
    %119 = vector.load %arg17[%c0_91, %c180] : memref<6x264xf32, #tpu.memory_space<vmem>>, vector<6x15xf32>
    tpu.vector_store %arg17[%c0_91, %c180], %118 {strides = array<i32>} : memref<6x264xf32, #tpu.memory_space<vmem>>, vector<6x15xf32>,
    %c0_92 = arith.constant 0 : index
    %c832 = arith.constant 832 : index
    %120 = vector.load %arg16[%c0_92, %c832] : memref<6x926xf32, #tpu.memory_space<vmem>>, vector<6x30xf32>
    %cst_93 = arith.constant dense<0.000000e+00> : vector<6x15xf32>
    %121 = tpu.matmul %120, %80, %cst_93 {dimension_numbers = #tpu.dot_dimension_numbers<[1], [0], [0], [1], [0, 0, 1, 1], [], []>} : vector<6x30xf32>, vector<30x15xf32>, vector<6x15xf32> -> vector<6x15xf32>
    %c0_94 = arith.constant 0 : index
    %c195 = arith.constant 195 : index
    %122 = vector.load %arg17[%c0_94, %c195] : memref<6x264xf32, #tpu.memory_space<vmem>>, vector<6x15xf32>
    tpu.vector_store %arg17[%c0_94, %c195], %121 {strides = array<i32>} : memref<6x264xf32, #tpu.memory_space<vmem>>, vector<6x15xf32>,
    %c0_95 = arith.constant 0 : index
    %c896 = arith.constant 896 : index
    %123 = vector.load %arg16[%c0_95, %c896] : memref<6x926xf32, #tpu.memory_space<vmem>>, vector<6x30xf32>
    %cst_96 = arith.constant dense<0.000000e+00> : vector<6x15xf32>
    %124 = tpu.matmul %123, %80, %cst_96 {dimension_numbers = #tpu.dot_dimension_numbers<[1], [0], [0], [1], [0, 0, 1, 1], [], []>} : vector<6x30xf32>, vector<30x15xf32>, vector<6x15xf32> -> vector<6x15xf32>
    %c0_97 = arith.constant 0 : index
    %c210 = arith.constant 210 : index
    %125 = vector.load %arg17[%c0_97, %c210] : memref<6x264xf32, #tpu.memory_space<vmem>>, vector<6x15xf32>
    tpu.vector_store %arg17[%c0_97, %c210], %124 {strides = array<i32>} : memref<6x264xf32, #tpu.memory_space<vmem>>, vector<6x15xf32>,
    %cst_98 = arith.constant 0.000000e+00 : f32
    %126 = vector.broadcast %cst_98 : f32 to vector<2x225xf32>
    %c0_99 = arith.constant 0 : index
    %c0_100 = arith.constant 0 : index
    %127 = vector.load %arg17[%c0_99, %c0_100] : memref<6x264xf32, #tpu.memory_space<vmem>>, vector<6x225xf32>
    %c0_101 = arith.constant 0 : index
    %c0_102 = arith.constant 0 : index
    %128 = vector.load %arg18[%c0_101, %c0_102] : memref<72x225xf32, #tpu.memory_space<vmem>>, vector<6x225xf32>
    tpu.vector_store %arg18[%c0_101, %c0_102], %127 {strides = array<i32>} : memref<72x225xf32, #tpu.memory_space<vmem>>, vector<6x225xf32>,
    %c6_103 = arith.constant 6 : index
    %c0_104 = arith.constant 0 : index
    %129 = vector.load %arg18[%c6_103, %c0_104] : memref<72x225xf32, #tpu.memory_space<vmem>>, vector<2x225xf32>
    tpu.vector_store %arg18[%c6_103, %c0_104], %126 {strides = array<i32>} : memref<72x225xf32, #tpu.memory_space<vmem>>, vector<2x225xf32>,
    %c0_105 = arith.constant 0 : index
    %c1_106 = arith.constant 1 : index
    %130 = vector.load %arg17[%c0_105, %c1_106] : memref<6x264xf32, #tpu.memory_space<vmem>>, vector<6x225xf32>
    %c8_107 = arith.constant 8 : index
    %c0_108 = arith.constant 0 : index
    %131 = vector.load %arg18[%c8_107, %c0_108] : memref<72x225xf32, #tpu.memory_space<vmem>>, vector<6x225xf32>
    tpu.vector_store %arg18[%c8_107, %c0_108], %130 {strides = array<i32>} : memref<72x225xf32, #tpu.memory_space<vmem>>, vector<6x225xf32>,
    %c14 = arith.constant 14 : index
    %c0_109 = arith.constant 0 : index
    %132 = vector.load %arg18[%c14, %c0_109] : memref<72x225xf32, #tpu.memory_space<vmem>>, vector<2x225xf32>
    tpu.vector_store %arg18[%c14, %c0_109], %126 {strides = array<i32>} : memref<72x225xf32, #tpu.memory_space<vmem>>, vector<2x225xf32>,
    %c0_110 = arith.constant 0 : index
    %c2_111 = arith.constant 2 : index
    %133 = vector.load %arg17[%c0_110, %c2_111] : memref<6x264xf32, #tpu.memory_space<vmem>>, vector<6x225xf32>
    %c16 = arith.constant 16 : index
    %c0_112 = arith.constant 0 : index
    %134 = vector.load %arg18[%c16, %c0_112] : memref<72x225xf32, #tpu.memory_space<vmem>>, vector<6x225xf32>
    tpu.vector_store %arg18[%c16, %c0_112], %133 {strides = array<i32>} : memref<72x225xf32, #tpu.memory_space<vmem>>, vector<6x225xf32>,
    %c22 = arith.constant 22 : index
    %c0_113 = arith.constant 0 : index
    %135 = vector.load %arg18[%c22, %c0_113] : memref<72x225xf32, #tpu.memory_space<vmem>>, vector<2x225xf32>
    tpu.vector_store %arg18[%c22, %c0_113], %126 {strides = array<i32>} : memref<72x225xf32, #tpu.memory_space<vmem>>, vector<2x225xf32>,
    %c0_114 = arith.constant 0 : index
    %c15_115 = arith.constant 15 : index
    %136 = vector.load %arg17[%c0_114, %c15_115] : memref<6x264xf32, #tpu.memory_space<vmem>>, vector<6x225xf32>
    %c24 = arith.constant 24 : index
    %c0_116 = arith.constant 0 : index
    %137 = vector.load %arg18[%c24, %c0_116] : memref<72x225xf32, #tpu.memory_space<vmem>>, vector<6x225xf32>
    tpu.vector_store %arg18[%c24, %c0_116], %136 {strides = array<i32>} : memref<72x225xf32, #tpu.memory_space<vmem>>, vector<6x225xf32>,
    %c30_117 = arith.constant 30 : index
    %c0_118 = arith.constant 0 : index
    %138 = vector.load %arg18[%c30_117, %c0_118] : memref<72x225xf32, #tpu.memory_space<vmem>>, vector<2x225xf32>
    tpu.vector_store %arg18[%c30_117, %c0_118], %126 {strides = array<i32>} : memref<72x225xf32, #tpu.memory_space<vmem>>, vector<2x225xf32>,
    %c0_119 = arith.constant 0 : index
    %c16_120 = arith.constant 16 : index
    %139 = vector.load %arg17[%c0_119, %c16_120] : memref<6x264xf32, #tpu.memory_space<vmem>>, vector<6x225xf32>
    %c32_121 = arith.constant 32 : index
    %c0_122 = arith.constant 0 : index
    %140 = vector.load %arg18[%c32_121, %c0_122] : memref<72x225xf32, #tpu.memory_space<vmem>>, vector<6x225xf32>
    tpu.vector_store %arg18[%c32_121, %c0_122], %139 {strides = array<i32>} : memref<72x225xf32, #tpu.memory_space<vmem>>, vector<6x225xf32>,
    %c38 = arith.constant 38 : index
    %c0_123 = arith.constant 0 : index
    %141 = vector.load %arg18[%c38, %c0_123] : memref<72x225xf32, #tpu.memory_space<vmem>>, vector<2x225xf32>
    tpu.vector_store %arg18[%c38, %c0_123], %126 {strides = array<i32>} : memref<72x225xf32, #tpu.memory_space<vmem>>, vector<2x225xf32>,
    %c0_124 = arith.constant 0 : index
    %c17 = arith.constant 17 : index
    %142 = vector.load %arg17[%c0_124, %c17] : memref<6x264xf32, #tpu.memory_space<vmem>>, vector<6x225xf32>
    %c40 = arith.constant 40 : index
    %c0_125 = arith.constant 0 : index
    %143 = vector.load %arg18[%c40, %c0_125] : memref<72x225xf32, #tpu.memory_space<vmem>>, vector<6x225xf32>
    tpu.vector_store %arg18[%c40, %c0_125], %142 {strides = array<i32>} : memref<72x225xf32, #tpu.memory_space<vmem>>, vector<6x225xf32>,
    %c46 = arith.constant 46 : index
    %c0_126 = arith.constant 0 : index
    %144 = vector.load %arg18[%c46, %c0_126] : memref<72x225xf32, #tpu.memory_space<vmem>>, vector<2x225xf32>
    tpu.vector_store %arg18[%c46, %c0_126], %126 {strides = array<i32>} : memref<72x225xf32, #tpu.memory_space<vmem>>, vector<2x225xf32>,
    %c0_127 = arith.constant 0 : index
    %c30_128 = arith.constant 30 : index
    %145 = vector.load %arg17[%c0_127, %c30_128] : memref<6x264xf32, #tpu.memory_space<vmem>>, vector<6x225xf32>
    %c48 = arith.constant 48 : index
    %c0_129 = arith.constant 0 : index
    %146 = vector.load %arg18[%c48, %c0_129] : memref<72x225xf32, #tpu.memory_space<vmem>>, vector<6x225xf32>
    tpu.vector_store %arg18[%c48, %c0_129], %145 {strides = array<i32>} : memref<72x225xf32, #tpu.memory_space<vmem>>, vector<6x225xf32>,
    %c54 = arith.constant 54 : index
    %c0_130 = arith.constant 0 : index
    %147 = vector.load %arg18[%c54, %c0_130] : memref<72x225xf32, #tpu.memory_space<vmem>>, vector<2x225xf32>
    tpu.vector_store %arg18[%c54, %c0_130], %126 {strides = array<i32>} : memref<72x225xf32, #tpu.memory_space<vmem>>, vector<2x225xf32>,
    %c0_131 = arith.constant 0 : index
    %c31 = arith.constant 31 : index
    %148 = vector.load %arg17[%c0_131, %c31] : memref<6x264xf32, #tpu.memory_space<vmem>>, vector<6x225xf32>
    %c56 = arith.constant 56 : index
    %c0_132 = arith.constant 0 : index
    %149 = vector.load %arg18[%c56, %c0_132] : memref<72x225xf32, #tpu.memory_space<vmem>>, vector<6x225xf32>
    tpu.vector_store %arg18[%c56, %c0_132], %148 {strides = array<i32>} : memref<72x225xf32, #tpu.memory_space<vmem>>, vector<6x225xf32>,
    %c62 = arith.constant 62 : index
    %c0_133 = arith.constant 0 : index
    %150 = vector.load %arg18[%c62, %c0_133] : memref<72x225xf32, #tpu.memory_space<vmem>>, vector<2x225xf32>
    tpu.vector_store %arg18[%c62, %c0_133], %126 {strides = array<i32>} : memref<72x225xf32, #tpu.memory_space<vmem>>, vector<2x225xf32>,
    %c0_134 = arith.constant 0 : index
    %c32_135 = arith.constant 32 : index
    %151 = vector.load %arg17[%c0_134, %c32_135] : memref<6x264xf32, #tpu.memory_space<vmem>>, vector<6x225xf32>
    %c64_136 = arith.constant 64 : index
    %c0_137 = arith.constant 0 : index
    %152 = vector.load %arg18[%c64_136, %c0_137] : memref<72x225xf32, #tpu.memory_space<vmem>>, vector<6x225xf32>
    tpu.vector_store %arg18[%c64_136, %c0_137], %151 {strides = array<i32>} : memref<72x225xf32, #tpu.memory_space<vmem>>, vector<6x225xf32>,
    %c70 = arith.constant 70 : index
    %c0_138 = arith.constant 0 : index
    %153 = vector.load %arg18[%c70, %c0_138] : memref<72x225xf32, #tpu.memory_space<vmem>>, vector<2x225xf32>
    tpu.vector_store %arg18[%c70, %c0_138], %126 {strides = array<i32>} : memref<72x225xf32, #tpu.memory_space<vmem>>, vector<2x225xf32>,
    %c0_139 = arith.constant 0 : index
    %c0_140 = arith.constant 0 : index
    %154 = vector.load %arg4[%c0_139, %c0_140] : memref<16x72xf32, #tpu.memory_space<vmem>>, vector<16x72xf32>
    %c0_141 = arith.constant 0 : index
    %c0_142 = arith.constant 0 : index
    %155 = vector.load %arg18[%c0_141, %c0_142] : memref<72x225xf32, #tpu.memory_space<vmem>>, vector<72x225xf32>
    %cst_143 = arith.constant dense<0.000000e+00> : vector<16x225xf32>
    %156 = tpu.matmul %154, %155, %cst_143 {dimension_numbers = #tpu.dot_dimension_numbers<[1], [0], [0], [1], [0, 0, 1, 1], [], []>} : vector<16x72xf32>, vector<72x225xf32>, vector<16x225xf32> -> vector<16x225xf32>
    %c0_144 = arith.constant 0 : index
    %c0_145 = arith.constant 0 : index
    %157 = vector.load %arg5[%c0_144, %c0_145] : memref<16x1xf32, #tpu.memory_space<vmem>>, vector<16x1xf32>
    %158 = vector.broadcast %157 : vector<16x1xf32> to vector<16x225xf32>
    %159 = arith.addf %156, %158 : vector<16x225xf32>
    %cst_146 = arith.constant 0.000000e+00 : f32
    %160 = vector.broadcast %cst_146 : f32 to vector<16x225xf32>
    %161 = arith.maximumf %159, %160 : vector<16x225xf32>
    %c0_147 = arith.constant 0 : index
    %c0_148 = arith.constant 0 : index
    %162 = vector.load %arg19[%c0_147, %c0_148] : memref<16x225xf32, #tpu.memory_space<vmem>>, vector<16x225xf32>
    tpu.vector_store %arg19[%c0_147, %c0_148], %161 {strides = array<i32>} : memref<16x225xf32, #tpu.memory_space<vmem>>, vector<16x225xf32>,
    %c0_149 = arith.constant 0 : index
    %c0_150 = arith.constant 0 : index
    %163 = vector.load %arg19[%c0_149, %c0_150] : memref<16x225xf32, #tpu.memory_space<vmem>>, vector<16x161xf32>
    %c0_151 = arith.constant 0 : index
    %c1_152 = arith.constant 1 : index
    %164 = vector.load %arg19[%c0_151, %c1_152] : memref<16x225xf32, #tpu.memory_space<vmem>>, vector<16x161xf32>
    %165 = arith.maximumf %163, %164 : vector<16x161xf32>
    %c0_153 = arith.constant 0 : index
    %c15_154 = arith.constant 15 : index
    %166 = vector.load %arg19[%c0_153, %c15_154] : memref<16x225xf32, #tpu.memory_space<vmem>>, vector<16x161xf32>
    %c0_155 = arith.constant 0 : index
    %c16_156 = arith.constant 16 : index
    %167 = vector.load %arg19[%c0_155, %c16_156] : memref<16x225xf32, #tpu.memory_space<vmem>>, vector<16x161xf32>
    %168 = arith.maximumf %166, %167 : vector<16x161xf32>
    %169 = arith.maximumf %165, %168 : vector<16x161xf32>
    %c0_157 = arith.constant 0 : index
    %c0_158 = arith.constant 0 : index
    %170 = vector.load %arg7[%c0_157, %c0_158] : memref<161x40xf32, #tpu.memory_space<vmem>>, vector<161x40xf32>
    %cst_159 = arith.constant dense<0.000000e+00> : vector<16x40xf32>
    %171 = tpu.matmul %169, %170, %cst_159 {dimension_numbers = #tpu.dot_dimension_numbers<[1], [0], [0], [1], [0, 0, 1, 1], [], []>} : vector<16x161xf32>, vector<161x40xf32>, vector<16x40xf32> -> vector<16x40xf32>
    %172 = tpu.iota {dimensions = array<i32: 0>} : vector<16x40xi32>
    %c0_i32 = arith.constant 0 : i32
    %173 = vector.broadcast %c0_i32 : i32 to vector<16x40xi32>
    %174 = arith.cmpi eq, %172, %173 : vector<16x40xi32>
    %cst_160 = arith.constant 0.000000e+00 : f32
    %175 = vector.broadcast %cst_160 : f32 to vector<16x40xf32>
    %176 = arith.select %174, %171, %175 : vector<16x40xi1>, vector<16x40xf32>
    %c0_161 = arith.constant 0 : index
    %c0_162 = arith.constant 0 : index
    %177 = vector.load %arg20[%c0_161, %c0_162] : memref<16x640xf32, #tpu.memory_space<vmem>>, vector<16x40xf32>
    tpu.vector_store %arg20[%c0_161, %c0_162], %176 {strides = array<i32>} : memref<16x640xf32, #tpu.memory_space<vmem>>, vector<16x40xf32>,
    %c1_i32 = arith.constant 1 : i32
    %178 = vector.broadcast %c1_i32 : i32 to vector<16x40xi32>
    %179 = arith.cmpi eq, %172, %178 : vector<16x40xi32>
    %cst_163 = arith.constant 0.000000e+00 : f32
    %180 = vector.broadcast %cst_163 : f32 to vector<16x40xf32>
    %181 = arith.select %179, %171, %180 : vector<16x40xi1>, vector<16x40xf32>
    %c0_164 = arith.constant 0 : index
    %c40_165 = arith.constant 40 : index
    %182 = vector.load %arg20[%c0_164, %c40_165] : memref<16x640xf32, #tpu.memory_space<vmem>>, vector<16x40xf32>
    tpu.vector_store %arg20[%c0_164, %c40_165], %181 {strides = array<i32>} : memref<16x640xf32, #tpu.memory_space<vmem>>, vector<16x40xf32>,
    %c2_i32 = arith.constant 2 : i32
    %183 = vector.broadcast %c2_i32 : i32 to vector<16x40xi32>
    %184 = arith.cmpi eq, %172, %183 : vector<16x40xi32>
    %cst_166 = arith.constant 0.000000e+00 : f32
    %185 = vector.broadcast %cst_166 : f32 to vector<16x40xf32>
    %186 = arith.select %184, %171, %185 : vector<16x40xi1>, vector<16x40xf32>
    %c0_167 = arith.constant 0 : index
    %c80 = arith.constant 80 : index
    %187 = vector.load %arg20[%c0_167, %c80] : memref<16x640xf32, #tpu.memory_space<vmem>>, vector<16x40xf32>
    tpu.vector_store %arg20[%c0_167, %c80], %186 {strides = array<i32>} : memref<16x640xf32, #tpu.memory_space<vmem>>, vector<16x40xf32>,
    %c3_i32 = arith.constant 3 : i32
    %188 = vector.broadcast %c3_i32 : i32 to vector<16x40xi32>
    %189 = arith.cmpi eq, %172, %188 : vector<16x40xi32>
    %cst_168 = arith.constant 0.000000e+00 : f32
    %190 = vector.broadcast %cst_168 : f32 to vector<16x40xf32>
    %191 = arith.select %189, %171, %190 : vector<16x40xi1>, vector<16x40xf32>
    %c0_169 = arith.constant 0 : index
    %c120_170 = arith.constant 120 : index
    %192 = vector.load %arg20[%c0_169, %c120_170] : memref<16x640xf32, #tpu.memory_space<vmem>>, vector<16x40xf32>
    tpu.vector_store %arg20[%c0_169, %c120_170], %191 {strides = array<i32>} : memref<16x640xf32, #tpu.memory_space<vmem>>, vector<16x40xf32>,
    %c4_i32 = arith.constant 4 : i32
    %193 = vector.broadcast %c4_i32 : i32 to vector<16x40xi32>
    %194 = arith.cmpi eq, %172, %193 : vector<16x40xi32>
    %cst_171 = arith.constant 0.000000e+00 : f32
    %195 = vector.broadcast %cst_171 : f32 to vector<16x40xf32>
    %196 = arith.select %194, %171, %195 : vector<16x40xi1>, vector<16x40xf32>
    %c0_172 = arith.constant 0 : index
    %c160 = arith.constant 160 : index
    %197 = vector.load %arg20[%c0_172, %c160] : memref<16x640xf32, #tpu.memory_space<vmem>>, vector<16x40xf32>
    tpu.vector_store %arg20[%c0_172, %c160], %196 {strides = array<i32>} : memref<16x640xf32, #tpu.memory_space<vmem>>, vector<16x40xf32>,
    %c5_i32 = arith.constant 5 : i32
    %198 = vector.broadcast %c5_i32 : i32 to vector<16x40xi32>
    %199 = arith.cmpi eq, %172, %198 : vector<16x40xi32>
    %cst_173 = arith.constant 0.000000e+00 : f32
    %200 = vector.broadcast %cst_173 : f32 to vector<16x40xf32>
    %201 = arith.select %199, %171, %200 : vector<16x40xi1>, vector<16x40xf32>
    %c0_174 = arith.constant 0 : index
    %c200 = arith.constant 200 : index
    %202 = vector.load %arg20[%c0_174, %c200] : memref<16x640xf32, #tpu.memory_space<vmem>>, vector<16x40xf32>
    tpu.vector_store %arg20[%c0_174, %c200], %201 {strides = array<i32>} : memref<16x640xf32, #tpu.memory_space<vmem>>, vector<16x40xf32>,
    %c6_i32 = arith.constant 6 : i32
    %203 = vector.broadcast %c6_i32 : i32 to vector<16x40xi32>
    %204 = arith.cmpi eq, %172, %203 : vector<16x40xi32>
    %cst_175 = arith.constant 0.000000e+00 : f32
    %205 = vector.broadcast %cst_175 : f32 to vector<16x40xf32>
    %206 = arith.select %204, %171, %205 : vector<16x40xi1>, vector<16x40xf32>
    %c0_176 = arith.constant 0 : index
    %c240 = arith.constant 240 : index
    %207 = vector.load %arg20[%c0_176, %c240] : memref<16x640xf32, #tpu.memory_space<vmem>>, vector<16x40xf32>
    tpu.vector_store %arg20[%c0_176, %c240], %206 {strides = array<i32>} : memref<16x640xf32, #tpu.memory_space<vmem>>, vector<16x40xf32>,
    %c7_i32 = arith.constant 7 : i32
    %208 = vector.broadcast %c7_i32 : i32 to vector<16x40xi32>
    %209 = arith.cmpi eq, %172, %208 : vector<16x40xi32>
    %cst_177 = arith.constant 0.000000e+00 : f32
    %210 = vector.broadcast %cst_177 : f32 to vector<16x40xf32>
    %211 = arith.select %209, %171, %210 : vector<16x40xi1>, vector<16x40xf32>
    %c0_178 = arith.constant 0 : index
    %c280 = arith.constant 280 : index
    %212 = vector.load %arg20[%c0_178, %c280] : memref<16x640xf32, #tpu.memory_space<vmem>>, vector<16x40xf32>
    tpu.vector_store %arg20[%c0_178, %c280], %211 {strides = array<i32>} : memref<16x640xf32, #tpu.memory_space<vmem>>, vector<16x40xf32>,
    %c8_i32 = arith.constant 8 : i32
    %213 = vector.broadcast %c8_i32 : i32 to vector<16x40xi32>
    %214 = arith.cmpi eq, %172, %213 : vector<16x40xi32>
    %cst_179 = arith.constant 0.000000e+00 : f32
    %215 = vector.broadcast %cst_179 : f32 to vector<16x40xf32>
    %216 = arith.select %214, %171, %215 : vector<16x40xi1>, vector<16x40xf32>
    %c0_180 = arith.constant 0 : index
    %c320_181 = arith.constant 320 : index
    %217 = vector.load %arg20[%c0_180, %c320_181] : memref<16x640xf32, #tpu.memory_space<vmem>>, vector<16x40xf32>
    tpu.vector_store %arg20[%c0_180, %c320_181], %216 {strides = array<i32>} : memref<16x640xf32, #tpu.memory_space<vmem>>, vector<16x40xf32>,
    %c9_i32 = arith.constant 9 : i32
    %218 = vector.broadcast %c9_i32 : i32 to vector<16x40xi32>
    %219 = arith.cmpi eq, %172, %218 : vector<16x40xi32>
    %cst_182 = arith.constant 0.000000e+00 : f32
    %220 = vector.broadcast %cst_182 : f32 to vector<16x40xf32>
    %221 = arith.select %219, %171, %220 : vector<16x40xi1>, vector<16x40xf32>
    %c0_183 = arith.constant 0 : index
    %c360 = arith.constant 360 : index
    %222 = vector.load %arg20[%c0_183, %c360] : memref<16x640xf32, #tpu.memory_space<vmem>>, vector<16x40xf32>
    tpu.vector_store %arg20[%c0_183, %c360], %221 {strides = array<i32>} : memref<16x640xf32, #tpu.memory_space<vmem>>, vector<16x40xf32>,
    %c10_i32 = arith.constant 10 : i32
    %223 = vector.broadcast %c10_i32 : i32 to vector<16x40xi32>
    %224 = arith.cmpi eq, %172, %223 : vector<16x40xi32>
    %cst_184 = arith.constant 0.000000e+00 : f32
    %225 = vector.broadcast %cst_184 : f32 to vector<16x40xf32>
    %226 = arith.select %224, %171, %225 : vector<16x40xi1>, vector<16x40xf32>
    %c0_185 = arith.constant 0 : index
    %c400 = arith.constant 400 : index
    %227 = vector.load %arg20[%c0_185, %c400] : memref<16x640xf32, #tpu.memory_space<vmem>>, vector<16x40xf32>
    tpu.vector_store %arg20[%c0_185, %c400], %226 {strides = array<i32>} : memref<16x640xf32, #tpu.memory_space<vmem>>, vector<16x40xf32>,
    %c11_i32 = arith.constant 11 : i32
    %228 = vector.broadcast %c11_i32 : i32 to vector<16x40xi32>
    %229 = arith.cmpi eq, %172, %228 : vector<16x40xi32>
    %cst_186 = arith.constant 0.000000e+00 : f32
    %230 = vector.broadcast %cst_186 : f32 to vector<16x40xf32>
    %231 = arith.select %229, %171, %230 : vector<16x40xi1>, vector<16x40xf32>
    %c0_187 = arith.constant 0 : index
    %c440 = arith.constant 440 : index
    %232 = vector.load %arg20[%c0_187, %c440] : memref<16x640xf32, #tpu.memory_space<vmem>>, vector<16x40xf32>
    tpu.vector_store %arg20[%c0_187, %c440], %231 {strides = array<i32>} : memref<16x640xf32, #tpu.memory_space<vmem>>, vector<16x40xf32>,
    %c12_i32 = arith.constant 12 : i32
    %233 = vector.broadcast %c12_i32 : i32 to vector<16x40xi32>
    %234 = arith.cmpi eq, %172, %233 : vector<16x40xi32>
    %cst_188 = arith.constant 0.000000e+00 : f32
    %235 = vector.broadcast %cst_188 : f32 to vector<16x40xf32>
    %236 = arith.select %234, %171, %235 : vector<16x40xi1>, vector<16x40xf32>
    %c0_189 = arith.constant 0 : index
    %c480 = arith.constant 480 : index
    %237 = vector.load %arg20[%c0_189, %c480] : memref<16x640xf32, #tpu.memory_space<vmem>>, vector<16x40xf32>
    tpu.vector_store %arg20[%c0_189, %c480], %236 {strides = array<i32>} : memref<16x640xf32, #tpu.memory_space<vmem>>, vector<16x40xf32>,
    %c13_i32 = arith.constant 13 : i32
    %238 = vector.broadcast %c13_i32 : i32 to vector<16x40xi32>
    %239 = arith.cmpi eq, %172, %238 : vector<16x40xi32>
    %cst_190 = arith.constant 0.000000e+00 : f32
    %240 = vector.broadcast %cst_190 : f32 to vector<16x40xf32>
    %241 = arith.select %239, %171, %240 : vector<16x40xi1>, vector<16x40xf32>
    %c0_191 = arith.constant 0 : index
    %c520 = arith.constant 520 : index
    %242 = vector.load %arg20[%c0_191, %c520] : memref<16x640xf32, #tpu.memory_space<vmem>>, vector<16x40xf32>
    tpu.vector_store %arg20[%c0_191, %c520], %241 {strides = array<i32>} : memref<16x640xf32, #tpu.memory_space<vmem>>, vector<16x40xf32>,
    %c14_i32 = arith.constant 14 : i32
    %243 = vector.broadcast %c14_i32 : i32 to vector<16x40xi32>
    %244 = arith.cmpi eq, %172, %243 : vector<16x40xi32>
    %cst_192 = arith.constant 0.000000e+00 : f32
    %245 = vector.broadcast %cst_192 : f32 to vector<16x40xf32>
    %246 = arith.select %244, %171, %245 : vector<16x40xi1>, vector<16x40xf32>
    %c0_193 = arith.constant 0 : index
    %c560 = arith.constant 560 : index
    %247 = vector.load %arg20[%c0_193, %c560] : memref<16x640xf32, #tpu.memory_space<vmem>>, vector<16x40xf32>
    tpu.vector_store %arg20[%c0_193, %c560], %246 {strides = array<i32>} : memref<16x640xf32, #tpu.memory_space<vmem>>, vector<16x40xf32>,
    %c15_i32 = arith.constant 15 : i32
    %248 = vector.broadcast %c15_i32 : i32 to vector<16x40xi32>
    %249 = arith.cmpi eq, %172, %248 : vector<16x40xi32>
    %cst_194 = arith.constant 0.000000e+00 : f32
    %250 = vector.broadcast %cst_194 : f32 to vector<16x40xf32>
    %251 = arith.select %249, %171, %250 : vector<16x40xi1>, vector<16x40xf32>
    %c0_195 = arith.constant 0 : index
    %c600 = arith.constant 600 : index
    %252 = vector.load %arg20[%c0_195, %c600] : memref<16x640xf32, #tpu.memory_space<vmem>>, vector<16x40xf32>
    tpu.vector_store %arg20[%c0_195, %c600], %251 {strides = array<i32>} : memref<16x640xf32, #tpu.memory_space<vmem>>, vector<16x40xf32>,
    %c0_196 = arith.constant 0 : index
    %c0_197 = arith.constant 0 : index
    %253 = vector.load %arg20[%c0_196, %c0_197] : memref<16x640xf32, #tpu.memory_space<vmem>>, vector<16x640xf32>
    %c0_198 = arith.constant 0 : index
    %c0_199 = arith.constant 0 : index
    %254 = vector.load %arg8[%c0_198, %c0_199] : memref<640x120xf32, #tpu.memory_space<vmem>>, vector<640x120xf32>
    %cst_200 = arith.constant dense<0.000000e+00> : vector<16x120xf32>
    %255 = tpu.matmul %253, %254, %cst_200 {dimension_numbers = #tpu.dot_dimension_numbers<[1], [0], [0], [1], [0, 0, 1, 1], [], []>} : vector<16x640xf32>, vector<640x120xf32>, vector<16x120xf32> -> vector<16x120xf32>
    %cst_201 = arith.constant dense<0.000000e+00> : vector<120xf32>
    %256 = vector.multi_reduction <add>, %255, %cst_201 [0] : vector<16x120xf32> to vector<120xf32>
    %257 = vector.shape_cast %256 : vector<120xf32> to vector<1x120xf32>
    %c0_202 = arith.constant 0 : index
    %c0_203 = arith.constant 0 : index
    %258 = vector.load %arg9[%c0_202, %c0_203] : memref<1x120xf32, #tpu.memory_space<vmem>>, vector<1x120xf32>
    %259 = arith.addf %257, %258 : vector<1x120xf32>
    %cst_204 = arith.constant 0.000000e+00 : f32
    %260 = vector.broadcast %cst_204 : f32 to vector<1x120xf32>
    %261 = arith.maximumf %259, %260 : vector<1x120xf32>
    %c0_205 = arith.constant 0 : index
    %c0_206 = arith.constant 0 : index
    %262 = vector.load %arg10[%c0_205, %c0_206] : memref<120x84xf32, #tpu.memory_space<vmem>>, vector<120x84xf32>
    %cst_207 = arith.constant dense<0.000000e+00> : vector<1x84xf32>
    %263 = tpu.matmul %261, %262, %cst_207 {dimension_numbers = #tpu.dot_dimension_numbers<[1], [0], [0], [1], [0, 0, 1, 1], [], []>} : vector<1x120xf32>, vector<120x84xf32>, vector<1x84xf32> -> vector<1x84xf32>
    %c0_208 = arith.constant 0 : index
    %c0_209 = arith.constant 0 : index
    %264 = vector.load %arg11[%c0_208, %c0_209] : memref<1x84xf32, #tpu.memory_space<vmem>>, vector<1x84xf32>
    %265 = arith.addf %263, %264 : vector<1x84xf32>
    %cst_210 = arith.constant 0.000000e+00 : f32
    %266 = vector.broadcast %cst_210 : f32 to vector<1x84xf32>
    %267 = arith.maximumf %265, %266 : vector<1x84xf32>
    %c0_211 = arith.constant 0 : index
    %c0_212 = arith.constant 0 : index
    %268 = vector.load %arg12[%c0_211, %c0_212] : memref<84x10xf32, #tpu.memory_space<vmem>>, vector<84x10xf32>
    %cst_213 = arith.constant dense<0.000000e+00> : vector<1x10xf32>
    %269 = tpu.matmul %267, %268, %cst_213 {dimension_numbers = #tpu.dot_dimension_numbers<[1], [0], [0], [1], [0, 0, 1, 1], [], []>} : vector<1x84xf32>, vector<84x10xf32>, vector<1x10xf32> -> vector<1x10xf32>
    %c0_214 = arith.constant 0 : index
    %c0_215 = arith.constant 0 : index
    %270 = vector.load %arg13[%c0_214, %c0_215] : memref<1x10xf32, #tpu.memory_space<vmem>>, vector<1x10xf32>
    %271 = arith.addf %269, %270 : vector<1x10xf32>
    %c0_216 = arith.constant 0 : index
    %c0_217 = arith.constant 0 : index
    %c0_218 = arith.constant 0 : index
    %272 = vector.load %arg14[%c0_216, %c0_217, %c0_218] : memref<1x1x10xf32, #tpu.memory_space<vmem>>, vector<1x1x10xf32>
    %273 = vector.shape_cast %272 : vector<1x1x10xf32> to vector<1x10xf32>
    %274 = vector.shape_cast %271 : vector<1x10xf32> to vector<1x1x10xf32>
    tpu.vector_store %arg14[%c0_216, %c0_217, %c0_218], %274 {strides = array<i32>} : memref<1x1x10xf32, #tpu.memory_space<vmem>>, vector<1x1x10xf32>,
    return
  }
  func.func @transform_0(%arg0: i32) -> (i32, i32, i32) {
    %c0_i32 = arith.constant 0 : i32
    %c0_i32_0 = arith.constant 0 : i32
    %c0_i32_1 = arith.constant 0 : i32
    return %arg0, %c0_i32, %c0_i32_0 : i32, i32, i32
  }
  func.func @transform_1(%arg0: i32) -> (i32, i32) {
    %c0_i32 = arith.constant 0 : i32
    %c0_i32_0 = arith.constant 0 : i32
    %c0_i32_1 = arith.constant 0 : i32
    return %c0_i32, %c0_i32_0 : i32, i32
  }
  func.func @transform_2(%arg0: i32) -> (i32, i32) {
    %c0_i32 = arith.constant 0 : i32
    %c0_i32_0 = arith.constant 0 : i32
    %c0_i32_1 = arith.constant 0 : i32
    return %c0_i32, %c0_i32_0 : i32, i32
  }
  func.func @transform_3(%arg0: i32) -> (i32, i32) {
    %c0_i32 = arith.constant 0 : i32
    %c0_i32_0 = arith.constant 0 : i32
    %c0_i32_1 = arith.constant 0 : i32
    return %c0_i32, %c0_i32_0 : i32, i32
  }
  func.func @transform_4(%arg0: i32) -> (i32, i32) {
    %c0_i32 = arith.constant 0 : i32
    %c0_i32_0 = arith.constant 0 : i32
    %c0_i32_1 = arith.constant 0 : i32
    return %c0_i32, %c0_i32_0 : i32, i32
  }
  func.func @transform_5(%arg0: i32) -> (i32, i32) {
    %c0_i32 = arith.constant 0 : i32
    %c0_i32_0 = arith.constant 0 : i32
    %c0_i32_1 = arith.constant 0 : i32
    return %c0_i32, %c0_i32_0 : i32, i32
  }
  func.func @transform_6(%arg0: i32) -> (i32, i32) {
    %c0_i32 = arith.constant 0 : i32
    %c0_i32_0 = arith.constant 0 : i32
    %c0_i32_1 = arith.constant 0 : i32
    return %c0_i32, %c0_i32_0 : i32, i32
  }
  func.func @transform_7(%arg0: i32) -> (i32, i32) {
    %c0_i32 = arith.constant 0 : i32
    %c0_i32_0 = arith.constant 0 : i32
    %c0_i32_1 = arith.constant 0 : i32
    return %c0_i32, %c0_i32_0 : i32, i32
  }
  func.func @transform_8(%arg0: i32) -> (i32, i32) {
    %c0_i32 = arith.constant 0 : i32
    %c0_i32_0 = arith.constant 0 : i32
    %c0_i32_1 = arith.constant 0 : i32
    return %c0_i32, %c0_i32_0 : i32, i32
  }
  func.func @transform_9(%arg0: i32) -> (i32, i32) {
    %c0_i32 = arith.constant 0 : i32
    %c0_i32_0 = arith.constant 0 : i32
    %c0_i32_1 = arith.constant 0 : i32
    return %c0_i32, %c0_i32_0 : i32, i32
  }
  func.func @transform_10(%arg0: i32) -> (i32, i32) {
    %c0_i32 = arith.constant 0 : i32
    %c0_i32_0 = arith.constant 0 : i32
    %c0_i32_1 = arith.constant 0 : i32
    return %c0_i32, %c0_i32_0 : i32, i32
  }
  func.func @transform_11(%arg0: i32) -> (i32, i32) {
    %c0_i32 = arith.constant 0 : i32
    %c0_i32_0 = arith.constant 0 : i32
    %c0_i32_1 = arith.constant 0 : i32
    return %c0_i32, %c0_i32_0 : i32, i32
  }
  func.func @transform_12(%arg0: i32) -> (i32, i32) {
    %c0_i32 = arith.constant 0 : i32
    %c0_i32_0 = arith.constant 0 : i32
    %c0_i32_1 = arith.constant 0 : i32
    return %c0_i32, %c0_i32_0 : i32, i32
  }
  func.func @transform_13(%arg0: i32) -> (i32, i32, i32) {
    %c0_i32 = arith.constant 0 : i32
    %c0_i32_0 = arith.constant 0 : i32
    %c0_i32_1 = arith.constant 0 : i32
    return %arg0, %c0_i32, %c0_i32_0 : i32, i32, i32
  }
}

</mosaic_0001>

<llo_original>
// kernel: net_forward.1
$region0: #{net_forward.1}
  #allocation0 [shape = 'u32[]', space=smem, size = 0x4, offset = 0x4, fixed_abs, tag = 'smem constant byte address 0x4 - core index']
  #allocation1 [shape = 'u32[144,128]{1,0:T(1,128)}', space=vmem, size = 0x12000, scoped, tag = 'internal scratch']
  #allocation2 [shape = 'f32[6,960]{1,0:T(8,128)}', space=vmem, size = 0x8000, scoped, tag = 'scratch operand']
  #allocation3 [shape = 'f32[6,926]{1,0:T(8,128)}', space=vmem, size = 0x8000, scoped, tag = 'scratch operand']
  #allocation4 [shape = 'f32[6,264]{1,0:T(8,128)}', space=vmem, size = 0x3000, scoped, tag = 'scratch operand']
  #allocation5 [shape = 'f32[72,225]{1,0:T(8,128)}', space=vmem, size = 0x12000, scoped, tag = 'scratch operand']
  #allocation6 [shape = 'f32[16,225]{1,0:T(8,128)}', space=vmem, size = 0x4000, scoped, tag = 'scratch operand']
  #allocation7 [shape = 'f32[16,640]{1,0:T(8,128)}', space=vmem, size = 0xa000, scoped, tag = 'scratch operand']
  %s0 = inlined_call_operand.vmem [shape: f32[2,1,1032], index: 0, kind: input, shape index: {}]
  %s1 = inlined_call_operand.vmem [shape: f32[6,9], index: 1, kind: input, shape index: {}]
  %s2 = inlined_call_operand.vmem [shape: f32[6,1], index: 2, kind: input, shape index: {}]
  %s3 = inlined_call_operand.vmem [shape: f32[16,72], index: 3, kind: input, shape index: {}]
  %s4 = inlined_call_operand.vmem [shape: f32[16,1], index: 4, kind: input, shape index: {}]
  %s5 = inlined_call_operand.vmem [shape: f32[30,15], index: 5, kind: input, shape index: {}]
  %s6 = inlined_call_operand.vmem [shape: f32[161,40], index: 6, kind: input, shape index: {}]
  %s7 = inlined_call_operand.vmem [shape: f32[640,120], index: 7, kind: input, shape index: {}]
  %s8 = inlined_call_operand.vmem [shape: f32[1,120], index: 8, kind: input, shape index: {}]
  %s9 = inlined_call_operand.vmem [shape: f32[120,84], index: 9, kind: input, shape index: {}]
  %s10 = inlined_call_operand.vmem [shape: f32[1,84], index: 10, kind: input, shape index: {}]
  %s11 = inlined_call_operand.vmem [shape: f32[84,10], index: 11, kind: input, shape index: {}]
  %s12 = inlined_call_operand.vmem [shape: f32[1,10], index: 12, kind: input, shape index: {}]
  %s13 = inlined_call_operand.hbm [shape: f32[2,1,10], index: 13, kind: output, shape index: {}]
  %s14 = sld [smem:[#allocation0]]
  $region85: #{net_forward.1} parent=0
    _
  %s16 = ssub.s32 1, %s14
  %s17 = scalar_select 0, %s16, %s14
  $region1: #{net_forward.1} parent=0
    #allocation8 [shape = 'u8[1024]{0}', space=vmem, size = 0x400, scoped, tag = 'output window, operand 0']
    #allocation9 [shape = 's32[2]{0}', space=sflag, size = 0x8, scoped, tag = 'scoped memory for net_forward.1']
    %18 = vsyncpa [#allocation9], 0
    %s19 = scalar_lea.sflag [#allocation9], 1
    %20 = vsyncpa %s19, 0
    loop: start=0, step=1, limit=4
    $region2: #{net_forward.1} parent=1 // loop_pre_header
      _
    $region3: #{net_forward.1} parent=1 // loop_header
      %s22 = sphi 0, %s26
      %p23 = scmp.ge.s32.totalorder %s22, 4
      %s32 = sphi 0, %s34
      %s35 = sphi 0, %s32
      %s36 = sphi 0, %s35
      %s52 = sphi 0, %s36
      %s56 = sphi 0, %s56
      %s58 = sphi 0, %s56
      %s59 = sphi 0, %s58
      %s73 = sphi 0, %s59
      %s77 = sphi 0, %s77
      %s79 = sphi 0, %s77
      %s80 = sphi 0, %s79
      %s94 = sphi 0, %s80
      %s98 = sphi 0, %s98
      %s100 = sphi 0, %s98
      %s101 = sphi 0, %s100
      %s115 = sphi 0, %s101
      %s119 = sphi 0, %s119
      %s121 = sphi 0, %s119
      %s122 = sphi 0, %s121
      %s136 = sphi 0, %s122
      %s140 = sphi 0, %s140
      %s142 = sphi 0, %s140
      %s143 = sphi 0, %s142
      %s157 = sphi 0, %s143
      %s161 = sphi 0, %s161
      %s163 = sphi 0, %s161
      %s164 = sphi 0, %s163
      %s178 = sphi 0, %s164
      %s182 = sphi 0, %s182
      %s184 = sphi 0, %s182
      %s185 = sphi 0, %s184
      %s199 = sphi 0, %s185
      %s203 = sphi 0, %s203
      %s205 = sphi 0, %s203
      %s206 = sphi 0, %s205
      %s220 = sphi 0, %s206
      %s224 = sphi 0, %s224
      %s226 = sphi 0, %s224
      %s227 = sphi 0, %s226
      %s241 = sphi 0, %s227
      %s245 = sphi 0, %s245
      %s247 = sphi 0, %s245
      %s248 = sphi 0, %s247
      %s262 = sphi 0, %s248
      %s266 = sphi 0, %s266
      %s268 = sphi 0, %s266
      %s269 = sphi 0, %s268
      %s283 = sphi 0, %s269
      %s287 = sphi 0, %s287
      %s289 = sphi 0, %s287
      %s290 = sphi 0, %s289
      %s304 = sphi 0, %s290
      %s310 = sphi 0, %s312
      %s313 = sphi 0, %s310
      %s314 = sphi 0, %s313
      %s330 = sphi 0, %s314
    $region4: #{net_forward.1} parent=1 // loop_header_branch
      %25 = sbr.rel (%p23) target = $region8
    $region5: #{net_forward.1} parent=1 // loop_body
      %s27 = ssub.s32 %s22, 1
      %s28 = ssub.s32 %s22, 2
      %s29 = sadd.s32 %s22, 1
      %s30 = ssub.s32 %s22, %s29
      %p31 = scmp.eq.s32.totalorder %s30, 0
      %s33 = sadd.s32 %s32, 1
      %s34 = scalar_select %p31, %s32, %s33
      %p37 = pneg %p31
      %p38 = scmp.eq.s32.totalorder %s22, 1
      %p39 = por %p37, %p38
      %p40 = scmp.ne.s32.totalorder %s32, %s35
      %p41 = scmp.eq.s32.totalorder %s22, 0
      %p42 = por %p40, %p41
      %p43 = scmp.ne.s32.totalorder %s32, %s35
      %p44 = scmp.eq.s32.totalorder %s27, 1
      %p45 = por %p43, %p44
      %p46 = scmp.ne.s32.totalorder %s35, %s36
      %p47 = scmp.eq.s32.totalorder %s27, 0
      %p48 = por %p46, %p47
      %p49 = scmp.ne.s32.totalorder %s35, %s36
      %p50 = scmp.eq.s32.totalorder %s28, 1
      %p51 = por %p49, %p50
      %p53 = scmp.ne.s32.totalorder %s36, %s52
      %p54 = scmp.eq.s32.totalorder %s28, 0
      %p55 = por %p53, %p54
      %s57 = sadd.s32 %s56, 1
      %p60 = scmp.eq.s32.totalorder %s22, 1
      %p61 = scmp.ne.s32.totalorder %s56, %s58
      %p62 = scmp.eq.s32.totalorder %s22, 0
      %p63 = por %p61, %p62
      %p64 = scmp.ne.s32.totalorder %s56, %s58
      %p65 = scmp.eq.s32.totalorder %s27, 1
      %p66 = por %p64, %p65
      %p67 = scmp.ne.s32.totalorder %s58, %s59
      %p68 = scmp.eq.s32.totalorder %s27, 0
      %p69 = por %p67, %p68
      %p70 = scmp.ne.s32.totalorder %s58, %s59
      %p71 = scmp.eq.s32.totalorder %s28, 1
      %p72 = por %p70, %p71
      %p74 = scmp.ne.s32.totalorder %s59, %s73
      %p75 = scmp.eq.s32.totalorder %s28, 0
      %p76 = por %p74, %p75
      %s78 = sadd.s32 %s77, 1
      %p81 = scmp.eq.s32.totalorder %s22, 1
      %p82 = scmp.ne.s32.totalorder %s77, %s79
      %p83 = scmp.eq.s32.totalorder %s22, 0
      %p84 = por %p82, %p83
      %p85 = scmp.ne.s32.totalorder %s77, %s79
      %p86 = scmp.eq.s32.totalorder %s27, 1
      %p87 = por %p85, %p86
      %p88 = scmp.ne.s32.totalorder %s79, %s80
      %p89 = scmp.eq.s32.totalorder %s27, 0
      %p90 = por %p88, %p89
      %p91 = scmp.ne.s32.totalorder %s79, %s80
      %p92 = scmp.eq.s32.totalorder %s28, 1
      %p93 = por %p91, %p92
      %p95 = scmp.ne.s32.totalorder %s80, %s94
      %p96 = scmp.eq.s32.totalorder %s28, 0
      %p97 = por %p95, %p96
      %s99 = sadd.s32 %s98, 1
      %p102 = scmp.eq.s32.totalorder %s22, 1
      %p103 = scmp.ne.s32.totalorder %s98, %s100
      %p104 = scmp.eq.s32.totalorder %s22, 0
      %p105 = por %p103, %p104
      %p106 = scmp.ne.s32.totalorder %s98, %s100
      %p107 = scmp.eq.s32.totalorder %s27, 1
      %p108 = por %p106, %p107
      %p109 = scmp.ne.s32.totalorder %s100, %s101
      %p110 = scmp.eq.s32.totalorder %s27, 0
      %p111 = por %p109, %p110
      %p112 = scmp.ne.s32.totalorder %s100, %s101
      %p113 = scmp.eq.s32.totalorder %s28, 1
      %p114 = por %p112, %p113
      %p116 = scmp.ne.s32.totalorder %s101, %s115
      %p117 = scmp.eq.s32.totalorder %s28, 0
      %p118 = por %p116, %p117
      %s120 = sadd.s32 %s119, 1
      %p123 = scmp.eq.s32.totalorder %s22, 1
      %p124 = scmp.ne.s32.totalorder %s119, %s121
      %p125 = scmp.eq.s32.totalorder %s22, 0
      %p126 = por %p124, %p125
      %p127 = scmp.ne.s32.totalorder %s119, %s121
      %p128 = scmp.eq.s32.totalorder %s27, 1
      %p129 = por %p127, %p128
      %p130 = scmp.ne.s32.totalorder %s121, %s122
      %p131 = scmp.eq.s32.totalorder %s27, 0
      %p132 = por %p130, %p131
      %p133 = scmp.ne.s32.totalorder %s121, %s122
      %p134 = scmp.eq.s32.totalorder %s28, 1
      %p135 = por %p133, %p134
      %p137 = scmp.ne.s32.totalorder %s122, %s136
      %p138 = scmp.eq.s32.totalorder %s28, 0
      %p139 = por %p137, %p138
      %s141 = sadd.s32 %s140, 1
      %p144 = scmp.eq.s32.totalorder %s22, 1
      %p145 = scmp.ne.s32.totalorder %s140, %s142
      %p146 = scmp.eq.s32.totalorder %s22, 0
      %p147 = por %p145, %p146
      %p148 = scmp.ne.s32.totalorder %s140, %s142
      %p149 = scmp.eq.s32.totalorder %s27, 1
      %p150 = por %p148, %p149
      %p151 = scmp.ne.s32.totalorder %s142, %s143
      %p152 = scmp.eq.s32.totalorder %s27, 0
      %p153 = por %p151, %p152
      %p154 = scmp.ne.s32.totalorder %s142, %s143
      %p155 = scmp.eq.s32.totalorder %s28, 1
      %p156 = por %p154, %p155
      %p158 = scmp.ne.s32.totalorder %s143, %s157
      %p159 = scmp.eq.s32.totalorder %s28, 0
      %p160 = por %p158, %p159
      %s162 = sadd.s32 %s161, 1
      %p165 = scmp.eq.s32.totalorder %s22, 1
      %p166 = scmp.ne.s32.totalorder %s161, %s163
      %p167 = scmp.eq.s32.totalorder %s22, 0
      %p168 = por %p166, %p167
      %p169 = scmp.ne.s32.totalorder %s161, %s163
      %p170 = scmp.eq.s32.totalorder %s27, 1
      %p171 = por %p169, %p170
      %p172 = scmp.ne.s32.totalorder %s163, %s164
      %p173 = scmp.eq.s32.totalorder %s27, 0
      %p174 = por %p172, %p173
      %p175 = scmp.ne.s32.totalorder %s163, %s164
      %p176 = scmp.eq.s32.totalorder %s28, 1
      %p177 = por %p175, %p176
      %p179 = scmp.ne.s32.totalorder %s164, %s178
      %p180 = scmp.eq.s32.totalorder %s28, 0
      %p181 = por %p179, %p180
      %s183 = sadd.s32 %s182, 1
      %p186 = scmp.eq.s32.totalorder %s22, 1
      %p187 = scmp.ne.s32.totalorder %s182, %s184
      %p188 = scmp.eq.s32.totalorder %s22, 0
      %p189 = por %p187, %p188
      %p190 = scmp.ne.s32.totalorder %s182, %s184
      %p191 = scmp.eq.s32.totalorder %s27, 1
      %p192 = por %p190, %p191
      %p193 = scmp.ne.s32.totalorder %s184, %s185
      %p194 = scmp.eq.s32.totalorder %s27, 0
      %p195 = por %p193, %p194
      %p196 = scmp.ne.s32.totalorder %s184, %s185
      %p197 = scmp.eq.s32.totalorder %s28, 1
      %p198 = por %p196, %p197
      %p200 = scmp.ne.s32.totalorder %s185, %s199
      %p201 = scmp.eq.s32.totalorder %s28, 0
      %p202 = por %p200, %p201
      %s204 = sadd.s32 %s203, 1
      %p207 = scmp.eq.s32.totalorder %s22, 1
      %p208 = scmp.ne.s32.totalorder %s203, %s205
      %p209 = scmp.eq.s32.totalorder %s22, 0
      %p210 = por %p208, %p209
      %p211 = scmp.ne.s32.totalorder %s203, %s205
      %p212 = scmp.eq.s32.totalorder %s27, 1
      %p213 = por %p211, %p212
      %p214 = scmp.ne.s32.totalorder %s205, %s206
      %p215 = scmp.eq.s32.totalorder %s27, 0
      %p216 = por %p214, %p215
      %p217 = scmp.ne.s32.totalorder %s205, %s206
      %p218 = scmp.eq.s32.totalorder %s28, 1
      %p219 = por %p217, %p218
      %p221 = scmp.ne.s32.totalorder %s206, %s220
      %p222 = scmp.eq.s32.totalorder %s28, 0
      %p223 = por %p221, %p222
      %s225 = sadd.s32 %s224, 1
      %p228 = scmp.eq.s32.totalorder %s22, 1
      %p229 = scmp.ne.s32.totalorder %s224, %s226
      %p230 = scmp.eq.s32.totalorder %s22, 0
      %p231 = por %p229, %p230
      %p232 = scmp.ne.s32.totalorder %s224, %s226
      %p233 = scmp.eq.s32.totalorder %s27, 1
      %p234 = por %p232, %p233
      %p235 = scmp.ne.s32.totalorder %s226, %s227
      %p236 = scmp.eq.s32.totalorder %s27, 0
      %p237 = por %p235, %p236
      %p238 = scmp.ne.s32.totalorder %s226, %s227
      %p239 = scmp.eq.s32.totalorder %s28, 1
      %p240 = por %p238, %p239
      %p242 = scmp.ne.s32.totalorder %s227, %s241
      %p243 = scmp.eq.s32.totalorder %s28, 0
      %p244 = por %p242, %p243
      %s246 = sadd.s32 %s245, 1
      %p249 = scmp.eq.s32.totalorder %s22, 1
      %p250 = scmp.ne.s32.totalorder %s245, %s247
      %p251 = scmp.eq.s32.totalorder %s22, 0
      %p252 = por %p250, %p251
      %p253 = scmp.ne.s32.totalorder %s245, %s247
      %p254 = scmp.eq.s32.totalorder %s27, 1
      %p255 = por %p253, %p254
      %p256 = scmp.ne.s32.totalorder %s247, %s248
      %p257 = scmp.eq.s32.totalorder %s27, 0
      %p258 = por %p256, %p257
      %p259 = scmp.ne.s32.totalorder %s247, %s248
      %p260 = scmp.eq.s32.totalorder %s28, 1
      %p261 = por %p259, %p260
      %p263 = scmp.ne.s32.totalorder %s248, %s262
      %p264 = scmp.eq.s32.totalorder %s28, 0
      %p265 = por %p263, %p264
      %s267 = sadd.s32 %s266, 1
      %p270 = scmp.eq.s32.totalorder %s22, 1
      %p271 = scmp.ne.s32.totalorder %s266, %s268
      %p272 = scmp.eq.s32.totalorder %s22, 0
      %p273 = por %p271, %p272
      %p274 = scmp.ne.s32.totalorder %s266, %s268
      %p275 = scmp.eq.s32.totalorder %s27, 1
      %p276 = por %p274, %p275
      %p277 = scmp.ne.s32.totalorder %s268, %s269
      %p278 = scmp.eq.s32.totalorder %s27, 0
      %p279 = por %p277, %p278
      %p280 = scmp.ne.s32.totalorder %s268, %s269
      %p281 = scmp.eq.s32.totalorder %s28, 1
      %p282 = por %p280, %p281
      %p284 = scmp.ne.s32.totalorder %s269, %s283
      %p285 = scmp.eq.s32.totalorder %s28, 0
      %p286 = por %p284, %p285
      %s288 = sadd.s32 %s287, 1
      %p291 = scmp.eq.s32.totalorder %s22, 1
      %p292 = scmp.ne.s32.totalorder %s287, %s289
      %p293 = scmp.eq.s32.totalorder %s22, 0
      %p294 = por %p292, %p293
      %p295 = scmp.ne.s32.totalorder %s287, %s289
      %p296 = scmp.eq.s32.totalorder %s27, 1
      %p297 = por %p295, %p296
      %p298 = scmp.ne.s32.totalorder %s289, %s290
      %p299 = scmp.eq.s32.totalorder %s27, 0
      %p300 = por %p298, %p299
      %p301 = scmp.ne.s32.totalorder %s289, %s290
      %p302 = scmp.eq.s32.totalorder %s28, 1
      %p303 = por %p301, %p302
      %p305 = scmp.ne.s32.totalorder %s290, %s304
      %p306 = scmp.eq.s32.totalorder %s28, 0
      %p307 = por %p305, %p306
      %s308 = ssub.s32 %s22, %s29
      %p309 = scmp.eq.s32.totalorder %s308, 0
      %s311 = sadd.s32 %s310, 1
      %s312 = scalar_select %p309, %s310, %s311
      %p315 = pneg %p309
      %p316 = scmp.eq.s32.totalorder %s22, 1
      %p317 = por %p315, %p316
      %p318 = scmp.ne.s32.totalorder %s310, %s313
      %p319 = scmp.eq.s32.totalorder %s22, 0
      %p320 = por %p318, %p319
      %p321 = scmp.ne.s32.totalorder %s310, %s313
      %p322 = scmp.eq.s32.totalorder %s27, 1
      %p323 = por %p321, %p322
      %p324 = scmp.ne.s32.totalorder %s313, %s314
      %p325 = scmp.eq.s32.totalorder %s27, 0
      %p326 = por %p324, %p325
      %p327 = scmp.ne.s32.totalorder %s313, %s314
      %p328 = scmp.eq.s32.totalorder %s28, 1
      %p329 = por %p327, %p328
      %p331 = scmp.ne.s32.totalorder %s314, %s330
      %p332 = scmp.eq.s32.totalorder %s28, 0
      %p333 = por %p331, %p332
      %p334 = scmp.le.s32.totalorder 1, %s22
      %p335 = scmp.lt.s32.totalorder %s22, 3
      %p336 = pnand %p334, %p335
      %p337 = pneg %p336
      // Predicated region
      $region9: #{net_forward.1} parent=5 // pred_check
        _
      $region10: #{net_forward.1} parent=5 // pred_check_branch
        %339 = sbr.rel (%p336) target = $region12
      $region11: #{net_forward.1} parent=5 // pred_region
        %s340 = ssub.s32 %s22, 1
        // Predicated region
        $region13: #{net_forward.1} parent=11 // pred_check
          %p341 = pneg %p69
        $region14: #{net_forward.1} parent=11 // pred_check_branch
          %343 = sbr.rel (%p341) target = $region16
        $region15: #{net_forward.1} parent=11 // pred_region
          _
        $region16: #{net_forward.1} parent=11 // pred_fallthru
          _
        // Predicated region
        $region17: #{net_forward.1} parent=11 // pred_check
          %p344 = pneg %p90
        $region18: #{net_forward.1} parent=11 // pred_check_branch
          %346 = sbr.rel (%p344) target = $region20
        $region19: #{net_forward.1} parent=11 // pred_region
          _
        $region20: #{net_forward.1} parent=11 // pred_fallthru
          _
        // Predicated region
        $region21: #{net_forward.1} parent=11 // pred_check
          %p347 = pneg %p111
        $region22: #{net_forward.1} parent=11 // pred_check_branch
          %349 = sbr.rel (%p347) target = $region24
        $region23: #{net_forward.1} parent=11 // pred_region
          _
        $region24: #{net_forward.1} parent=11 // pred_fallthru
          _
        // Predicated region
        $region25: #{net_forward.1} parent=11 // pred_check
          %p350 = pneg %p132
        $region26: #{net_forward.1} parent=11 // pred_check_branch
          %352 = sbr.rel (%p350) target = $region28
        $region27: #{net_forward.1} parent=11 // pred_region
          _
        $region28: #{net_forward.1} parent=11 // pred_fallthru
          _
        // Predicated region
        $region29: #{net_forward.1} parent=11 // pred_check
          %p353 = pneg %p153
        $region30: #{net_forward.1} parent=11 // pred_check_branch
          %355 = sbr.rel (%p353) target = $region32
        $region31: #{net_forward.1} parent=11 // pred_region
          _
        $region32: #{net_forward.1} parent=11 // pred_fallthru
          _
        // Predicated region
        $region33: #{net_forward.1} parent=11 // pred_check
          %p356 = pneg %p174
        $region34: #{net_forward.1} parent=11 // pred_check_branch
          %358 = sbr.rel (%p356) target = $region36
        $region35: #{net_forward.1} parent=11 // pred_region
          _
        $region36: #{net_forward.1} parent=11 // pred_fallthru
          _
        // Predicated region
        $region37: #{net_forward.1} parent=11 // pred_check
          %p359 = pneg %p195
        $region38: #{net_forward.1} parent=11 // pred_check_branch
          %361 = sbr.rel (%p359) target = $region40
        $region39: #{net_forward.1} parent=11 // pred_region
          _
        $region40: #{net_forward.1} parent=11 // pred_fallthru
          _
        // Predicated region
        $region41: #{net_forward.1} parent=11 // pred_check
          %p362 = pneg %p216
        $region42: #{net_forward.1} parent=11 // pred_check_branch
          %364 = sbr.rel (%p362) target = $region44
        $region43: #{net_forward.1} parent=11 // pred_region
          _
        $region44: #{net_forward.1} parent=11 // pred_fallthru
          _
        // Predicated region
        $region45: #{net_forward.1} parent=11 // pred_check
          %p365 = pneg %p237
        $region46: #{net_forward.1} parent=11 // pred_check_branch
          %367 = sbr.rel (%p365) target = $region48
        $region47: #{net_forward.1} parent=11 // pred_region
          _
        $region48: #{net_forward.1} parent=11 // pred_fallthru
          _
        // Predicated region
        $region49: #{net_forward.1} parent=11 // pred_check
          %p368 = pneg %p258
        $region50: #{net_forward.1} parent=11 // pred_check_branch
          %370 = sbr.rel (%p368) target = $region52
        $region51: #{net_forward.1} parent=11 // pred_region
          _
        $region52: #{net_forward.1} parent=11 // pred_fallthru
          _
        // Predicated region
        $region53: #{net_forward.1} parent=11 // pred_check
          %p371 = pneg %p279
        $region54: #{net_forward.1} parent=11 // pred_check_branch
          %373 = sbr.rel (%p371) target = $region56
        $region55: #{net_forward.1} parent=11 // pred_region
          _
        $region56: #{net_forward.1} parent=11 // pred_fallthru
          _
        // Predicated region
        $region57: #{net_forward.1} parent=11 // pred_check
          %p374 = pneg %p300
        $region58: #{net_forward.1} parent=11 // pred_check_branch
          %376 = sbr.rel (%p374) target = $region60
        $region59: #{net_forward.1} parent=11 // pred_region
          _
        $region60: #{net_forward.1} parent=11 // pred_fallthru
          _
      $region12: #{net_forward.1} parent=5 // pred_fallthru
        _
      %p377 = scmp.lt.s32.totalorder %s22, 2
      // Predicated region
      $region61: #{net_forward.1} parent=5 // pred_check
        %p378 = pneg %p377
      $region62: #{net_forward.1} parent=5 // pred_check_branch
        %380 = sbr.rel (%p378) target = $region64
      $region63: #{net_forward.1} parent=5 // pred_region
        // Predicated region
        $region65: #{net_forward.1} parent=63 // pred_check
          %p381 = pneg %p42
        $region66: #{net_forward.1} parent=63 // pred_check_branch
          %383 = sbr.rel (%p381) target = $region68
        $region67: #{net_forward.1} parent=63 // pred_region
          %p384 = scmp.lt.s32.totalorder %s22, 1
          %s385 = scalar_select %p384, %s22, 1
          %s386 = smul.addr %s385, 9
          %s387 = scalar_lea.vmem %s0, %s386
        $region68: #{net_forward.1} parent=63 // pred_fallthru
          _
      $region64: #{net_forward.1} parent=5 // pred_fallthru
        _
      %p388 = scmp.le.s32.totalorder 1, %s22
      %p389 = scmp.lt.s32.totalorder %s22, 3
      %p390 = pnand %p388, %p389
      %p391 = pneg %p390
      // Predicated region
      $region69: #{net_forward.1} parent=5 // pred_check
        _
      $region70: #{net_forward.1} parent=5 // pred_check_branch
        %393 = sbr.rel (%p390) target = $region72
      $region71: #{net_forward.1} parent=5 // pred_region
        %s394 = ssub.s32 %s22, 1
        %p395 = scmp.lt.s32.totalorder %s27, 1
        %s396 = scalar_select %p395, %s27, 1
        %s397 = smul.addr %s396, 9
        %s398 = scalar_lea.vmem %s0, %s397
        %p399 = pneg %p48
        %p400 = pneg %p45
        %p401 = pneg %p69
        %p402 = pneg %p66
        %p403 = pneg %p90
        %p404 = pneg %p87
        %p405 = pneg %p111
        %p406 = pneg %p108
        %p407 = pneg %p132
        %p408 = pneg %p129
        %p409 = pneg %p153
        %p410 = pneg %p150
        %p411 = pneg %p174
        %p412 = pneg %p171
        %p413 = pneg %p195
        %p414 = pneg %p192
        %p415 = pneg %p216
        %p416 = pneg %p213
        %p417 = pneg %p237
        %p418 = pneg %p234
        %p419 = pneg %p258
        %p420 = pneg %p255
        %p421 = pneg %p279
        %p422 = pneg %p276
        %p423 = pneg %p300
        %p424 = pneg %p297
        %p425 = pneg %p326
        %p426 = pneg %p323
        %s427 = sand.u32 %s313, 1
        %s428 = scalar_lea.sflag [#allocation9], %s427
        %s429 = sand.u32 %s313, 1
        %s430 = scalar_lea.vmem [#allocation8], %s429
        %p431 = scmp.lt.s32.totalorder %s27, 1
        %s432 = scalar_select %p431, %s27, 1
        %s433 = smul.addr %s432, 9
        %s434 = scalar_lea.vmem %s0, %s433
        %v435 = vld [vmem:[%s434] sm:$0xff]
        %v436 = vld [vmem:[%s1] sm:$0x3f]
        %438 = vset.pattern.permute.xlu0 0
        %439 = vperm.xlu0 %438, %v436
        %v440 = vpop.permute.xlu0 %439
        %v443 = vlaneseq
        %v444 = vshrl.u32 %v443, 7
        %v445 = vsub.s32 0, %v444
        %v446 = vrot.slane %v435, %v445
        %v447 = vlaneseq
        %v448 = vshrl.u32 %v447, 7
        %v449 = vsub.s32 1, %v448
        %v450 = vrot.slane %v435, %v449
        %v451 = vlaneseq
        %v452 = vshrl.u32 %v451, 7
        %v453 = vsub.s32 2, %v452
        %v454 = vrot.slane %v435, %v453
        %v455 = vlaneseq
        %v456 = vshrl.u32 %v455, 7
        %v457 = vsub.s32 3, %v456
        %v458 = vrot.slane %v435, %v457
        %v459 = vlaneseq
        %v460 = vshrl.u32 %v459, 7
        %v461 = vsub.s32 4, %v460
        %v462 = vrot.slane %v435, %v461
        %v463 = vlaneseq
        %v464 = vshrl.u32 %v463, 7
        %v465 = vsub.s32 5, %v464
        %v466 = vrot.slane %v435, %v465
        %v467 = vlaneseq
        %v468 = vshrl.u32 %v467, 7
        %v469 = vsub.s32 6, %v468
        %v470 = vrot.slane %v435, %v469
        %v471 = vlaneseq
        %v472 = vshrl.u32 %v471, 7
        %v473 = vsub.s32 7, %v472
        %v474 = vrot.slane %v435, %v473
        %v483 = vmul.f32 %v440, %v446
        %v484 = vmul.f32 %v440, %v450
        %v485 = vmul.f32 %v440, %v454
        %v486 = vmul.f32 %v440, %v458
        %v487 = vmul.f32 %v440, %v462
        %v488 = vmul.f32 %v440, %v466
        %v489 = vmul.f32 %v440, %v470
        %v490 = vmul.f32 %v440, %v474
        %v491 = vadd.f32 %v483, 0.0
        %v492 = vadd.f32 %v484, 0.0
        %v493 = vadd.f32 %v485, 0.0
        %v494 = vadd.f32 %v486, 0.0
        %v495 = vadd.f32 %v487, 0.0
        %v496 = vadd.f32 %v488, 0.0
        %v497 = vadd.f32 %v489, 0.0
        %v498 = vadd.f32 %v490, 0.0
        %499 = vset.pattern.permute.xlu0 1
        %500 = vperm.xlu0 %499, %v436
        %v501 = vpop.permute.xlu0 %500
        %v503 = vmul.f32 %v501, %v446
        %v504 = vmul.f32 %v501, %v450
        %v505 = vmul.f32 %v501, %v454
        %v506 = vmul.f32 %v501, %v458
        %v507 = vmul.f32 %v501, %v462
        %v508 = vmul.f32 %v501, %v466
        %v509 = vmul.f32 %v501, %v470
        %v510 = vmul.f32 %v501, %v474
        %519 = vrot.lane.b32.xlu0 %v503, 127
        %v520 = vpop.permute.xlu0 %519
        %521 = vrot.lane.b32.xlu0 %v504, 127
        %v522 = vpop.permute.xlu0 %521
        %523 = vrot.lane.b32.xlu0 %v505, 127
        %v524 = vpop.permute.xlu0 %523
        %525 = vrot.lane.b32.xlu0 %v506, 127
        %v526 = vpop.permute.xlu0 %525
        %527 = vrot.lane.b32.xlu0 %v507, 127
        %v528 = vpop.permute.xlu0 %527
        %529 = vrot.lane.b32.xlu0 %v508, 127
        %v530 = vpop.permute.xlu0 %529
        %531 = vrot.lane.b32.xlu0 %v509, 127
        %v532 = vpop.permute.xlu0 %531
        %533 = vrot.lane.b32.xlu0 %v510, 127
        %v534 = vpop.permute.xlu0 %533
        %vm535 = vcmask 1039360
        %v536 = vsel %vm535, %v520, %v522
        %v537 = vsel %vm535, %v522, %v524
        %v538 = vsel %vm535, %v524, %v526
        %v539 = vsel %vm535, %v526, %v528
        %v540 = vsel %vm535, %v528, %v530
        %v541 = vsel %vm535, %v530, %v532
        %v542 = vsel %vm535, %v532, %v534
        %v551 = vadd.f32 %v491, %v536
        %v552 = vadd.f32 %v492, %v537
        %v553 = vadd.f32 %v493, %v538
        %v554 = vadd.f32 %v494, %v539
        %v555 = vadd.f32 %v495, %v540
        %v556 = vadd.f32 %v496, %v541
        %v557 = vadd.f32 %v497, %v542
        %v558 = vadd.f32 %v498, %v534
        %559 = vset.pattern.permute.xlu0 2
        %560 = vperm.xlu0 %559, %v436
        %v561 = vpop.permute.xlu0 %560
        %v563 = vmul.f32 %v561, %v446
        %v564 = vmul.f32 %v561, %v450
        %v565 = vmul.f32 %v561, %v454
        %v566 = vmul.f32 %v561, %v458
        %v567 = vmul.f32 %v561, %v462
        %v568 = vmul.f32 %v561, %v466
        %v569 = vmul.f32 %v561, %v470
        %v570 = vmul.f32 %v561, %v474
        %579 = vrot.lane.b32.xlu0 %v563, 126
        %v580 = vpop.permute.xlu0 %579
        %581 = vrot.lane.b32.xlu0 %v564, 126
        %v582 = vpop.permute.xlu0 %581
        %583 = vrot.lane.b32.xlu0 %v565, 126
        %v584 = vpop.permute.xlu0 %583
        %585 = vrot.lane.b32.xlu0 %v566, 126
        %v586 = vpop.permute.xlu0 %585
        %587 = vrot.lane.b32.xlu0 %v567, 126
        %v588 = vpop.permute.xlu0 %587
        %589 = vrot.lane.b32.xlu0 %v568, 126
        %v590 = vpop.permute.xlu0 %589
        %591 = vrot.lane.b32.xlu0 %v569, 126
        %v592 = vpop.permute.xlu0 %591
        %593 = vrot.lane.b32.xlu0 %v570, 126
        %v594 = vpop.permute.xlu0 %593
        %vm595 = vcmask 1031168
        %v596 = vsel %vm595, %v580, %v582
        %v597 = vsel %vm595, %v582, %v584
        %v598 = vsel %vm595, %v584, %v586
        %v599 = vsel %vm595, %v586, %v588
        %v600 = vsel %vm595, %v588, %v590
        %v601 = vsel %vm595, %v590, %v592
        %v602 = vsel %vm595, %v592, %v594
        %v611 = vadd.f32 %v551, %v596
        %v612 = vadd.f32 %v552, %v597
        %v613 = vadd.f32 %v553, %v598
        %v614 = vadd.f32 %v554, %v599
        %v615 = vadd.f32 %v555, %v600
        %v616 = vadd.f32 %v556, %v601
        %v617 = vadd.f32 %v557, %v602
        %v618 = vadd.f32 %v558, %v594
        %619 = vset.pattern.permute.xlu0 3
        %620 = vperm.xlu0 %619, %v436
        %v621 = vpop.permute.xlu0 %620
        %v623 = vmul.f32 %v621, %v446
        %v624 = vmul.f32 %v621, %v450
        %v625 = vmul.f32 %v621, %v454
        %v626 = vmul.f32 %v621, %v458
        %v627 = vmul.f32 %v621, %v462
        %v628 = vmul.f32 %v621, %v466
        %v629 = vmul.f32 %v621, %v470
        %v630 = vmul.f32 %v621, %v474
        %639 = vrot.lane.b32.xlu0 %v623, 96
        %v640 = vpop.permute.xlu0 %639
        %641 = vrot.lane.b32.xlu0 %v624, 96
        %v642 = vpop.permute.xlu0 %641
        %643 = vrot.lane.b32.xlu0 %v625, 96
        %v644 = vpop.permute.xlu0 %643
        %645 = vrot.lane.b32.xlu0 %v626, 96
        %v646 = vpop.permute.xlu0 %645
        %647 = vrot.lane.b32.xlu0 %v627, 96
        %v648 = vpop.permute.xlu0 %647
        %649 = vrot.lane.b32.xlu0 %v628, 96
        %v650 = vpop.permute.xlu0 %649
        %651 = vrot.lane.b32.xlu0 %v629, 96
        %v652 = vpop.permute.xlu0 %651
        %653 = vrot.lane.b32.xlu0 %v630, 96
        %v654 = vpop.permute.xlu0 %653
        %vm655 = vcmask 785408
        %v656 = vsel %vm655, %v640, %v642
        %v657 = vsel %vm655, %v642, %v644
        %v658 = vsel %vm655, %v644, %v646
        %v659 = vsel %vm655, %v646, %v648
        %v660 = vsel %vm655, %v648, %v650
        %v661 = vsel %vm655, %v650, %v652
        %v662 = vsel %vm655, %v652, %v654
        %v671 = vadd.f32 %v611, %v656
        %v672 = vadd.f32 %v612, %v657
        %v673 = vadd.f32 %v613, %v658
        %v674 = vadd.f32 %v614, %v659
        %v675 = vadd.f32 %v615, %v660
        %v676 = vadd.f32 %v616, %v661
        %v677 = vadd.f32 %v617, %v662
        %v678 = vadd.f32 %v618, %v654
        %679 = vset.pattern.permute.xlu0 4
        %680 = vperm.xlu0 %679, %v436
        %v681 = vpop.permute.xlu0 %680
        %v683 = vmul.f32 %v681, %v446
        %v684 = vmul.f32 %v681, %v450
        %v685 = vmul.f32 %v681, %v454
        %v686 = vmul.f32 %v681, %v458
        %v687 = vmul.f32 %v681, %v462
        %v688 = vmul.f32 %v681, %v466
        %v689 = vmul.f32 %v681, %v470
        %v690 = vmul.f32 %v681, %v474
        %699 = vrot.lane.b32.xlu0 %v683, 95
        %v700 = vpop.permute.xlu0 %699
        %701 = vrot.lane.b32.xlu0 %v684, 95
        %v702 = vpop.permute.xlu0 %701
        %703 = vrot.lane.b32.xlu0 %v685, 95
        %v704 = vpop.permute.xlu0 %703
        %705 = vrot.lane.b32.xlu0 %v686, 95
        %v706 = vpop.permute.xlu0 %705
        %707 = vrot.lane.b32.xlu0 %v687, 95
        %v708 = vpop.permute.xlu0 %707
        %709 = vrot.lane.b32.xlu0 %v688, 95
        %v710 = vpop.permute.xlu0 %709
        %711 = vrot.lane.b32.xlu0 %v689, 95
        %v712 = vpop.permute.xlu0 %711
        %713 = vrot.lane.b32.xlu0 %v690, 95
        %v714 = vpop.permute.xlu0 %713
        %vm715 = vcmask 777216
        %v716 = vsel %vm715, %v700, %v702
        %v717 = vsel %vm715, %v702, %v704
        %v718 = vsel %vm715, %v704, %v706
        %v719 = vsel %vm715, %v706, %v708
        %v720 = vsel %vm715, %v708, %v710
        %v721 = vsel %vm715, %v710, %v712
        %v722 = vsel %vm715, %v712, %v714
        %v731 = vadd.f32 %v671, %v716
        %v732 = vadd.f32 %v672, %v717
        %v733 = vadd.f32 %v673, %v718
        %v734 = vadd.f32 %v674, %v719
        %v735 = vadd.f32 %v675, %v720
        %v736 = vadd.f32 %v676, %v721
        %v737 = vadd.f32 %v677, %v722
        %v738 = vadd.f32 %v678, %v714
        %739 = vset.pattern.permute.xlu0 5
        %740 = vperm.xlu0 %739, %v436
        %v741 = vpop.permute.xlu0 %740
        %v743 = vmul.f32 %v741, %v446
        %v744 = vmul.f32 %v741, %v450
        %v745 = vmul.f32 %v741, %v454
        %v746 = vmul.f32 %v741, %v458
        %v747 = vmul.f32 %v741, %v462
        %v748 = vmul.f32 %v741, %v466
        %v749 = vmul.f32 %v741, %v470
        %v750 = vmul.f32 %v741, %v474
        %759 = vrot.lane.b32.xlu0 %v743, 94
        %v760 = vpop.permute.xlu0 %759
        %761 = vrot.lane.b32.xlu0 %v744, 94
        %v762 = vpop.permute.xlu0 %761
        %763 = vrot.lane.b32.xlu0 %v745, 94
        %v764 = vpop.permute.xlu0 %763
        %765 = vrot.lane.b32.xlu0 %v746, 94
        %v766 = vpop.permute.xlu0 %765
        %767 = vrot.lane.b32.xlu0 %v747, 94
        %v768 = vpop.permute.xlu0 %767
        %769 = vrot.lane.b32.xlu0 %v748, 94
        %v770 = vpop.permute.xlu0 %769
        %771 = vrot.lane.b32.xlu0 %v749, 94
        %v772 = vpop.permute.xlu0 %771
        %773 = vrot.lane.b32.xlu0 %v750, 94
        %v774 = vpop.permute.xlu0 %773
        %vm775 = vcmask 769024
        %v776 = vsel %vm775, %v760, %v762
        %v777 = vsel %vm775, %v762, %v764
        %v778 = vsel %vm775, %v764, %v766
        %v779 = vsel %vm775, %v766, %v768
        %v780 = vsel %vm775, %v768, %v770
        %v781 = vsel %vm775, %v770, %v772
        %v782 = vsel %vm775, %v772, %v774
        %v791 = vadd.f32 %v731, %v776
        %v792 = vadd.f32 %v732, %v777
        %v793 = vadd.f32 %v733, %v778
        %v794 = vadd.f32 %v734, %v779
        %v795 = vadd.f32 %v735, %v780
        %v796 = vadd.f32 %v736, %v781
        %v797 = vadd.f32 %v737, %v782
        %v798 = vadd.f32 %v738, %v774
        %799 = vset.pattern.permute.xlu0 6
        %800 = vperm.xlu0 %799, %v436
        %v801 = vpop.permute.xlu0 %800
        %v803 = vmul.f32 %v801, %v446
        %v804 = vmul.f32 %v801, %v450
        %v805 = vmul.f32 %v801, %v454
        %v806 = vmul.f32 %v801, %v458
        %v807 = vmul.f32 %v801, %v462
        %v808 = vmul.f32 %v801, %v466
        %v809 = vmul.f32 %v801, %v470
        %v810 = vmul.f32 %v801, %v474
        %819 = vrot.lane.b32.xlu0 %v803, 64
        %v820 = vpop.permute.xlu0 %819
        %821 = vrot.lane.b32.xlu0 %v804, 64
        %v822 = vpop.permute.xlu0 %821
        %823 = vrot.lane.b32.xlu0 %v805, 64
        %v824 = vpop.permute.xlu0 %823
        %825 = vrot.lane.b32.xlu0 %v806, 64
        %v826 = vpop.permute.xlu0 %825
        %827 = vrot.lane.b32.xlu0 %v807, 64
        %v828 = vpop.permute.xlu0 %827
        %829 = vrot.lane.b32.xlu0 %v808, 64
        %v830 = vpop.permute.xlu0 %829
        %831 = vrot.lane.b32.xlu0 %v809, 64
        %v832 = vpop.permute.xlu0 %831
        %833 = vrot.lane.b32.xlu0 %v810, 64
        %v834 = vpop.permute.xlu0 %833
        %vm835 = vcmask 523264
        %v836 = vsel %vm835, %v820, %v822
        %v837 = vsel %vm835, %v822, %v824
        %v838 = vsel %vm835, %v824, %v826
        %v839 = vsel %vm835, %v826, %v828
        %v840 = vsel %vm835, %v828, %v830
        %v841 = vsel %vm835, %v830, %v832
        %v842 = vsel %vm835, %v832, %v834
        %v851 = vadd.f32 %v791, %v836
        %v852 = vadd.f32 %v792, %v837
        %v853 = vadd.f32 %v793, %v838
        %v854 = vadd.f32 %v794, %v839
        %v855 = vadd.f32 %v795, %v840
        %v856 = vadd.f32 %v796, %v841
        %v857 = vadd.f32 %v797, %v842
        %v858 = vadd.f32 %v798, %v834
        %v859 = vld [vmem:[%s434] sm:$0xff]
        %v860 = vld [vmem:[%s434 + $0x8] sm:$0x1]
        %861 = vset.pattern.permute.xlu0 7
        %862 = vperm.xlu0 %861, %v436
        %v863 = vpop.permute.xlu0 %862
        %v867 = vlaneseq
        %v868 = vshrl.u32 %v867, 7
        %v869 = vsub.s32 0, %v868
        %v870 = vrot.slane %v859, %v869
        %v871 = vlaneseq
        %v872 = vshrl.u32 %v871, 7
        %v873 = vsub.s32 1, %v872
        %v874 = vrot.slane %v859, %v873
        %v875 = vlaneseq
        %v876 = vshrl.u32 %v875, 7
        %v877 = vsub.s32 2, %v876
        %v878 = vrot.slane %v859, %v877
        %v879 = vlaneseq
        %v880 = vshrl.u32 %v879, 7
        %v881 = vsub.s32 3, %v880
        %v882 = vrot.slane %v859, %v881
        %v883 = vlaneseq
        %v884 = vshrl.u32 %v883, 7
        %v885 = vsub.s32 4, %v884
        %v886 = vrot.slane %v859, %v885
        %v887 = vlaneseq
        %v888 = vshrl.u32 %v887, 7
        %v889 = vsub.s32 5, %v888
        %v890 = vrot.slane %v859, %v889
        %v891 = vlaneseq
        %v892 = vshrl.u32 %v891, 7
        %v893 = vsub.s32 6, %v892
        %v894 = vrot.slane %v859, %v893
        %v895 = vlaneseq
        %v896 = vshrl.u32 %v895, 7
        %v897 = vsub.s32 7, %v896
        %v898 = vrot.slane %v859, %v897
        %v899 = vlaneseq
        %v900 = vshrl.u32 %v899, 7
        %v901 = vsub.s32 0, %v900
        %v902 = vrot.slane %v860, %v901
        %v912 = vmul.f32 %v863, %v870
        %v913 = vmul.f32 %v863, %v874
        %v914 = vmul.f32 %v863, %v878
        %v915 = vmul.f32 %v863, %v882
        %v916 = vmul.f32 %v863, %v886
        %v917 = vmul.f32 %v863, %v890
        %v918 = vmul.f32 %v863, %v894
        %v919 = vmul.f32 %v863, %v898
        %v920 = vmul.f32 %v863, %v902
        %930 = vrot.lane.b32.xlu0 %v912, 63
        %v931 = vpop.permute.xlu0 %930
        %932 = vrot.lane.b32.xlu0 %v913, 63
        %v933 = vpop.permute.xlu0 %932
        %934 = vrot.lane.b32.xlu0 %v914, 63
        %v935 = vpop.permute.xlu0 %934
        %936 = vrot.lane.b32.xlu0 %v915, 63
        %v937 = vpop.permute.xlu0 %936
        %938 = vrot.lane.b32.xlu0 %v916, 63
        %v939 = vpop.permute.xlu0 %938
        %940 = vrot.lane.b32.xlu0 %v917, 63
        %v941 = vpop.permute.xlu0 %940
        %942 = vrot.lane.b32.xlu0 %v918, 63
        %v943 = vpop.permute.xlu0 %942
        %944 = vrot.lane.b32.xlu0 %v919, 63
        %v945 = vpop.permute.xlu0 %944
        %946 = vrot.lane.b32.xlu0 %v920, 63
        %v947 = vpop.permute.xlu0 %946
        %vm948 = vcmask 515072
        %v949 = vsel %vm948, %v931, %v933
        %v950 = vsel %vm948, %v933, %v935
        %v951 = vsel %vm948, %v935, %v937
        %v952 = vsel %vm948, %v937, %v939
        %v953 = vsel %vm948, %v939, %v941
        %v954 = vsel %vm948, %v941, %v943
        %v955 = vsel %vm948, %v943, %v945
        %v956 = vsel %vm948, %v945, %v947
        %v965 = vadd.f32 %v851, %v949
        %v966 = vadd.f32 %v852, %v950
        %v967 = vadd.f32 %v853, %v951
        %v968 = vadd.f32 %v854, %v952
        %v969 = vadd.f32 %v855, %v953
        %v970 = vadd.f32 %v856, %v954
        %v971 = vadd.f32 %v857, %v955
        %v972 = vadd.f32 %v858, %v956
        %973 = vset.pattern.permute.xlu0 8
        %974 = vperm.xlu0 %973, %v436
        %v975 = vpop.permute.xlu0 %974
        %v977 = vmul.f32 %v975, %v870
        %v978 = vmul.f32 %v975, %v874
        %v979 = vmul.f32 %v975, %v878
        %v980 = vmul.f32 %v975, %v882
        %v981 = vmul.f32 %v975, %v886
        %v982 = vmul.f32 %v975, %v890
        %v983 = vmul.f32 %v975, %v894
        %v984 = vmul.f32 %v975, %v898
        %v985 = vmul.f32 %v975, %v902
        %995 = vrot.lane.b32.xlu0 %v977, 62
        %v996 = vpop.permute.xlu0 %995
        %997 = vrot.lane.b32.xlu0 %v978, 62
        %v998 = vpop.permute.xlu0 %997
        %999 = vrot.lane.b32.xlu0 %v979, 62
        %v1000 = vpop.permute.xlu0 %999
        %1001 = vrot.lane.b32.xlu0 %v980, 62
        %v1002 = vpop.permute.xlu0 %1001
        %1003 = vrot.lane.b32.xlu0 %v981, 62
        %v1004 = vpop.permute.xlu0 %1003
        %1005 = vrot.lane.b32.xlu0 %v982, 62
        %v1006 = vpop.permute.xlu0 %1005
        %1007 = vrot.lane.b32.xlu0 %v983, 62
        %v1008 = vpop.permute.xlu0 %1007
        %1009 = vrot.lane.b32.xlu0 %v984, 62
        %v1010 = vpop.permute.xlu0 %1009
        %1011 = vrot.lane.b32.xlu0 %v985, 62
        %v1012 = vpop.permute.xlu0 %1011
        %vm1013 = vcmask 506880
        %v1014 = vsel %vm1013, %v996, %v998
        %v1015 = vsel %vm1013, %v998, %v1000
        %v1016 = vsel %vm1013, %v1000, %v1002
        %v1017 = vsel %vm1013, %v1002, %v1004
        %v1018 = vsel %vm1013, %v1004, %v1006
        %v1019 = vsel %vm1013, %v1006, %v1008
        %v1020 = vsel %vm1013, %v1008, %v1010
        %v1021 = vsel %vm1013, %v1010, %v1012
        %v1030 = vadd.f32 %v965, %v1014
        %v1031 = vadd.f32 %v966, %v1015
        %v1032 = vadd.f32 %v967, %v1016
        %v1033 = vadd.f32 %v968, %v1017
        %v1034 = vadd.f32 %v969, %v1018
        %v1035 = vadd.f32 %v970, %v1019
        %v1036 = vadd.f32 %v971, %v1020
        %v1037 = vadd.f32 %v972, %v1021
        %v1038 = vld [vmem:[%s2] sm:$0x3f]
        %1040 = vset.pattern.permute.xlu0 0
        %1041 = vperm.xlu0 %1040, %v1038
        %v1042 = vpop.permute.xlu0 %1041
        %v1044 = vadd.f32 %v1030, %v1042
        %v1045 = vadd.f32 %v1031, %v1042
        %v1046 = vadd.f32 %v1032, %v1042
        %v1047 = vadd.f32 %v1033, %v1042
        %v1048 = vadd.f32 %v1034, %v1042
        %v1049 = vadd.f32 %v1035, %v1042
        %v1050 = vadd.f32 %v1036, %v1042
        %v1051 = vadd.f32 %v1037, %v1042
        %v1052 = vmax.f32 %v1044, 0.0
        %v1053 = vmax.f32 %v1045, 0.0
        %v1054 = vmax.f32 %v1046, 0.0
        %v1055 = vmax.f32 %v1047, 0.0
        %v1056 = vmax.f32 %v1048, 0.0
        %v1057 = vmax.f32 %v1049, 0.0
        %v1058 = vmax.f32 %v1050, 0.0
        %v1059 = vmax.f32 %v1051, 0.0
        %1060 = vst [vmem:[#allocation2] sm:$0x3f] %v1052
        %1061 = vst [vmem:[#allocation2 + $0x8] sm:$0x3f] %v1053
        %1062 = vst [vmem:[#allocation2 + $0x10] sm:$0x3f] %v1054
        %1063 = vst [vmem:[#allocation2 + $0x18] sm:$0x3f] %v1055
        %1064 = vst [vmem:[#allocation2 + $0x20] sm:$0x3f] %v1056
        %1065 = vst [vmem:[#allocation2 + $0x28] sm:$0x3f] %v1057
        %1066 = vst [vmem:[#allocation2 + $0x30] sm:$0x3f] %v1058
        %vm1067 = vcmask 521216
        %1068 = vst.msk [vmem:[#allocation2 + $0x38] sm:$0x3f] %vm1067, %v1059
        %v1069 = vld [vmem:[#allocation2] sm:$0x3f]
        %v1070 = vld [vmem:[#allocation2 + $0x8] sm:$0x3f]
        %v1071 = vld [vmem:[#allocation2 + $0x10] sm:$0x3f]
        %v1072 = vld [vmem:[#allocation2 + $0x18] sm:$0x3f]
        %v1073 = vld [vmem:[#allocation2 + $0x20] sm:$0x3f]
        %v1074 = vld [vmem:[#allocation2 + $0x28] sm:$0x3f]
        %v1075 = vld [vmem:[#allocation2 + $0x30] sm:$0x3f]
        %v1076 = vld [vmem:[#allocation2 + $0x38] sm:$0x3f]
        %1085 = vrot.lane.b32.xlu0 %v1069, 127
        %v1086 = vpop.permute.xlu0 %1085
        %1087 = vrot.lane.b32.xlu0 %v1070, 127
        %v1088 = vpop.permute.xlu0 %1087
        %1089 = vrot.lane.b32.xlu0 %v1071, 127
        %v1090 = vpop.permute.xlu0 %1089
        %1091 = vrot.lane.b32.xlu0 %v1072, 127
        %v1092 = vpop.permute.xlu0 %1091
        %1093 = vrot.lane.b32.xlu0 %v1073, 127
        %v1094 = vpop.permute.xlu0 %1093
        %1095 = vrot.lane.b32.xlu0 %v1074, 127
        %v1096 = vpop.permute.xlu0 %1095
        %1097 = vrot.lane.b32.xlu0 %v1075, 127
        %v1098 = vpop.permute.xlu0 %1097
        %1099 = vrot.lane.b32.xlu0 %v1076, 127
        %v1100 = vpop.permute.xlu0 %1099
        %v1101 = vsel %vm535, %v1086, %v1088
        %v1102 = vsel %vm535, %v1088, %v1090
        %v1103 = vsel %vm535, %v1090, %v1092
        %v1104 = vsel %vm535, %v1092, %v1094
        %v1105 = vsel %vm535, %v1094, %v1096
        %v1106 = vsel %vm535, %v1096, %v1098
        %v1107 = vsel %vm535, %v1098, %v1100
        %v1116 = vmax.f32 %v1069, %v1101
        %v1117 = vmax.f32 %v1070, %v1102
        %v1118 = vmax.f32 %v1071, %v1103
        %v1119 = vmax.f32 %v1072, %v1104
        %v1120 = vmax.f32 %v1073, %v1105
        %v1121 = vmax.f32 %v1074, %v1106
        %v1122 = vmax.f32 %v1075, %v1107
        %v1123 = vmax.f32 %v1076, %v1100
        %1132 = vrot.lane.b32.xlu0 %v1116, 96
        %v1133 = vpop.permute.xlu0 %1132
        %1134 = vrot.lane.b32.xlu0 %v1117, 96
        %v1135 = vpop.permute.xlu0 %1134
        %1136 = vrot.lane.b32.xlu0 %v1118, 96
        %v1137 = vpop.permute.xlu0 %1136
        %1138 = vrot.lane.b32.xlu0 %v1119, 96
        %v1139 = vpop.permute.xlu0 %1138
        %1140 = vrot.lane.b32.xlu0 %v1120, 96
        %v1141 = vpop.permute.xlu0 %1140
        %1142 = vrot.lane.b32.xlu0 %v1121, 96
        %v1143 = vpop.permute.xlu0 %1142
        %1144 = vrot.lane.b32.xlu0 %v1122, 96
        %v1145 = vpop.permute.xlu0 %1144
        %1146 = vrot.lane.b32.xlu0 %v1123, 96
        %v1147 = vpop.permute.xlu0 %1146
        %v1148 = vsel %vm655, %v1133, %v1135
        %v1149 = vsel %vm655, %v1135, %v1137
        %v1150 = vsel %vm655, %v1137, %v1139
        %v1151 = vsel %vm655, %v1139, %v1141
        %v1152 = vsel %vm655, %v1141, %v1143
        %v1153 = vsel %vm655, %v1143, %v1145
        %v1154 = vsel %vm655, %v1145, %v1147
        %v1163 = vmax.f32 %v1116, %v1148
        %v1164 = vmax.f32 %v1117, %v1149
        %v1165 = vmax.f32 %v1118, %v1150
        %v1166 = vmax.f32 %v1119, %v1151
        %v1167 = vmax.f32 %v1120, %v1152
        %v1168 = vmax.f32 %v1121, %v1153
        %v1169 = vmax.f32 %v1122, %v1154
        %v1170 = vmax.f32 %v1123, %v1147
        %1171 = vst [vmem:[#allocation3] sm:$0x3f] %v1163
        %1172 = vst [vmem:[#allocation3 + $0x8] sm:$0x3f] %v1164
        %1173 = vst [vmem:[#allocation3 + $0x10] sm:$0x3f] %v1165
        %1174 = vst [vmem:[#allocation3 + $0x18] sm:$0x3f] %v1166
        %1175 = vst [vmem:[#allocation3 + $0x20] sm:$0x3f] %v1167
        %1176 = vst [vmem:[#allocation3 + $0x28] sm:$0x3f] %v1168
        %1177 = vst [vmem:[#allocation3 + $0x30] sm:$0x3f] %v1169
        %vm1178 = vcmask 242688
        %1179 = vst.msk [vmem:[#allocation3 + $0x38] sm:$0x3f] %vm1178, %v1170
        %1180 = vst [vmem:[#allocation4] sm:$0x3f] 0.0
        %1181 = vst [vmem:[#allocation4 + $0x8] sm:$0x3f] 0.0
        %vm1182 = vcmask 62464
        %1183 = vst.msk [vmem:[#allocation4 + $0x10] sm:$0x3f] %vm1182, 0.0
        %v1184 = vld [vmem:[%s5] sm:$0xff]
        %v1185 = vld [vmem:[%s5 + $0x8] sm:$0xff]
        %v1186 = vld [vmem:[%s5 + $0x10] sm:$0xff]
        %v1187 = vld [vmem:[%s5 + $0x18] sm:$0x3f]
        %v1188 = vld [vmem:[#allocation3] sm:$0x3f]
        %vm1189 = vcmask 244736
        %v1191 = vsel %vm1189, %v1188, 0
        %vm1193 = vcmask 1045504
        %v1195 = vsel %vm1193, %v1187, 0
        %1197 = vmatprep.subr.mxu0 0.0
        %1198 = vmatpush1.msra.mxu0 %v1184
        %1199 = vmatprep.subr.mxu0 0.0
        %1200 = vmatpush1.msra.mxu0 %v1185
        %1201 = vmatprep.subr.mxu0 0.0
        %1202 = vmatpush1.msra.mxu0 %v1186
        %1203 = vmatprep.subr.mxu0 0.0
        %1204 = vmatpush1.msra.mxu0 %v1195
        %1205 = vmatprep.subr.mxu0 0.0
        %1206 = vmatpush1.msra.mxu0 0.0
        %1207 = vmatprep.subr.mxu0 0.0
        %1208 = vmatpush1.msra.mxu0 0.0
        %1209 = vmatprep.subr.mxu0 0.0
        %1210 = vmatpush1.msra.mxu0 0.0
        %1211 = vmatprep.subr.mxu0 0.0
        %1212 = vmatpush1.msra.mxu0 0.0
        %1213 = vmatprep.subr.mxu0 0.0
        %1214 = vmatpush1.msra.mxu0 0.0
        %1215 = vmatprep.subr.mxu0 0.0
        %1216 = vmatpush1.msra.mxu0 0.0
        %1217 = vmatprep.subr.mxu0 0.0
        %1218 = vmatpush1.msra.mxu0 0.0
        %1219 = vmatprep.subr.mxu0 0.0
        %1220 = vmatpush1.msra.mxu0 0.0
        %1221 = vmatprep.subr.mxu0 0.0
        %1222 = vmatpush1.msra.mxu0 0.0
        %1223 = vmatprep.subr.mxu0 0.0
        %1224 = vmatpush1.msra.mxu0 0.0
        %1225 = vmatprep.subr.mxu0 0.0
        %1226 = vmatpush1.msra.mxu0 0.0
        %1227 = vmatprep.subr.mxu0 0.0
        %1228 = vmatpush1.msra.mxu0 0.0
        %1229 = vmatprep.subr.mxu0 0.0
        %1230 = vmatpush1.msra.mxu0 0.0
        %1231 = vmatprep.subr.mxu0 0.0
        %1232 = vmatpush1.msra.mxu0 0.0
        %1233 = vmatprep.subr.mxu0 0.0
        %1234 = vmatpush1.msra.mxu0 0.0
        %1235 = vmatprep.subr.mxu0 0.0
        %1236 = vmatpush1.msra.mxu0 0.0
        %1237 = vmatprep.subr.mxu0 0.0
        %1238 = vmatpush1.msra.mxu0 0.0
        %1239 = vmatprep.subr.mxu0 0.0
        %1240 = vmatpush1.msra.mxu0 0.0
        %1241 = vmatprep.subr.mxu0 0.0
        %1242 = vmatpush1.msra.mxu0 0.0
        %1243 = vmatprep.subr.mxu0 0.0
        %1244 = vmatpush1.msra.mxu0 0.0
        %1245 = vmatprep.subr.mxu0 0.0
        %1246 = vmatpush1.msra.mxu0 0.0
        %1247 = vmatprep.subr.mxu0 0.0
        %1248 = vmatpush1.msra.mxu0 0.0
        %1249 = vmatprep.subr.mxu0 0.0
        %1250 = vmatpush1.msra.mxu0 0.0
        %1251 = vmatprep.subr.mxu0 0.0
        %1252 = vmatpush1.msra.mxu0 0.0
        %1253 = vmatprep.subr.mxu0 0.0
        %1254 = vmatpush1.msra.mxu0 0.0
        %1255 = vmatprep.subr.mxu0 0.0
        %1256 = vmatpush1.msra.mxu0 0.0
        %1257 = vmatprep.subr.mxu0 0.0
        %1258 = vmatpush1.msra.mxu0 0.0
        %1259 = vmatprep.subr.mxu0 0.0
        %1260 = vmatpush1.msra.mxu0 0.0
        %1261 = vmatprep.mubr.f32.mxu0 0.0
        %1262 = vmatmul.mubr.f32.gmra.mrb[0].mxu0 %v1191
        %v1263 = vpop.f32.mrb[0].mxu0
        %v1264 = vadd.f32 0.0, %v1263
        %v1265 = vpop.f32.mrb[0].mxu0
        %1266 = vdwg.mxu0
        %vm1267 = vcmask 119808
        %1268 = vst.msk [vmem:[#allocation4] sm:$0x3f] %vm1267, %v1264
        %v1269 = vld [vmem:[#allocation3] sm:$0x3f]
        %1271 = vrot.lane.b32.xlu0 %v1269, 64
        %v1272 = vpop.permute.xlu0 %1271
        %v1273 = vsel %vm1189, %v1272, 0
        %1275 = vmatprep.subr.mxu0 0.0
        %1276 = vmatpush1.msra.mxu0 %v1184
        %1277 = vmatprep.subr.mxu0 0.0
        %1278 = vmatpush1.msra.mxu0 %v1185
        %1279 = vmatprep.subr.mxu0 0.0
        %1280 = vmatpush1.msra.mxu0 %v1186
        %1281 = vmatprep.subr.mxu0 0.0
        %1282 = vmatpush1.msra.mxu0 %v1195
        %1283 = vmatprep.subr.mxu0 0.0
        %1284 = vmatpush1.msra.mxu0 0.0
        %1285 = vmatprep.subr.mxu0 0.0
        %1286 = vmatpush1.msra.mxu0 0.0
        %1287 = vmatprep.subr.mxu0 0.0
        %1288 = vmatpush1.msra.mxu0 0.0
        %1289 = vmatprep.subr.mxu0 0.0
        %1290 = vmatpush1.msra.mxu0 0.0
        %1291 = vmatprep.subr.mxu0 0.0
        %1292 = vmatpush1.msra.mxu0 0.0
        %1293 = vmatprep.subr.mxu0 0.0
        %1294 = vmatpush1.msra.mxu0 0.0
        %1295 = vmatprep.subr.mxu0 0.0
        %1296 = vmatpush1.msra.mxu0 0.0
        %1297 = vmatprep.subr.mxu0 0.0
        %1298 = vmatpush1.msra.mxu0 0.0
        %1299 = vmatprep.subr.mxu0 0.0
        %1300 = vmatpush1.msra.mxu0 0.0
        %1301 = vmatprep.subr.mxu0 0.0
        %1302 = vmatpush1.msra.mxu0 0.0
        %1303 = vmatprep.subr.mxu0 0.0
        %1304 = vmatpush1.msra.mxu0 0.0
        %1305 = vmatprep.subr.mxu0 0.0
        %1306 = vmatpush1.msra.mxu0 0.0
        %1307 = vmatprep.subr.mxu0 0.0
        %1308 = vmatpush1.msra.mxu0 0.0
        %1309 = vmatprep.subr.mxu0 0.0
        %1310 = vmatpush1.msra.mxu0 0.0
        %1311 = vmatprep.subr.mxu0 0.0
        %1312 = vmatpush1.msra.mxu0 0.0
        %1313 = vmatprep.subr.mxu0 0.0
        %1314 = vmatpush1.msra.mxu0 0.0
        %1315 = vmatprep.subr.mxu0 0.0
        %1316 = vmatpush1.msra.mxu0 0.0
        %1317 = vmatprep.subr.mxu0 0.0
        %1318 = vmatpush1.msra.mxu0 0.0
        %1319 = vmatprep.subr.mxu0 0.0
        %1320 = vmatpush1.msra.mxu0 0.0
        %1321 = vmatprep.subr.mxu0 0.0
        %1322 = vmatpush1.msra.mxu0 0.0
        %1323 = vmatprep.subr.mxu0 0.0
        %1324 = vmatpush1.msra.mxu0 0.0
        %1325 = vmatprep.subr.mxu0 0.0
        %1326 = vmatpush1.msra.mxu0 0.0
        %1327 = vmatprep.subr.mxu0 0.0
        %1328 = vmatpush1.msra.mxu0 0.0
        %1329 = vmatprep.subr.mxu0 0.0
        %1330 = vmatpush1.msra.mxu0 0.0
        %1331 = vmatprep.subr.mxu0 0.0
        %1332 = vmatpush1.msra.mxu0 0.0
        %1333 = vmatprep.subr.mxu0 0.0
        %1334 = vmatpush1.msra.mxu0 0.0
        %1335 = vmatprep.subr.mxu0 0.0
        %1336 = vmatpush1.msra.mxu0 0.0
        %1337 = vmatprep.subr.mxu0 0.0
        %1338 = vmatpush1.msra.mxu0 0.0
        %1339 = vmatprep.mubr.f32.mxu0 0.0
        %1340 = vmatmul.mubr.f32.gmra.mrb[0].mxu0 %v1273
        %v1341 = vpop.f32.mrb[0].mxu0
        %v1342 = vadd.f32 0.0, %v1341
        %v1343 = vpop.f32.mrb[0].mxu0
        %1344 = vdwg.mxu0
        %1346 = vrot.lane.b32.xlu0 %v1342, 15
        %v1347 = vpop.permute.xlu0 %1346
        %vm1349 = vcmask 242808
        %1350 = vst.msk [vmem:[#allocation4] sm:$0x3f] %vm1349, %v1347
        %v1351 = vld [vmem:[#allocation3 + $0x8] sm:$0x3f]
        %v1353 = vsel %vm1189, %v1351, 0
        %1355 = vmatprep.subr.mxu0 0.0
        %1356 = vmatpush1.msra.mxu0 %v1184
        %1357 = vmatprep.subr.mxu0 0.0
        %1358 = vmatpush1.msra.mxu0 %v1185
        %1359 = vmatprep.subr.mxu0 0.0
        %1360 = vmatpush1.msra.mxu0 %v1186
        %1361 = vmatprep.subr.mxu0 0.0
        %1362 = vmatpush1.msra.mxu0 %v1195
        %1363 = vmatprep.subr.mxu0 0.0
        %1364 = vmatpush1.msra.mxu0 0.0
        %1365 = vmatprep.subr.mxu0 0.0
        %1366 = vmatpush1.msra.mxu0 0.0
        %1367 = vmatprep.subr.mxu0 0.0
        %1368 = vmatpush1.msra.mxu0 0.0
        %1369 = vmatprep.subr.mxu0 0.0
        %1370 = vmatpush1.msra.mxu0 0.0
        %1371 = vmatprep.subr.mxu0 0.0
        %1372 = vmatpush1.msra.mxu0 0.0
        %1373 = vmatprep.subr.mxu0 0.0
        %1374 = vmatpush1.msra.mxu0 0.0
        %1375 = vmatprep.subr.mxu0 0.0
        %1376 = vmatpush1.msra.mxu0 0.0
        %1377 = vmatprep.subr.mxu0 0.0
        %1378 = vmatpush1.msra.mxu0 0.0
        %1379 = vmatprep.subr.mxu0 0.0
        %1380 = vmatpush1.msra.mxu0 0.0
        %1381 = vmatprep.subr.mxu0 0.0
        %1382 = vmatpush1.msra.mxu0 0.0
        %1383 = vmatprep.subr.mxu0 0.0
        %1384 = vmatpush1.msra.mxu0 0.0
        %1385 = vmatprep.subr.mxu0 0.0
        %1386 = vmatpush1.msra.mxu0 0.0
        %1387 = vmatprep.subr.mxu0 0.0
        %1388 = vmatpush1.msra.mxu0 0.0
        %1389 = vmatprep.subr.mxu0 0.0
        %1390 = vmatpush1.msra.mxu0 0.0
        %1391 = vmatprep.subr.mxu0 0.0
        %1392 = vmatpush1.msra.mxu0 0.0
        %1393 = vmatprep.subr.mxu0 0.0
        %1394 = vmatpush1.msra.mxu0 0.0
        %1395 = vmatprep.subr.mxu0 0.0
        %1396 = vmatpush1.msra.mxu0 0.0
        %1397 = vmatprep.subr.mxu0 0.0
        %1398 = vmatpush1.msra.mxu0 0.0
        %1399 = vmatprep.subr.mxu0 0.0
        %1400 = vmatpush1.msra.mxu0 0.0
        %1401 = vmatprep.subr.mxu0 0.0
        %1402 = vmatpush1.msra.mxu0 0.0
        %1403 = vmatprep.subr.mxu0 0.0
        %1404 = vmatpush1.msra.mxu0 0.0
        %1405 = vmatprep.subr.mxu0 0.0
        %1406 = vmatpush1.msra.mxu0 0.0
        %1407 = vmatprep.subr.mxu0 0.0
        %1408 = vmatpush1.msra.mxu0 0.0
        %1409 = vmatprep.subr.mxu0 0.0
        %1410 = vmatpush1.msra.mxu0 0.0
        %1411 = vmatprep.subr.mxu0 0.0
        %1412 = vmatpush1.msra.mxu0 0.0
        %1413 = vmatprep.subr.mxu0 0.0
        %1414 = vmatpush1.msra.mxu0 0.0
        %1415 = vmatprep.subr.mxu0 0.0
        %1416 = vmatpush1.msra.mxu0 0.0
        %1417 = vmatprep.subr.mxu0 0.0
        %1418 = vmatpush1.msra.mxu0 0.0
        %1419 = vmatprep.mubr.f32.mxu0 0.0
        %1420 = vmatmul.mubr.f32.gmra.mrb[0].mxu0 %v1353
        %v1421 = vpop.f32.mrb[0].mxu0
        %v1422 = vadd.f32 0.0, %v1421
        %v1423 = vpop.f32.mrb[0].mxu0
        %1424 = vdwg.mxu0
        %1426 = vrot.lane.b32.xlu0 %v1422, 30
        %v1427 = vpop.permute.xlu0 %1426
        %vm1429 = vcmask 365808
        %1430 = vst.msk [vmem:[#allocation4] sm:$0x3f] %vm1429, %v1427
        %v1431 = vld [vmem:[#allocation3 + $0x8] sm:$0x3f]
        %1433 = vrot.lane.b32.xlu0 %v1431, 64
        %v1434 = vpop.permute.xlu0 %1433
        %v1435 = vsel %vm1189, %v1434, 0
        %1437 = vmatprep.subr.mxu0 0.0
        %1438 = vmatpush1.msra.mxu0 %v1184
        %1439 = vmatprep.subr.mxu0 0.0
        %1440 = vmatpush1.msra.mxu0 %v1185
        %1441 = vmatprep.subr.mxu0 0.0
        %1442 = vmatpush1.msra.mxu0 %v1186
        %1443 = vmatprep.subr.mxu0 0.0
        %1444 = vmatpush1.msra.mxu0 %v1195
        %1445 = vmatprep.subr.mxu0 0.0
        %1446 = vmatpush1.msra.mxu0 0.0
        %1447 = vmatprep.subr.mxu0 0.0
        %1448 = vmatpush1.msra.mxu0 0.0
        %1449 = vmatprep.subr.mxu0 0.0
        %1450 = vmatpush1.msra.mxu0 0.0
        %1451 = vmatprep.subr.mxu0 0.0
        %1452 = vmatpush1.msra.mxu0 0.0
        %1453 = vmatprep.subr.mxu0 0.0
        %1454 = vmatpush1.msra.mxu0 0.0
        %1455 = vmatprep.subr.mxu0 0.0
        %1456 = vmatpush1.msra.mxu0 0.0
        %1457 = vmatprep.subr.mxu0 0.0
        %1458 = vmatpush1.msra.mxu0 0.0
        %1459 = vmatprep.subr.mxu0 0.0
        %1460 = vmatpush1.msra.mxu0 0.0
        %1461 = vmatprep.subr.mxu0 0.0
        %1462 = vmatpush1.msra.mxu0 0.0
        %1463 = vmatprep.subr.mxu0 0.0
        %1464 = vmatpush1.msra.mxu0 0.0
        %1465 = vmatprep.subr.mxu0 0.0
        %1466 = vmatpush1.msra.mxu0 0.0
        %1467 = vmatprep.subr.mxu0 0.0
        %1468 = vmatpush1.msra.mxu0 0.0
        %1469 = vmatprep.subr.mxu0 0.0
        %1470 = vmatpush1.msra.mxu0 0.0
        %1471 = vmatprep.subr.mxu0 0.0
        %1472 = vmatpush1.msra.mxu0 0.0
        %1473 = vmatprep.subr.mxu0 0.0
        %1474 = vmatpush1.msra.mxu0 0.0
        %1475 = vmatprep.subr.mxu0 0.0
        %1476 = vmatpush1.msra.mxu0 0.0
        %1477 = vmatprep.subr.mxu0 0.0
        %1478 = vmatpush1.msra.mxu0 0.0
        %1479 = vmatprep.subr.mxu0 0.0
        %1480 = vmatpush1.msra.mxu0 0.0
        %1481 = vmatprep.subr.mxu0 0.0
        %1482 = vmatpush1.msra.mxu0 0.0
        %1483 = vmatprep.subr.mxu0 0.0
        %1484 = vmatpush1.msra.mxu0 0.0
        %1485 = vmatprep.subr.mxu0 0.0
        %1486 = vmatpush1.msra.mxu0 0.0
        %1487 = vmatprep.subr.mxu0 0.0
        %1488 = vmatpush1.msra.mxu0 0.0
        %1489 = vmatprep.subr.mxu0 0.0
        %1490 = vmatpush1.msra.mxu0 0.0
        %1491 = vmatprep.subr.mxu0 0.0
        %1492 = vmatpush1.msra.mxu0 0.0
        %1493 = vmatprep.subr.mxu0 0.0
        %1494 = vmatpush1.msra.mxu0 0.0
        %1495 = vmatprep.subr.mxu0 0.0
        %1496 = vmatpush1.msra.mxu0 0.0
        %1497 = vmatprep.subr.mxu0 0.0
        %1498 = vmatpush1.msra.mxu0 0.0
        %1499 = vmatprep.subr.mxu0 0.0
        %1500 = vmatpush1.msra.mxu0 0.0
        %1501 = vmatprep.mubr.f32.mxu0 0.0
        %1502 = vmatmul.mubr.f32.gmra.mrb[0].mxu0 %v1435
        %v1503 = vpop.f32.mrb[0].mxu0
        %v1504 = vadd.f32 0.0, %v1503
        %v1505 = vpop.f32.mrb[0].mxu0
        %1506 = vdwg.mxu0
        %1508 = vrot.lane.b32.xlu0 %v1504, 45
        %v1509 = vpop.permute.xlu0 %1508
        %vm1511 = vcmask 488808
        %1512 = vst.msk [vmem:[#allocation4] sm:$0x3f] %vm1511, %v1509
        %v1513 = vld [vmem:[#allocation3 + $0x10] sm:$0x3f]
        %v1515 = vsel %vm1189, %v1513, 0
        %1517 = vmatprep.subr.mxu0 0.0
        %1518 = vmatpush1.msra.mxu0 %v1184
        %1519 = vmatprep.subr.mxu0 0.0
        %1520 = vmatpush1.msra.mxu0 %v1185
        %1521 = vmatprep.subr.mxu0 0.0
        %1522 = vmatpush1.msra.mxu0 %v1186
        %1523 = vmatprep.subr.mxu0 0.0
        %1524 = vmatpush1.msra.mxu0 %v1195
        %1525 = vmatprep.subr.mxu0 0.0
        %1526 = vmatpush1.msra.mxu0 0.0
        %1527 = vmatprep.subr.mxu0 0.0
        %1528 = vmatpush1.msra.mxu0 0.0
        %1529 = vmatprep.subr.mxu0 0.0
        %1530 = vmatpush1.msra.mxu0 0.0
        %1531 = vmatprep.subr.mxu0 0.0
        %1532 = vmatpush1.msra.mxu0 0.0
        %1533 = vmatprep.subr.mxu0 0.0
        %1534 = vmatpush1.msra.mxu0 0.0
        %1535 = vmatprep.subr.mxu0 0.0
        %1536 = vmatpush1.msra.mxu0 0.0
        %1537 = vmatprep.subr.mxu0 0.0
        %1538 = vmatpush1.msra.mxu0 0.0
        %1539 = vmatprep.subr.mxu0 0.0
        %1540 = vmatpush1.msra.mxu0 0.0
        %1541 = vmatprep.subr.mxu0 0.0
        %1542 = vmatpush1.msra.mxu0 0.0
        %1543 = vmatprep.subr.mxu0 0.0
        %1544 = vmatpush1.msra.mxu0 0.0
        %1545 = vmatprep.subr.mxu0 0.0
        %1546 = vmatpush1.msra.mxu0 0.0
        %1547 = vmatprep.subr.mxu0 0.0
        %1548 = vmatpush1.msra.mxu0 0.0
        %1549 = vmatprep.subr.mxu0 0.0
        %1550 = vmatpush1.msra.mxu0 0.0
        %1551 = vmatprep.subr.mxu0 0.0
        %1552 = vmatpush1.msra.mxu0 0.0
        %1553 = vmatprep.subr.mxu0 0.0
        %1554 = vmatpush1.msra.mxu0 0.0
        %1555 = vmatprep.subr.mxu0 0.0
        %1556 = vmatpush1.msra.mxu0 0.0
        %1557 = vmatprep.subr.mxu0 0.0
        %1558 = vmatpush1.msra.mxu0 0.0
        %1559 = vmatprep.subr.mxu0 0.0
        %1560 = vmatpush1.msra.mxu0 0.0
        %1561 = vmatprep.subr.mxu0 0.0
        %1562 = vmatpush1.msra.mxu0 0.0
        %1563 = vmatprep.subr.mxu0 0.0
        %1564 = vmatpush1.msra.mxu0 0.0
        %1565 = vmatprep.subr.mxu0 0.0
        %1566 = vmatpush1.msra.mxu0 0.0
        %1567 = vmatprep.subr.mxu0 0.0
        %1568 = vmatpush1.msra.mxu0 0.0
        %1569 = vmatprep.subr.mxu0 0.0
        %1570 = vmatpush1.msra.mxu0 0.0
        %1571 = vmatprep.subr.mxu0 0.0
        %1572 = vmatpush1.msra.mxu0 0.0
        %1573 = vmatprep.subr.mxu0 0.0
        %1574 = vmatpush1.msra.mxu0 0.0
        %1575 = vmatprep.subr.mxu0 0.0
        %1576 = vmatpush1.msra.mxu0 0.0
        %1577 = vmatprep.subr.mxu0 0.0
        %1578 = vmatpush1.msra.mxu0 0.0
        %1579 = vmatprep.subr.mxu0 0.0
        %1580 = vmatpush1.msra.mxu0 0.0
        %1581 = vmatprep.mubr.f32.mxu0 0.0
        %1582 = vmatmul.mubr.f32.gmra.mrb[0].mxu0 %v1515
        %v1583 = vpop.f32.mrb[0].mxu0
        %v1584 = vadd.f32 0.0, %v1583
        %v1585 = vpop.f32.mrb[0].mxu0
        %1586 = vdwg.mxu0
        %1588 = vrot.lane.b32.xlu0 %v1584, 60
        %v1589 = vpop.permute.xlu0 %1588
        %vm1591 = vcmask 611808
        %1592 = vst.msk [vmem:[#allocation4] sm:$0x3f] %vm1591, %v1589
        %v1593 = vld [vmem:[#allocation3 + $0x10] sm:$0x3f]
        %1595 = vrot.lane.b32.xlu0 %v1593, 64
        %v1596 = vpop.permute.xlu0 %1595
        %v1597 = vsel %vm1189, %v1596, 0
        %1599 = vmatprep.subr.mxu0 0.0
        %1600 = vmatpush1.msra.mxu0 %v1184
        %1601 = vmatprep.subr.mxu0 0.0
        %1602 = vmatpush1.msra.mxu0 %v1185
        %1603 = vmatprep.subr.mxu0 0.0
        %1604 = vmatpush1.msra.mxu0 %v1186
        %1605 = vmatprep.subr.mxu0 0.0
        %1606 = vmatpush1.msra.mxu0 %v1195
        %1607 = vmatprep.subr.mxu0 0.0
        %1608 = vmatpush1.msra.mxu0 0.0
        %1609 = vmatprep.subr.mxu0 0.0
        %1610 = vmatpush1.msra.mxu0 0.0
        %1611 = vmatprep.subr.mxu0 0.0
        %1612 = vmatpush1.msra.mxu0 0.0
        %1613 = vmatprep.subr.mxu0 0.0
        %1614 = vmatpush1.msra.mxu0 0.0
        %1615 = vmatprep.subr.mxu0 0.0
        %1616 = vmatpush1.msra.mxu0 0.0
        %1617 = vmatprep.subr.mxu0 0.0
        %1618 = vmatpush1.msra.mxu0 0.0
        %1619 = vmatprep.subr.mxu0 0.0
        %1620 = vmatpush1.msra.mxu0 0.0
        %1621 = vmatprep.subr.mxu0 0.0
        %1622 = vmatpush1.msra.mxu0 0.0
        %1623 = vmatprep.subr.mxu0 0.0
        %1624 = vmatpush1.msra.mxu0 0.0
        %1625 = vmatprep.subr.mxu0 0.0
        %1626 = vmatpush1.msra.mxu0 0.0
        %1627 = vmatprep.subr.mxu0 0.0
        %1628 = vmatpush1.msra.mxu0 0.0
        %1629 = vmatprep.subr.mxu0 0.0
        %1630 = vmatpush1.msra.mxu0 0.0
        %1631 = vmatprep.subr.mxu0 0.0
        %1632 = vmatpush1.msra.mxu0 0.0
        %1633 = vmatprep.subr.mxu0 0.0
        %1634 = vmatpush1.msra.mxu0 0.0
        %1635 = vmatprep.subr.mxu0 0.0
        %1636 = vmatpush1.msra.mxu0 0.0
        %1637 = vmatprep.subr.mxu0 0.0
        %1638 = vmatpush1.msra.mxu0 0.0
        %1639 = vmatprep.subr.mxu0 0.0
        %1640 = vmatpush1.msra.mxu0 0.0
        %1641 = vmatprep.subr.mxu0 0.0
        %1642 = vmatpush1.msra.mxu0 0.0
        %1643 = vmatprep.subr.mxu0 0.0
        %1644 = vmatpush1.msra.mxu0 0.0
        %1645 = vmatprep.subr.mxu0 0.0
        %1646 = vmatpush1.msra.mxu0 0.0
        %1647 = vmatprep.subr.mxu0 0.0
        %1648 = vmatpush1.msra.mxu0 0.0
        %1649 = vmatprep.subr.mxu0 0.0
        %1650 = vmatpush1.msra.mxu0 0.0
        %1651 = vmatprep.subr.mxu0 0.0
        %1652 = vmatpush1.msra.mxu0 0.0
        %1653 = vmatprep.subr.mxu0 0.0
        %1654 = vmatpush1.msra.mxu0 0.0
        %1655 = vmatprep.subr.mxu0 0.0
        %1656 = vmatpush1.msra.mxu0 0.0
        %1657 = vmatprep.subr.mxu0 0.0
        %1658 = vmatpush1.msra.mxu0 0.0
        %1659 = vmatprep.subr.mxu0 0.0
        %1660 = vmatpush1.msra.mxu0 0.0
        %1661 = vmatprep.subr.mxu0 0.0
        %1662 = vmatpush1.msra.mxu0 0.0
        %1663 = vmatprep.mubr.f32.mxu0 0.0
        %1664 = vmatmul.mubr.f32.gmra.mrb[0].mxu0 %v1597
        %v1665 = vpop.f32.mrb[0].mxu0
        %v1666 = vadd.f32 0.0, %v1665
        %v1667 = vpop.f32.mrb[0].mxu0
        %1668 = vdwg.mxu0
        %1670 = vrot.lane.b32.xlu0 %v1666, 75
        %v1671 = vpop.permute.xlu0 %1670
        %vm1673 = vcmask 734808
        %1674 = vst.msk [vmem:[#allocation4] sm:$0x3f] %vm1673, %v1671
        %v1675 = vld [vmem:[#allocation3 + $0x18] sm:$0x3f]
        %v1677 = vsel %vm1189, %v1675, 0
        %1679 = vmatprep.subr.mxu0 0.0
        %1680 = vmatpush1.msra.mxu0 %v1184
        %1681 = vmatprep.subr.mxu0 0.0
        %1682 = vmatpush1.msra.mxu0 %v1185
        %1683 = vmatprep.subr.mxu0 0.0
        %1684 = vmatpush1.msra.mxu0 %v1186
        %1685 = vmatprep.subr.mxu0 0.0
        %1686 = vmatpush1.msra.mxu0 %v1195
        %1687 = vmatprep.subr.mxu0 0.0
        %1688 = vmatpush1.msra.mxu0 0.0
        %1689 = vmatprep.subr.mxu0 0.0
        %1690 = vmatpush1.msra.mxu0 0.0
        %1691 = vmatprep.subr.mxu0 0.0
        %1692 = vmatpush1.msra.mxu0 0.0
        %1693 = vmatprep.subr.mxu0 0.0
        %1694 = vmatpush1.msra.mxu0 0.0
        %1695 = vmatprep.subr.mxu0 0.0
        %1696 = vmatpush1.msra.mxu0 0.0
        %1697 = vmatprep.subr.mxu0 0.0
        %1698 = vmatpush1.msra.mxu0 0.0
        %1699 = vmatprep.subr.mxu0 0.0
        %1700 = vmatpush1.msra.mxu0 0.0
        %1701 = vmatprep.subr.mxu0 0.0
        %1702 = vmatpush1.msra.mxu0 0.0
        %1703 = vmatprep.subr.mxu0 0.0
        %1704 = vmatpush1.msra.mxu0 0.0
        %1705 = vmatprep.subr.mxu0 0.0
        %1706 = vmatpush1.msra.mxu0 0.0
        %1707 = vmatprep.subr.mxu0 0.0
        %1708 = vmatpush1.msra.mxu0 0.0
        %1709 = vmatprep.subr.mxu0 0.0
        %1710 = vmatpush1.msra.mxu0 0.0
        %1711 = vmatprep.subr.mxu0 0.0
        %1712 = vmatpush1.msra.mxu0 0.0
        %1713 = vmatprep.subr.mxu0 0.0
        %1714 = vmatpush1.msra.mxu0 0.0
        %1715 = vmatprep.subr.mxu0 0.0
        %1716 = vmatpush1.msra.mxu0 0.0
        %1717 = vmatprep.subr.mxu0 0.0
        %1718 = vmatpush1.msra.mxu0 0.0
        %1719 = vmatprep.subr.mxu0 0.0
        %1720 = vmatpush1.msra.mxu0 0.0
        %1721 = vmatprep.subr.mxu0 0.0
        %1722 = vmatpush1.msra.mxu0 0.0
        %1723 = vmatprep.subr.mxu0 0.0
        %1724 = vmatpush1.msra.mxu0 0.0
        %1725 = vmatprep.subr.mxu0 0.0
        %1726 = vmatpush1.msra.mxu0 0.0
        %1727 = vmatprep.subr.mxu0 0.0
        %1728 = vmatpush1.msra.mxu0 0.0
        %1729 = vmatprep.subr.mxu0 0.0
        %1730 = vmatpush1.msra.mxu0 0.0
        %1731 = vmatprep.subr.mxu0 0.0
        %1732 = vmatpush1.msra.mxu0 0.0
        %1733 = vmatprep.subr.mxu0 0.0
        %1734 = vmatpush1.msra.mxu0 0.0
        %1735 = vmatprep.subr.mxu0 0.0
        %1736 = vmatpush1.msra.mxu0 0.0
        %1737 = vmatprep.subr.mxu0 0.0
        %1738 = vmatpush1.msra.mxu0 0.0
        %1739 = vmatprep.subr.mxu0 0.0
        %1740 = vmatpush1.msra.mxu0 0.0
        %1741 = vmatprep.subr.mxu0 0.0
        %1742 = vmatpush1.msra.mxu0 0.0
        %1743 = vmatprep.mubr.f32.mxu0 0.0
        %1744 = vmatmul.mubr.f32.gmra.mrb[0].mxu0 %v1677
        %v1745 = vpop.f32.mrb[0].mxu0
        %v1746 = vadd.f32 0.0, %v1745
        %v1747 = vpop.f32.mrb[0].mxu0
        %1748 = vdwg.mxu0
        %1750 = vrot.lane.b32.xlu0 %v1746, 90
        %v1751 = vpop.permute.xlu0 %1750
        %vm1753 = vcmask 857808
        %1754 = vst.msk [vmem:[#allocation4] sm:$0x3f] %vm1753, %v1751
        %v1755 = vld [vmem:[#allocation3 + $0x18] sm:$0x3f]
        %1757 = vrot.lane.b32.xlu0 %v1755, 64
        %v1758 = vpop.permute.xlu0 %1757
        %v1759 = vsel %vm1189, %v1758, 0
        %1761 = vmatprep.subr.mxu0 0.0
        %1762 = vmatpush1.msra.mxu0 %v1184
        %1763 = vmatprep.subr.mxu0 0.0
        %1764 = vmatpush1.msra.mxu0 %v1185
        %1765 = vmatprep.subr.mxu0 0.0
        %1766 = vmatpush1.msra.mxu0 %v1186
        %1767 = vmatprep.subr.mxu0 0.0
        %1768 = vmatpush1.msra.mxu0 %v1195
        %1769 = vmatprep.subr.mxu0 0.0
        %1770 = vmatpush1.msra.mxu0 0.0
        %1771 = vmatprep.subr.mxu0 0.0
        %1772 = vmatpush1.msra.mxu0 0.0
        %1773 = vmatprep.subr.mxu0 0.0
        %1774 = vmatpush1.msra.mxu0 0.0
        %1775 = vmatprep.subr.mxu0 0.0
        %1776 = vmatpush1.msra.mxu0 0.0
        %1777 = vmatprep.subr.mxu0 0.0
        %1778 = vmatpush1.msra.mxu0 0.0
        %1779 = vmatprep.subr.mxu0 0.0
        %1780 = vmatpush1.msra.mxu0 0.0
        %1781 = vmatprep.subr.mxu0 0.0
        %1782 = vmatpush1.msra.mxu0 0.0
        %1783 = vmatprep.subr.mxu0 0.0
        %1784 = vmatpush1.msra.mxu0 0.0
        %1785 = vmatprep.subr.mxu0 0.0
        %1786 = vmatpush1.msra.mxu0 0.0
        %1787 = vmatprep.subr.mxu0 0.0
        %1788 = vmatpush1.msra.mxu0 0.0
        %1789 = vmatprep.subr.mxu0 0.0
        %1790 = vmatpush1.msra.mxu0 0.0
        %1791 = vmatprep.subr.mxu0 0.0
        %1792 = vmatpush1.msra.mxu0 0.0
        %1793 = vmatprep.subr.mxu0 0.0
        %1794 = vmatpush1.msra.mxu0 0.0
        %1795 = vmatprep.subr.mxu0 0.0
        %1796 = vmatpush1.msra.mxu0 0.0
        %1797 = vmatprep.subr.mxu0 0.0
        %1798 = vmatpush1.msra.mxu0 0.0
        %1799 = vmatprep.subr.mxu0 0.0
        %1800 = vmatpush1.msra.mxu0 0.0
        %1801 = vmatprep.subr.mxu0 0.0
        %1802 = vmatpush1.msra.mxu0 0.0
        %1803 = vmatprep.subr.mxu0 0.0
        %1804 = vmatpush1.msra.mxu0 0.0
        %1805 = vmatprep.subr.mxu0 0.0
        %1806 = vmatpush1.msra.mxu0 0.0
        %1807 = vmatprep.subr.mxu0 0.0
        %1808 = vmatpush1.msra.mxu0 0.0
        %1809 = vmatprep.subr.mxu0 0.0
        %1810 = vmatpush1.msra.mxu0 0.0
        %1811 = vmatprep.subr.mxu0 0.0
        %1812 = vmatpush1.msra.mxu0 0.0
        %1813 = vmatprep.subr.mxu0 0.0
        %1814 = vmatpush1.msra.mxu0 0.0
        %1815 = vmatprep.subr.mxu0 0.0
        %1816 = vmatpush1.msra.mxu0 0.0
        %1817 = vmatprep.subr.mxu0 0.0
        %1818 = vmatpush1.msra.mxu0 0.0
        %1819 = vmatprep.subr.mxu0 0.0
        %1820 = vmatpush1.msra.mxu0 0.0
        %1821 = vmatprep.subr.mxu0 0.0
        %1822 = vmatpush1.msra.mxu0 0.0
        %1823 = vmatprep.subr.mxu0 0.0
        %1824 = vmatpush1.msra.mxu0 0.0
        %1825 = vmatprep.mubr.f32.mxu0 0.0
        %1826 = vmatmul.mubr.f32.gmra.mrb[0].mxu0 %v1759
        %v1827 = vpop.f32.mrb[0].mxu0
        %v1828 = vadd.f32 0.0, %v1827
        %v1829 = vpop.f32.mrb[0].mxu0
        %1830 = vdwg.mxu0
        %1832 = vrot.lane.b32.xlu0 %v1828, 105
        %v1833 = vpop.permute.xlu0 %1832
        %vm1835 = vcmask 980808
        %1836 = vst.msk [vmem:[#allocation4] sm:$0x3f] %vm1835, %v1833
        %v1837 = vld [vmem:[#allocation3 + $0x20] sm:$0x3f]
        %v1839 = vsel %vm1189, %v1837, 0
        %1841 = vmatprep.subr.mxu0 0.0
        %1842 = vmatpush1.msra.mxu0 %v1184
        %1843 = vmatprep.subr.mxu0 0.0
        %1844 = vmatpush1.msra.mxu0 %v1185
        %1845 = vmatprep.subr.mxu0 0.0
        %1846 = vmatpush1.msra.mxu0 %v1186
        %1847 = vmatprep.subr.mxu0 0.0
        %1848 = vmatpush1.msra.mxu0 %v1195
        %1849 = vmatprep.subr.mxu0 0.0
        %1850 = vmatpush1.msra.mxu0 0.0
        %1851 = vmatprep.subr.mxu0 0.0
        %1852 = vmatpush1.msra.mxu0 0.0
        %1853 = vmatprep.subr.mxu0 0.0
        %1854 = vmatpush1.msra.mxu0 0.0
        %1855 = vmatprep.subr.mxu0 0.0
        %1856 = vmatpush1.msra.mxu0 0.0
        %1857 = vmatprep.subr.mxu0 0.0
        %1858 = vmatpush1.msra.mxu0 0.0
        %1859 = vmatprep.subr.mxu0 0.0
        %1860 = vmatpush1.msra.mxu0 0.0
        %1861 = vmatprep.subr.mxu0 0.0
        %1862 = vmatpush1.msra.mxu0 0.0
        %1863 = vmatprep.subr.mxu0 0.0
        %1864 = vmatpush1.msra.mxu0 0.0
        %1865 = vmatprep.subr.mxu0 0.0
        %1866 = vmatpush1.msra.mxu0 0.0
        %1867 = vmatprep.subr.mxu0 0.0
        %1868 = vmatpush1.msra.mxu0 0.0
        %1869 = vmatprep.subr.mxu0 0.0
        %1870 = vmatpush1.msra.mxu0 0.0
        %1871 = vmatprep.subr.mxu0 0.0
        %1872 = vmatpush1.msra.mxu0 0.0
        %1873 = vmatprep.subr.mxu0 0.0
        %1874 = vmatpush1.msra.mxu0 0.0
        %1875 = vmatprep.subr.mxu0 0.0
        %1876 = vmatpush1.msra.mxu0 0.0
        %1877 = vmatprep.subr.mxu0 0.0
        %1878 = vmatpush1.msra.mxu0 0.0
        %1879 = vmatprep.subr.mxu0 0.0
        %1880 = vmatpush1.msra.mxu0 0.0
        %1881 = vmatprep.subr.mxu0 0.0
        %1882 = vmatpush1.msra.mxu0 0.0
        %1883 = vmatprep.subr.mxu0 0.0
        %1884 = vmatpush1.msra.mxu0 0.0
        %1885 = vmatprep.subr.mxu0 0.0
        %1886 = vmatpush1.msra.mxu0 0.0
        %1887 = vmatprep.subr.mxu0 0.0
        %1888 = vmatpush1.msra.mxu0 0.0
        %1889 = vmatprep.subr.mxu0 0.0
        %1890 = vmatpush1.msra.mxu0 0.0
        %1891 = vmatprep.subr.mxu0 0.0
        %1892 = vmatpush1.msra.mxu0 0.0
        %1893 = vmatprep.subr.mxu0 0.0
        %1894 = vmatpush1.msra.mxu0 0.0
        %1895 = vmatprep.subr.mxu0 0.0
        %1896 = vmatpush1.msra.mxu0 0.0
        %1897 = vmatprep.subr.mxu0 0.0
        %1898 = vmatpush1.msra.mxu0 0.0
        %1899 = vmatprep.subr.mxu0 0.0
        %1900 = vmatpush1.msra.mxu0 0.0
        %1901 = vmatprep.subr.mxu0 0.0
        %1902 = vmatpush1.msra.mxu0 0.0
        %1903 = vmatprep.subr.mxu0 0.0
        %1904 = vmatpush1.msra.mxu0 0.0
        %1905 = vmatprep.mubr.f32.mxu0 0.0
        %1906 = vmatmul.mubr.f32.gmra.mrb[0].mxu0 %v1839
        %v1907 = vpop.f32.mrb[0].mxu0
        %v1908 = vadd.f32 0.0, %v1907
        %v1909 = vpop.f32.mrb[0].mxu0
        %1910 = vdwg.mxu0
        %1912 = vrot.lane.b32.xlu0 %v1908, 120
        %v1913 = vpop.permute.xlu0 %1912
        %vm1915 = vcmask 1046464
        %1916 = vst.msk [vmem:[#allocation4] sm:$0x3f] %vm1915, %v1913
        %vm1917 = vcmask 54272
        %1918 = vst.msk [vmem:[#allocation4 + $0x8] sm:$0x3f] %vm1917, %v1913
        %v1919 = vld [vmem:[#allocation3 + $0x20] sm:$0x3f]
        %1921 = vrot.lane.b32.xlu0 %v1919, 64
        %v1922 = vpop.permute.xlu0 %1921
        %v1923 = vsel %vm1189, %v1922, 0
        %1925 = vmatprep.subr.mxu0 0.0
        %1926 = vmatpush1.msra.mxu0 %v1184
        %1927 = vmatprep.subr.mxu0 0.0
        %1928 = vmatpush1.msra.mxu0 %v1185
        %1929 = vmatprep.subr.mxu0 0.0
        %1930 = vmatpush1.msra.mxu0 %v1186
        %1931 = vmatprep.subr.mxu0 0.0
        %1932 = vmatpush1.msra.mxu0 %v1195
        %1933 = vmatprep.subr.mxu0 0.0
        %1934 = vmatpush1.msra.mxu0 0.0
        %1935 = vmatprep.subr.mxu0 0.0
        %1936 = vmatpush1.msra.mxu0 0.0
        %1937 = vmatprep.subr.mxu0 0.0
        %1938 = vmatpush1.msra.mxu0 0.0
        %1939 = vmatprep.subr.mxu0 0.0
        %1940 = vmatpush1.msra.mxu0 0.0
        %1941 = vmatprep.subr.mxu0 0.0
        %1942 = vmatpush1.msra.mxu0 0.0
        %1943 = vmatprep.subr.mxu0 0.0
        %1944 = vmatpush1.msra.mxu0 0.0
        %1945 = vmatprep.subr.mxu0 0.0
        %1946 = vmatpush1.msra.mxu0 0.0
        %1947 = vmatprep.subr.mxu0 0.0
        %1948 = vmatpush1.msra.mxu0 0.0
        %1949 = vmatprep.subr.mxu0 0.0
        %1950 = vmatpush1.msra.mxu0 0.0
        %1951 = vmatprep.subr.mxu0 0.0
        %1952 = vmatpush1.msra.mxu0 0.0
        %1953 = vmatprep.subr.mxu0 0.0
        %1954 = vmatpush1.msra.mxu0 0.0
        %1955 = vmatprep.subr.mxu0 0.0
        %1956 = vmatpush1.msra.mxu0 0.0
        %1957 = vmatprep.subr.mxu0 0.0
        %1958 = vmatpush1.msra.mxu0 0.0
        %1959 = vmatprep.subr.mxu0 0.0
        %1960 = vmatpush1.msra.mxu0 0.0
        %1961 = vmatprep.subr.mxu0 0.0
        %1962 = vmatpush1.msra.mxu0 0.0
        %1963 = vmatprep.subr.mxu0 0.0
        %1964 = vmatpush1.msra.mxu0 0.0
        %1965 = vmatprep.subr.mxu0 0.0
        %1966 = vmatpush1.msra.mxu0 0.0
        %1967 = vmatprep.subr.mxu0 0.0
        %1968 = vmatpush1.msra.mxu0 0.0
        %1969 = vmatprep.subr.mxu0 0.0
        %1970 = vmatpush1.msra.mxu0 0.0
        %1971 = vmatprep.subr.mxu0 0.0
        %1972 = vmatpush1.msra.mxu0 0.0
        %1973 = vmatprep.subr.mxu0 0.0
        %1974 = vmatpush1.msra.mxu0 0.0
        %1975 = vmatprep.subr.mxu0 0.0
        %1976 = vmatpush1.msra.mxu0 0.0
        %1977 = vmatprep.subr.mxu0 0.0
        %1978 = vmatpush1.msra.mxu0 0.0
        %1979 = vmatprep.subr.mxu0 0.0
        %1980 = vmatpush1.msra.mxu0 0.0
        %1981 = vmatprep.subr.mxu0 0.0
        %1982 = vmatpush1.msra.mxu0 0.0
        %1983 = vmatprep.subr.mxu0 0.0
        %1984 = vmatpush1.msra.mxu0 0.0
        %1985 = vmatprep.subr.mxu0 0.0
        %1986 = vmatpush1.msra.mxu0 0.0
        %1987 = vmatprep.subr.mxu0 0.0
        %1988 = vmatpush1.msra.mxu0 0.0
        %1989 = vmatprep.mubr.f32.mxu0 0.0
        %1990 = vmatmul.mubr.f32.gmra.mrb[0].mxu0 %v1923
        %v1991 = vpop.f32.mrb[0].mxu0
        %v1992 = vadd.f32 0.0, %v1991
        %v1993 = vpop.f32.mrb[0].mxu0
        %1994 = vdwg.mxu0
        %1996 = vrot.lane.b32.xlu0 %v1992, 7
        %v1997 = vpop.permute.xlu0 %1996
        %vm1999 = vcmask 177208
        %2000 = vst.msk [vmem:[#allocation4 + $0x8] sm:$0x3f] %vm1999, %v1997
        %v2001 = vld [vmem:[#allocation3 + $0x28] sm:$0x3f]
        %v2003 = vsel %vm1189, %v2001, 0
        %2005 = vmatprep.subr.mxu0 0.0
        %2006 = vmatpush1.msra.mxu0 %v1184
        %2007 = vmatprep.subr.mxu0 0.0
        %2008 = vmatpush1.msra.mxu0 %v1185
        %2009 = vmatprep.subr.mxu0 0.0
        %2010 = vmatpush1.msra.mxu0 %v1186
        %2011 = vmatprep.subr.mxu0 0.0
        %2012 = vmatpush1.msra.mxu0 %v1195
        %2013 = vmatprep.subr.mxu0 0.0
        %2014 = vmatpush1.msra.mxu0 0.0
        %2015 = vmatprep.subr.mxu0 0.0
        %2016 = vmatpush1.msra.mxu0 0.0
        %2017 = vmatprep.subr.mxu0 0.0
        %2018 = vmatpush1.msra.mxu0 0.0
        %2019 = vmatprep.subr.mxu0 0.0
        %2020 = vmatpush1.msra.mxu0 0.0
        %2021 = vmatprep.subr.mxu0 0.0
        %2022 = vmatpush1.msra.mxu0 0.0
        %2023 = vmatprep.subr.mxu0 0.0
        %2024 = vmatpush1.msra.mxu0 0.0
        %2025 = vmatprep.subr.mxu0 0.0
        %2026 = vmatpush1.msra.mxu0 0.0
        %2027 = vmatprep.subr.mxu0 0.0
        %2028 = vmatpush1.msra.mxu0 0.0
        %2029 = vmatprep.subr.mxu0 0.0
        %2030 = vmatpush1.msra.mxu0 0.0
        %2031 = vmatprep.subr.mxu0 0.0
        %2032 = vmatpush1.msra.mxu0 0.0
        %2033 = vmatprep.subr.mxu0 0.0
        %2034 = vmatpush1.msra.mxu0 0.0
        %2035 = vmatprep.subr.mxu0 0.0
        %2036 = vmatpush1.msra.mxu0 0.0
        %2037 = vmatprep.subr.mxu0 0.0
        %2038 = vmatpush1.msra.mxu0 0.0
        %2039 = vmatprep.subr.mxu0 0.0
        %2040 = vmatpush1.msra.mxu0 0.0
        %2041 = vmatprep.subr.mxu0 0.0
        %2042 = vmatpush1.msra.mxu0 0.0
        %2043 = vmatprep.subr.mxu0 0.0
        %2044 = vmatpush1.msra.mxu0 0.0
        %2045 = vmatprep.subr.mxu0 0.0
        %2046 = vmatpush1.msra.mxu0 0.0
        %2047 = vmatprep.subr.mxu0 0.0
        %2048 = vmatpush1.msra.mxu0 0.0
        %2049 = vmatprep.subr.mxu0 0.0
        %2050 = vmatpush1.msra.mxu0 0.0
        %2051 = vmatprep.subr.mxu0 0.0
        %2052 = vmatpush1.msra.mxu0 0.0
        %2053 = vmatprep.subr.mxu0 0.0
        %2054 = vmatpush1.msra.mxu0 0.0
        %2055 = vmatprep.subr.mxu0 0.0
        %2056 = vmatpush1.msra.mxu0 0.0
        %2057 = vmatprep.subr.mxu0 0.0
        %2058 = vmatpush1.msra.mxu0 0.0
        %2059 = vmatprep.subr.mxu0 0.0
        %2060 = vmatpush1.msra.mxu0 0.0
        %2061 = vmatprep.subr.mxu0 0.0
        %2062 = vmatpush1.msra.mxu0 0.0
        %2063 = vmatprep.subr.mxu0 0.0
        %2064 = vmatpush1.msra.mxu0 0.0
        %2065 = vmatprep.subr.mxu0 0.0
        %2066 = vmatpush1.msra.mxu0 0.0
        %2067 = vmatprep.subr.mxu0 0.0
        %2068 = vmatpush1.msra.mxu0 0.0
        %2069 = vmatprep.mubr.f32.mxu0 0.0
        %2070 = vmatmul.mubr.f32.gmra.mrb[0].mxu0 %v2003
        %v2071 = vpop.f32.mrb[0].mxu0
        %v2072 = vadd.f32 0.0, %v2071
        %v2073 = vpop.f32.mrb[0].mxu0
        %2074 = vdwg.mxu0
        %2076 = vrot.lane.b32.xlu0 %v2072, 22
        %v2077 = vpop.permute.xlu0 %2076
        %vm2079 = vcmask 300208
        %2080 = vst.msk [vmem:[#allocation4 + $0x8] sm:$0x3f] %vm2079, %v2077
        %v2081 = vld [vmem:[#allocation3 + $0x28] sm:$0x3f]
        %2083 = vrot.lane.b32.xlu0 %v2081, 64
        %v2084 = vpop.permute.xlu0 %2083
        %v2085 = vsel %vm1189, %v2084, 0
        %2087 = vmatprep.subr.mxu0 0.0
        %2088 = vmatpush1.msra.mxu0 %v1184
        %2089 = vmatprep.subr.mxu0 0.0
        %2090 = vmatpush1.msra.mxu0 %v1185
        %2091 = vmatprep.subr.mxu0 0.0
        %2092 = vmatpush1.msra.mxu0 %v1186
        %2093 = vmatprep.subr.mxu0 0.0
        %2094 = vmatpush1.msra.mxu0 %v1195
        %2095 = vmatprep.subr.mxu0 0.0
        %2096 = vmatpush1.msra.mxu0 0.0
        %2097 = vmatprep.subr.mxu0 0.0
        %2098 = vmatpush1.msra.mxu0 0.0
        %2099 = vmatprep.subr.mxu0 0.0
        %2100 = vmatpush1.msra.mxu0 0.0
        %2101 = vmatprep.subr.mxu0 0.0
        %2102 = vmatpush1.msra.mxu0 0.0
        %2103 = vmatprep.subr.mxu0 0.0
        %2104 = vmatpush1.msra.mxu0 0.0
        %2105 = vmatprep.subr.mxu0 0.0
        %2106 = vmatpush1.msra.mxu0 0.0
        %2107 = vmatprep.subr.mxu0 0.0
        %2108 = vmatpush1.msra.mxu0 0.0
        %2109 = vmatprep.subr.mxu0 0.0
        %2110 = vmatpush1.msra.mxu0 0.0
        %2111 = vmatprep.subr.mxu0 0.0
        %2112 = vmatpush1.msra.mxu0 0.0
        %2113 = vmatprep.subr.mxu0 0.0
        %2114 = vmatpush1.msra.mxu0 0.0
        %2115 = vmatprep.subr.mxu0 0.0
        %2116 = vmatpush1.msra.mxu0 0.0
        %2117 = vmatprep.subr.mxu0 0.0
        %2118 = vmatpush1.msra.mxu0 0.0
        %2119 = vmatprep.subr.mxu0 0.0
        %2120 = vmatpush1.msra.mxu0 0.0
        %2121 = vmatprep.subr.mxu0 0.0
        %2122 = vmatpush1.msra.mxu0 0.0
        %2123 = vmatprep.subr.mxu0 0.0
        %2124 = vmatpush1.msra.mxu0 0.0
        %2125 = vmatprep.subr.mxu0 0.0
        %2126 = vmatpush1.msra.mxu0 0.0
        %2127 = vmatprep.subr.mxu0 0.0
        %2128 = vmatpush1.msra.mxu0 0.0
        %2129 = vmatprep.subr.mxu0 0.0
        %2130 = vmatpush1.msra.mxu0 0.0
        %2131 = vmatprep.subr.mxu0 0.0
        %2132 = vmatpush1.msra.mxu0 0.0
        %2133 = vmatprep.subr.mxu0 0.0
        %2134 = vmatpush1.msra.mxu0 0.0
        %2135 = vmatprep.subr.mxu0 0.0
        %2136 = vmatpush1.msra.mxu0 0.0
        %2137 = vmatprep.subr.mxu0 0.0
        %2138 = vmatpush1.msra.mxu0 0.0
        %2139 = vmatprep.subr.mxu0 0.0
        %2140 = vmatpush1.msra.mxu0 0.0
        %2141 = vmatprep.subr.mxu0 0.0
        %2142 = vmatpush1.msra.mxu0 0.0
        %2143 = vmatprep.subr.mxu0 0.0
        %2144 = vmatpush1.msra.mxu0 0.0
        %2145 = vmatprep.subr.mxu0 0.0
        %2146 = vmatpush1.msra.mxu0 0.0
        %2147 = vmatprep.subr.mxu0 0.0
        %2148 = vmatpush1.msra.mxu0 0.0
        %2149 = vmatprep.subr.mxu0 0.0
        %2150 = vmatpush1.msra.mxu0 0.0
        %2151 = vmatprep.mubr.f32.mxu0 0.0
        %2152 = vmatmul.mubr.f32.gmra.mrb[0].mxu0 %v2085
        %v2153 = vpop.f32.mrb[0].mxu0
        %v2154 = vadd.f32 0.0, %v2153
        %v2155 = vpop.f32.mrb[0].mxu0
        %2156 = vdwg.mxu0
        %2158 = vrot.lane.b32.xlu0 %v2154, 37
        %v2159 = vpop.permute.xlu0 %2158
        %vm2161 = vcmask 423208
        %2162 = vst.msk [vmem:[#allocation4 + $0x8] sm:$0x3f] %vm2161, %v2159
        %v2163 = vld [vmem:[#allocation3 + $0x30] sm:$0x3f]
        %v2165 = vsel %vm1189, %v2163, 0
        %2167 = vmatprep.subr.mxu0 0.0
        %2168 = vmatpush1.msra.mxu0 %v1184
        %2169 = vmatprep.subr.mxu0 0.0
        %2170 = vmatpush1.msra.mxu0 %v1185
        %2171 = vmatprep.subr.mxu0 0.0
        %2172 = vmatpush1.msra.mxu0 %v1186
        %2173 = vmatprep.subr.mxu0 0.0
        %2174 = vmatpush1.msra.mxu0 %v1195
        %2175 = vmatprep.subr.mxu0 0.0
        %2176 = vmatpush1.msra.mxu0 0.0
        %2177 = vmatprep.subr.mxu0 0.0
        %2178 = vmatpush1.msra.mxu0 0.0
        %2179 = vmatprep.subr.mxu0 0.0
        %2180 = vmatpush1.msra.mxu0 0.0
        %2181 = vmatprep.subr.mxu0 0.0
        %2182 = vmatpush1.msra.mxu0 0.0
        %2183 = vmatprep.subr.mxu0 0.0
        %2184 = vmatpush1.msra.mxu0 0.0
        %2185 = vmatprep.subr.mxu0 0.0
        %2186 = vmatpush1.msra.mxu0 0.0
        %2187 = vmatprep.subr.mxu0 0.0
        %2188 = vmatpush1.msra.mxu0 0.0
        %2189 = vmatprep.subr.mxu0 0.0
        %2190 = vmatpush1.msra.mxu0 0.0
        %2191 = vmatprep.subr.mxu0 0.0
        %2192 = vmatpush1.msra.mxu0 0.0
        %2193 = vmatprep.subr.mxu0 0.0
        %2194 = vmatpush1.msra.mxu0 0.0
        %2195 = vmatprep.subr.mxu0 0.0
        %2196 = vmatpush1.msra.mxu0 0.0
        %2197 = vmatprep.subr.mxu0 0.0
        %2198 = vmatpush1.msra.mxu0 0.0
        %2199 = vmatprep.subr.mxu0 0.0
        %2200 = vmatpush1.msra.mxu0 0.0
        %2201 = vmatprep.subr.mxu0 0.0
        %2202 = vmatpush1.msra.mxu0 0.0
        %2203 = vmatprep.subr.mxu0 0.0
        %2204 = vmatpush1.msra.mxu0 0.0
        %2205 = vmatprep.subr.mxu0 0.0
        %2206 = vmatpush1.msra.mxu0 0.0
        %2207 = vmatprep.subr.mxu0 0.0
        %2208 = vmatpush1.msra.mxu0 0.0
        %2209 = vmatprep.subr.mxu0 0.0
        %2210 = vmatpush1.msra.mxu0 0.0
        %2211 = vmatprep.subr.mxu0 0.0
        %2212 = vmatpush1.msra.mxu0 0.0
        %2213 = vmatprep.subr.mxu0 0.0
        %2214 = vmatpush1.msra.mxu0 0.0
        %2215 = vmatprep.subr.mxu0 0.0
        %2216 = vmatpush1.msra.mxu0 0.0
        %2217 = vmatprep.subr.mxu0 0.0
        %2218 = vmatpush1.msra.mxu0 0.0
        %2219 = vmatprep.subr.mxu0 0.0
        %2220 = vmatpush1.msra.mxu0 0.0
        %2221 = vmatprep.subr.mxu0 0.0
        %2222 = vmatpush1.msra.mxu0 0.0
        %2223 = vmatprep.subr.mxu0 0.0
        %2224 = vmatpush1.msra.mxu0 0.0
        %2225 = vmatprep.subr.mxu0 0.0
        %2226 = vmatpush1.msra.mxu0 0.0
        %2227 = vmatprep.subr.mxu0 0.0
        %2228 = vmatpush1.msra.mxu0 0.0
        %2229 = vmatprep.subr.mxu0 0.0
        %2230 = vmatpush1.msra.mxu0 0.0
        %2231 = vmatprep.mubr.f32.mxu0 0.0
        %2232 = vmatmul.mubr.f32.gmra.mrb[0].mxu0 %v2165
        %v2233 = vpop.f32.mrb[0].mxu0
        %v2234 = vadd.f32 0.0, %v2233
        %v2235 = vpop.f32.mrb[0].mxu0
        %2236 = vdwg.mxu0
        %2238 = vrot.lane.b32.xlu0 %v2234, 52
        %v2239 = vpop.permute.xlu0 %2238
        %vm2241 = vcmask 546208
        %2242 = vst.msk [vmem:[#allocation4 + $0x8] sm:$0x3f] %vm2241, %v2239
        %v2243 = vld [vmem:[#allocation3 + $0x30] sm:$0x3f]
        %2245 = vrot.lane.b32.xlu0 %v2243, 64
        %v2246 = vpop.permute.xlu0 %2245
        %v2247 = vsel %vm1189, %v2246, 0
        %2249 = vmatprep.subr.mxu0 0.0
        %2250 = vmatpush1.msra.mxu0 %v1184
        %2251 = vmatprep.subr.mxu0 0.0
        %2252 = vmatpush1.msra.mxu0 %v1185
        %2253 = vmatprep.subr.mxu0 0.0
        %2254 = vmatpush1.msra.mxu0 %v1186
        %2255 = vmatprep.subr.mxu0 0.0
        %2256 = vmatpush1.msra.mxu0 %v1195
        %2257 = vmatprep.subr.mxu0 0.0
        %2258 = vmatpush1.msra.mxu0 0.0
        %2259 = vmatprep.subr.mxu0 0.0
        %2260 = vmatpush1.msra.mxu0 0.0
        %2261 = vmatprep.subr.mxu0 0.0
        %2262 = vmatpush1.msra.mxu0 0.0
        %2263 = vmatprep.subr.mxu0 0.0
        %2264 = vmatpush1.msra.mxu0 0.0
        %2265 = vmatprep.subr.mxu0 0.0
        %2266 = vmatpush1.msra.mxu0 0.0
        %2267 = vmatprep.subr.mxu0 0.0
        %2268 = vmatpush1.msra.mxu0 0.0
        %2269 = vmatprep.subr.mxu0 0.0
        %2270 = vmatpush1.msra.mxu0 0.0
        %2271 = vmatprep.subr.mxu0 0.0
        %2272 = vmatpush1.msra.mxu0 0.0
        %2273 = vmatprep.subr.mxu0 0.0
        %2274 = vmatpush1.msra.mxu0 0.0
        %2275 = vmatprep.subr.mxu0 0.0
        %2276 = vmatpush1.msra.mxu0 0.0
        %2277 = vmatprep.subr.mxu0 0.0
        %2278 = vmatpush1.msra.mxu0 0.0
        %2279 = vmatprep.subr.mxu0 0.0
        %2280 = vmatpush1.msra.mxu0 0.0
        %2281 = vmatprep.subr.mxu0 0.0
        %2282 = vmatpush1.msra.mxu0 0.0
        %2283 = vmatprep.subr.mxu0 0.0
        %2284 = vmatpush1.msra.mxu0 0.0
        %2285 = vmatprep.subr.mxu0 0.0
        %2286 = vmatpush1.msra.mxu0 0.0
        %2287 = vmatprep.subr.mxu0 0.0
        %2288 = vmatpush1.msra.mxu0 0.0
        %2289 = vmatprep.subr.mxu0 0.0
        %2290 = vmatpush1.msra.mxu0 0.0
        %2291 = vmatprep.subr.mxu0 0.0
        %2292 = vmatpush1.msra.mxu0 0.0
        %2293 = vmatprep.subr.mxu0 0.0
        %2294 = vmatpush1.msra.mxu0 0.0
        %2295 = vmatprep.subr.mxu0 0.0
        %2296 = vmatpush1.msra.mxu0 0.0
        %2297 = vmatprep.subr.mxu0 0.0
        %2298 = vmatpush1.msra.mxu0 0.0
        %2299 = vmatprep.subr.mxu0 0.0
        %2300 = vmatpush1.msra.mxu0 0.0
        %2301 = vmatprep.subr.mxu0 0.0
        %2302 = vmatpush1.msra.mxu0 0.0
        %2303 = vmatprep.subr.mxu0 0.0
        %2304 = vmatpush1.msra.mxu0 0.0
        %2305 = vmatprep.subr.mxu0 0.0
        %2306 = vmatpush1.msra.mxu0 0.0
        %2307 = vmatprep.subr.mxu0 0.0
        %2308 = vmatpush1.msra.mxu0 0.0
        %2309 = vmatprep.subr.mxu0 0.0
        %2310 = vmatpush1.msra.mxu0 0.0
        %2311 = vmatprep.subr.mxu0 0.0
        %2312 = vmatpush1.msra.mxu0 0.0
        %2313 = vmatprep.mubr.f32.mxu0 0.0
        %2314 = vmatmul.mubr.f32.gmra.mrb[0].mxu0 %v2247
        %v2315 = vpop.f32.mrb[0].mxu0
        %v2316 = vadd.f32 0.0, %v2315
        %v2317 = vpop.f32.mrb[0].mxu0
        %2318 = vdwg.mxu0
        %2320 = vrot.lane.b32.xlu0 %v2316, 67
        %v2321 = vpop.permute.xlu0 %2320
        %vm2323 = vcmask 669208
        %2324 = vst.msk [vmem:[#allocation4 + $0x8] sm:$0x3f] %vm2323, %v2321
        %v2325 = vld [vmem:[#allocation3 + $0x38] sm:$0x3f]
        %v2327 = vsel %vm1189, %v2325, 0
        %2329 = vmatprep.subr.mxu0 0.0
        %2330 = vmatpush1.msra.mxu0 %v1184
        %2331 = vmatprep.subr.mxu0 0.0
        %2332 = vmatpush1.msra.mxu0 %v1185
        %2333 = vmatprep.subr.mxu0 0.0
        %2334 = vmatpush1.msra.mxu0 %v1186
        %2335 = vmatprep.subr.mxu0 0.0
        %2336 = vmatpush1.msra.mxu0 %v1195
        %2337 = vmatprep.subr.mxu0 0.0
        %2338 = vmatpush1.msra.mxu0 0.0
        %2339 = vmatprep.subr.mxu0 0.0
        %2340 = vmatpush1.msra.mxu0 0.0
        %2341 = vmatprep.subr.mxu0 0.0
        %2342 = vmatpush1.msra.mxu0 0.0
        %2343 = vmatprep.subr.mxu0 0.0
        %2344 = vmatpush1.msra.mxu0 0.0
        %2345 = vmatprep.subr.mxu0 0.0
        %2346 = vmatpush1.msra.mxu0 0.0
        %2347 = vmatprep.subr.mxu0 0.0
        %2348 = vmatpush1.msra.mxu0 0.0
        %2349 = vmatprep.subr.mxu0 0.0
        %2350 = vmatpush1.msra.mxu0 0.0
        %2351 = vmatprep.subr.mxu0 0.0
        %2352 = vmatpush1.msra.mxu0 0.0
        %2353 = vmatprep.subr.mxu0 0.0
        %2354 = vmatpush1.msra.mxu0 0.0
        %2355 = vmatprep.subr.mxu0 0.0
        %2356 = vmatpush1.msra.mxu0 0.0
        %2357 = vmatprep.subr.mxu0 0.0
        %2358 = vmatpush1.msra.mxu0 0.0
        %2359 = vmatprep.subr.mxu0 0.0
        %2360 = vmatpush1.msra.mxu0 0.0
        %2361 = vmatprep.subr.mxu0 0.0
        %2362 = vmatpush1.msra.mxu0 0.0
        %2363 = vmatprep.subr.mxu0 0.0
        %2364 = vmatpush1.msra.mxu0 0.0
        %2365 = vmatprep.subr.mxu0 0.0
        %2366 = vmatpush1.msra.mxu0 0.0
        %2367 = vmatprep.subr.mxu0 0.0
        %2368 = vmatpush1.msra.mxu0 0.0
        %2369 = vmatprep.subr.mxu0 0.0
        %2370 = vmatpush1.msra.mxu0 0.0
        %2371 = vmatprep.subr.mxu0 0.0
        %2372 = vmatpush1.msra.mxu0 0.0
        %2373 = vmatprep.subr.mxu0 0.0
        %2374 = vmatpush1.msra.mxu0 0.0
        %2375 = vmatprep.subr.mxu0 0.0
        %2376 = vmatpush1.msra.mxu0 0.0
        %2377 = vmatprep.subr.mxu0 0.0
        %2378 = vmatpush1.msra.mxu0 0.0
        %2379 = vmatprep.subr.mxu0 0.0
        %2380 = vmatpush1.msra.mxu0 0.0
        %2381 = vmatprep.subr.mxu0 0.0
        %2382 = vmatpush1.msra.mxu0 0.0
        %2383 = vmatprep.subr.mxu0 0.0
        %2384 = vmatpush1.msra.mxu0 0.0
        %2385 = vmatprep.subr.mxu0 0.0
        %2386 = vmatpush1.msra.mxu0 0.0
        %2387 = vmatprep.subr.mxu0 0.0
        %2388 = vmatpush1.msra.mxu0 0.0
        %2389 = vmatprep.subr.mxu0 0.0
        %2390 = vmatpush1.msra.mxu0 0.0
        %2391 = vmatprep.subr.mxu0 0.0
        %2392 = vmatpush1.msra.mxu0 0.0
        %2393 = vmatprep.mubr.f32.mxu0 0.0
        %2394 = vmatmul.mubr.f32.gmra.mrb[0].mxu0 %v2327
        %v2395 = vpop.f32.mrb[0].mxu0
        %v2396 = vadd.f32 0.0, %v2395
        %v2397 = vpop.f32.mrb[0].mxu0
        %2398 = vdwg.mxu0
        %2400 = vrot.lane.b32.xlu0 %v2396, 82
        %v2401 = vpop.permute.xlu0 %2400
        %vm2403 = vcmask 792208
        %2404 = vst.msk [vmem:[#allocation4 + $0x8] sm:$0x3f] %vm2403, %v2401
        %v2405 = vld [vmem:[#allocation4] sm:$0x3f]
        %v2406 = vld [vmem:[#allocation4 + $0x8] sm:$0x3f]
        %2407 = vst [vmem:[#allocation5] sm:$0x3f] %v2405
        %vm2408 = vcmask 791552
        %2409 = vst.msk [vmem:[#allocation5 + $0x8] sm:$0x3f] %vm2408, %v2406
        %2410 = vst [vmem:[#allocation5] sm:$0xc0] 0.0
        %vm2411 = vcmask 793606
        %2412 = vst.msk [vmem:[#allocation5 + $0x8] sm:$0xc0] %vm2411, 0.0
        %v2413 = vld [vmem:[#allocation4] sm:$0x3f]
        %v2414 = vld [vmem:[#allocation4 + $0x8] sm:$0x3f]
        %2417 = vrot.lane.b32.xlu0 %v2413, 127
        %v2418 = vpop.permute.xlu0 %2417
        %2419 = vrot.lane.b32.xlu0 %v2414, 127
        %v2420 = vpop.permute.xlu0 %2419
        %v2421 = vsel %vm535, %v2418, %v2420
        %2424 = vst [vmem:[#allocation5 + $0x10] sm:$0x3f] %v2421
        %2425 = vst.msk [vmem:[#allocation5 + $0x18] sm:$0x3f] %vm2408, %v2420
        %2426 = vst [vmem:[#allocation5 + $0x10] sm:$0xc0] 0.0
        %2427 = vst.msk [vmem:[#allocation5 + $0x18] sm:$0xc0] %vm2411, 0.0
        %v2428 = vld [vmem:[#allocation4] sm:$0x3f]
        %v2429 = vld [vmem:[#allocation4 + $0x8] sm:$0x3f]
        %2432 = vrot.lane.b32.xlu0 %v2428, 126
        %v2433 = vpop.permute.xlu0 %2432
        %2434 = vrot.lane.b32.xlu0 %v2429, 126
        %v2435 = vpop.permute.xlu0 %2434
        %v2436 = vsel %vm595, %v2433, %v2435
        %2439 = vst [vmem:[#allocation5 + $0x20] sm:$0x3f] %v2436
        %2440 = vst.msk [vmem:[#allocation5 + $0x28] sm:$0x3f] %vm2408, %v2435
        %2441 = vst [vmem:[#allocation5 + $0x20] sm:$0xc0] 0.0
        %2442 = vst.msk [vmem:[#allocation5 + $0x28] sm:$0xc0] %vm2411, 0.0
        %v2443 = vld [vmem:[#allocation4] sm:$0x3f]
        %v2444 = vld [vmem:[#allocation4 + $0x8] sm:$0x3f]
        %2447 = vrot.lane.b32.xlu0 %v2443, 113
        %v2448 = vpop.permute.xlu0 %2447
        %2449 = vrot.lane.b32.xlu0 %v2444, 113
        %v2450 = vpop.permute.xlu0 %2449
        %vm2451 = vcmask 924672
        %v2452 = vsel %vm2451, %v2448, %v2450
        %2455 = vst [vmem:[#allocation5 + $0x30] sm:$0x3f] %v2452
        %2456 = vst.msk [vmem:[#allocation5 + $0x38] sm:$0x3f] %vm2408, %v2450
        %2457 = vst [vmem:[#allocation5 + $0x30] sm:$0xc0] 0.0
        %2458 = vst.msk [vmem:[#allocation5 + $0x38] sm:$0xc0] %vm2411, 0.0
        %v2459 = vld [vmem:[#allocation4] sm:$0x3f]
        %v2460 = vld [vmem:[#allocation4 + $0x8] sm:$0x3f]
        %2463 = vrot.lane.b32.xlu0 %v2459, 112
        %v2464 = vpop.permute.xlu0 %2463
        %2465 = vrot.lane.b32.xlu0 %v2460, 112
        %v2466 = vpop.permute.xlu0 %2465
        %vm2467 = vcmask 916480
        %v2468 = vsel %vm2467, %v2464, %v2466
        %2471 = vst [vmem:[#allocation5 + $0x40] sm:$0x3f] %v2468
        %2472 = vst.msk [vmem:[#allocation5 + $0x48] sm:$0x3f] %vm2408, %v2466
        %2473 = vst [vmem:[#allocation5 + $0x40] sm:$0xc0] 0.0
        %2474 = vst.msk [vmem:[#allocation5 + $0x48] sm:$0xc0] %vm2411, 0.0
        %v2475 = vld [vmem:[#allocation4] sm:$0x3f]
        %v2476 = vld [vmem:[#allocation4 + $0x8] sm:$0x3f]
        %2479 = vrot.lane.b32.xlu0 %v2475, 111
        %v2480 = vpop.permute.xlu0 %2479
        %2481 = vrot.lane.b32.xlu0 %v2476, 111
        %v2482 = vpop.permute.xlu0 %2481
        %vm2483 = vcmask 908288
        %v2484 = vsel %vm2483, %v2480, %v2482
        %2487 = vst [vmem:[#allocation5 + $0x50] sm:$0x3f] %v2484
        %2488 = vst.msk [vmem:[#allocation5 + $0x58] sm:$0x3f] %vm2408, %v2482
        %2489 = vst [vmem:[#allocation5 + $0x50] sm:$0xc0] 0.0
        %2490 = vst.msk [vmem:[#allocation5 + $0x58] sm:$0xc0] %vm2411, 0.0
        %v2491 = vld [vmem:[#allocation4] sm:$0x3f]
        %v2492 = vld [vmem:[#allocation4 + $0x8] sm:$0x3f]
        %2495 = vrot.lane.b32.xlu0 %v2491, 98
        %v2496 = vpop.permute.xlu0 %2495
        %2497 = vrot.lane.b32.xlu0 %v2492, 98
        %v2498 = vpop.permute.xlu0 %2497
        %vm2499 = vcmask 801792
        %v2500 = vsel %vm2499, %v2496, %v2498
        %2503 = vst [vmem:[#allocation5 + $0x60] sm:$0x3f] %v2500
        %2504 = vst.msk [vmem:[#allocation5 + $0x68] sm:$0x3f] %vm2408, %v2498
        %2505 = vst [vmem:[#allocation5 + $0x60] sm:$0xc0] 0.0
        %2506 = vst.msk [vmem:[#allocation5 + $0x68] sm:$0xc0] %vm2411, 0.0
        %v2507 = vld [vmem:[#allocation4] sm:$0x3f]
        %v2508 = vld [vmem:[#allocation4 + $0x8] sm:$0x3f]
        %2511 = vrot.lane.b32.xlu0 %v2507, 97
        %v2512 = vpop.permute.xlu0 %2511
        %2513 = vrot.lane.b32.xlu0 %v2508, 97
        %v2514 = vpop.permute.xlu0 %2513
        %vm2515 = vcmask 793600
        %v2516 = vsel %vm2515, %v2512, %v2514
        %2519 = vst [vmem:[#allocation5 + $0x70] sm:$0x3f] %v2516
        %2520 = vst.msk [vmem:[#allocation5 + $0x78] sm:$0x3f] %vm2408, %v2514
        %2521 = vst [vmem:[#allocation5 + $0x70] sm:$0xc0] 0.0
        %2522 = vst.msk [vmem:[#allocation5 + $0x78] sm:$0xc0] %vm2411, 0.0
        %v2523 = vld [vmem:[#allocation4] sm:$0x3f]
        %v2524 = vld [vmem:[#allocation4 + $0x8] sm:$0x3f]
        %v2525 = vld [vmem:[#allocation4 + $0x10] sm:$0x3f]
        %2529 = vrot.lane.b32.xlu0 %v2523, 96
        %v2530 = vpop.permute.xlu0 %2529
        %2531 = vrot.lane.b32.xlu0 %v2524, 96
        %v2532 = vpop.permute.xlu0 %2531
        %2533 = vrot.lane.b32.xlu0 %v2525, 96
        %v2534 = vpop.permute.xlu0 %2533
        %v2535 = vsel %vm655, %v2530, %v2532
        %v2536 = vsel %vm655, %v2532, %v2534
        %2539 = vst [vmem:[#allocation5 + $0x80] sm:$0x3f] %v2535
        %2540 = vst.msk [vmem:[#allocation5 + $0x88] sm:$0x3f] %vm2408, %v2536
        %2541 = vst [vmem:[#allocation5 + $0x80] sm:$0xc0] 0.0
        %2542 = vst.msk [vmem:[#allocation5 + $0x88] sm:$0xc0] %vm2411, 0.0
        %v2543 = vld [vmem:[%s3] sm:$0xff]
        %v2544 = vld [vmem:[%s3 + $0x8] sm:$0xff]
        %v2545 = vld [vmem:[#allocation5] sm:$0xff]
        %v2546 = vld [vmem:[#allocation5 + $0x8] sm:$0xff]
        %v2547 = vld [vmem:[#allocation5 + $0x10] sm:$0xff]
        %v2548 = vld [vmem:[#allocation5 + $0x18] sm:$0xff]
        %v2549 = vld [vmem:[#allocation5 + $0x20] sm:$0xff]
        %v2550 = vld [vmem:[#allocation5 + $0x28] sm:$0xff]
        %v2551 = vld [vmem:[#allocation5 + $0x30] sm:$0xff]
        %v2552 = vld [vmem:[#allocation5 + $0x38] sm:$0xff]
        %v2553 = vld [vmem:[#allocation5 + $0x40] sm:$0xff]
        %v2554 = vld [vmem:[#allocation5 + $0x48] sm:$0xff]
        %v2555 = vld [vmem:[#allocation5 + $0x50] sm:$0xff]
        %v2556 = vld [vmem:[#allocation5 + $0x58] sm:$0xff]
        %v2557 = vld [vmem:[#allocation5 + $0x60] sm:$0xff]
        %v2558 = vld [vmem:[#allocation5 + $0x68] sm:$0xff]
        %v2559 = vld [vmem:[#allocation5 + $0x70] sm:$0xff]
        %v2560 = vld [vmem:[#allocation5 + $0x78] sm:$0xff]
        %v2561 = vld [vmem:[#allocation5 + $0x80] sm:$0xff]
        %v2562 = vld [vmem:[#allocation5 + $0x88] sm:$0xff]
        %v2563 = vld [vmem:[%s4] sm:$0xff]
        %v2564 = vld [vmem:[%s4 + $0x8] sm:$0xff]
        %2566 = vset.pattern.permute.xlu0 0
        %2567 = vperm.xlu0 %2566, %v2563
        %v2568 = vpop.permute.xlu0 %2567
        %2571 = vset.pattern.permute.xlu0 0
        %2572 = vperm.xlu0 %2571, %v2564
        %v2573 = vpop.permute.xlu0 %2572
        %vm2575 = vcmask 588800
        %v2577 = vsel %vm2575, %v2543, 0
        %v2580 = vsel %vm2575, %v2544, 0
        %2582 = vmatprep.subr.mxu0 %v2546
        %2583 = vmatpush1.msra.mxu0 %v2545
        %2584 = vmatprep.subr.mxu0 %v2548
        %2585 = vmatpush1.msra.mxu0 %v2547
        %2586 = vmatprep.subr.mxu0 %v2550
        %2587 = vmatpush1.msra.mxu0 %v2549
        %2588 = vmatprep.subr.mxu0 %v2552
        %2589 = vmatpush1.msra.mxu0 %v2551
        %2590 = vmatprep.subr.mxu0 %v2554
        %2591 = vmatpush1.msra.mxu0 %v2553
        %2592 = vmatprep.subr.mxu0 %v2556
        %2593 = vmatpush1.msra.mxu0 %v2555
        %2594 = vmatprep.subr.mxu0 %v2558
        %2595 = vmatpush1.msra.mxu0 %v2557
        %2596 = vmatprep.subr.mxu0 %v2560
        %2597 = vmatpush1.msra.mxu0 %v2559
        %2598 = vmatprep.subr.mxu0 %v2562
        %2599 = vmatpush1.msra.mxu0 %v2561
        %2600 = vmatprep.subr.mxu0 0.0
        %2601 = vmatpush1.msra.mxu0 0.0
        %2602 = vmatprep.subr.mxu0 0.0
        %2603 = vmatpush1.msra.mxu0 0.0
        %2604 = vmatprep.subr.mxu0 0.0
        %2605 = vmatpush1.msra.mxu0 0.0
        %2606 = vmatprep.subr.mxu0 0.0
        %2607 = vmatpush1.msra.mxu0 0.0
        %2608 = vmatprep.subr.mxu0 0.0
        %2609 = vmatpush1.msra.mxu0 0.0
        %2610 = vmatprep.subr.mxu0 0.0
        %2611 = vmatpush1.msra.mxu0 0.0
        %2612 = vmatprep.subr.mxu0 0.0
        %2613 = vmatpush1.msra.mxu0 0.0
        %2614 = vmatprep.subr.mxu0 0.0
        %2615 = vmatpush1.msra.mxu0 0.0
        %2616 = vmatprep.subr.mxu0 0.0
        %2617 = vmatpush1.msra.mxu0 0.0
        %2618 = vmatprep.subr.mxu0 0.0
        %2619 = vmatpush1.msra.mxu0 0.0
        %2620 = vmatprep.subr.mxu0 0.0
        %2621 = vmatpush1.msra.mxu0 0.0
        %2622 = vmatprep.subr.mxu0 0.0
        %2623 = vmatpush1.msra.mxu0 0.0
        %2624 = vmatprep.subr.mxu0 0.0
        %2625 = vmatpush1.msra.mxu0 0.0
        %2626 = vmatprep.subr.mxu0 0.0
        %2627 = vmatpush1.msra.mxu0 0.0
        %2628 = vmatprep.subr.mxu0 0.0
        %2629 = vmatpush1.msra.mxu0 0.0
        %2630 = vmatprep.subr.mxu0 0.0
        %2631 = vmatpush1.msra.mxu0 0.0
        %2632 = vmatprep.subr.mxu0 0.0
        %2633 = vmatpush1.msra.mxu0 0.0
        %2634 = vmatprep.subr.mxu0 0.0
        %2635 = vmatpush1.msra.mxu0 0.0
        %2636 = vmatprep.subr.mxu0 0.0
        %2637 = vmatpush1.msra.mxu0 0.0
        %2638 = vmatprep.subr.mxu0 0.0
        %2639 = vmatpush1.msra.mxu0 0.0
        %2640 = vmatprep.subr.mxu0 0.0
        %2641 = vmatpush1.msra.mxu0 0.0
        %2642 = vmatprep.subr.mxu0 0.0
        %2643 = vmatpush1.msra.mxu0 0.0
        %2644 = vmatprep.subr.mxu0 0.0
        %2645 = vmatpush1.msra.mxu0 0.0
        %2646 = vmatprep.mubr.f32.mxu0 0.0
        %2647 = vmatmul.mubr.f32.gmra.mrb[0].mxu0 %v2577
        %v2648 = vpop.f32.mrb[0].mxu0
        %v2649 = vadd.f32 %v2568, %v2648
        %v2650 = vpop.f32.mrb[0].mxu0
        %v2651 = vadd.f32 %v2568, %v2650
        %2652 = vmatprep.mubr.f32.mxu0 0.0
        %2653 = vmatmul.mubr.f32.gmra.mrb[0].mxu0 %v2580
        %v2654 = vpop.f32.mrb[0].mxu0
        %v2655 = vadd.f32 %v2573, %v2654
        %v2656 = vpop.f32.mrb[0].mxu0
        %v2657 = vadd.f32 %v2573, %v2656
        %2658 = vdwg.mxu0
        %v2659 = vmax.f32 %v2649, 0.0
        %v2660 = vmax.f32 %v2651, 0.0
        %v2661 = vmax.f32 %v2655, 0.0
        %v2662 = vmax.f32 %v2657, 0.0
        %2663 = vst [vmem:[#allocation6] sm:$0xff] %v2659
        %2664 = vst.msk [vmem:[#allocation6 + $0x8] sm:$0xff] %vm2515, %v2660
        %2665 = vst [vmem:[#allocation6 + $0x10] sm:$0xff] %v2661
        %2666 = vst.msk [vmem:[#allocation6 + $0x18] sm:$0xff] %vm2515, %v2662
        %v2667 = vld [vmem:[#allocation6] sm:$0xff]
        %v2668 = vld [vmem:[#allocation6 + $0x8] sm:$0xff]
        %v2669 = vld [vmem:[#allocation6 + $0x10] sm:$0xff]
        %v2670 = vld [vmem:[#allocation6 + $0x18] sm:$0xff]
        %2675 = vrot.lane.b32.xlu0 %v2667, 127
        %v2676 = vpop.permute.xlu0 %2675
        %2677 = vrot.lane.b32.xlu0 %v2668, 127
        %v2678 = vpop.permute.xlu0 %2677
        %2679 = vrot.lane.b32.xlu0 %v2669, 127
        %v2680 = vpop.permute.xlu0 %2679
        %2681 = vrot.lane.b32.xlu0 %v2670, 127
        %v2682 = vpop.permute.xlu0 %2681
        %v2683 = vsel %vm535, %v2676, %v2678
        %v2684 = vsel %vm535, %v2680, %v2682
        %v2689 = vmax.f32 %v2667, %v2683
        %v2690 = vmax.f32 %v2668, %v2678
        %v2691 = vmax.f32 %v2669, %v2684
        %v2692 = vmax.f32 %v2670, %v2682
        %2697 = vrot.lane.b32.xlu0 %v2689, 113
        %v2698 = vpop.permute.xlu0 %2697
        %2699 = vrot.lane.b32.xlu0 %v2690, 113
        %v2700 = vpop.permute.xlu0 %2699
        %2701 = vrot.lane.b32.xlu0 %v2691, 113
        %v2702 = vpop.permute.xlu0 %2701
        %2703 = vrot.lane.b32.xlu0 %v2692, 113
        %v2704 = vpop.permute.xlu0 %2703
        %v2705 = vsel %vm2451, %v2698, %v2700
        %v2706 = vsel %vm2451, %v2702, %v2704
        %v2711 = vmax.f32 %v2689, %v2705
        %v2712 = vmax.f32 %v2690, %v2700
        %v2713 = vmax.f32 %v2691, %v2706
        %v2714 = vmax.f32 %v2692, %v2704
        %v2715 = vld [vmem:[%s6] sm:$0xff]
        %v2716 = vld [vmem:[%s6 + $0x8] sm:$0xff]
        %v2717 = vld [vmem:[%s6 + $0x10] sm:$0xff]
        %v2718 = vld [vmem:[%s6 + $0x18] sm:$0xff]
        %v2719 = vld [vmem:[%s6 + $0x20] sm:$0xff]
        %v2720 = vld [vmem:[%s6 + $0x28] sm:$0xff]
        %v2721 = vld [vmem:[%s6 + $0x30] sm:$0xff]
        %v2722 = vld [vmem:[%s6 + $0x38] sm:$0xff]
        %v2723 = vld [vmem:[%s6 + $0x40] sm:$0xff]
        %v2724 = vld [vmem:[%s6 + $0x48] sm:$0xff]
        %v2725 = vld [vmem:[%s6 + $0x50] sm:$0xff]
        %v2726 = vld [vmem:[%s6 + $0x58] sm:$0xff]
        %v2727 = vld [vmem:[%s6 + $0x60] sm:$0xff]
        %v2728 = vld [vmem:[%s6 + $0x68] sm:$0xff]
        %v2729 = vld [vmem:[%s6 + $0x70] sm:$0xff]
        %v2730 = vld [vmem:[%s6 + $0x78] sm:$0xff]
        %v2731 = vld [vmem:[%s6 + $0x80] sm:$0xff]
        %v2732 = vld [vmem:[%s6 + $0x88] sm:$0xff]
        %v2733 = vld [vmem:[%s6 + $0x90] sm:$0xff]
        %v2734 = vld [vmem:[%s6 + $0x98] sm:$0xff]
        %v2735 = vld [vmem:[%s6 + $0xa0] sm:$0x1]
        %vm2736 = vcmask 269312
        %v2738 = vsel %vm2736, %v2712, 0
        %v2741 = vsel %vm2736, %v2714, 0
        %vm2743 = vcmask 1040384
        %v2745 = vsel %vm2743, %v2735, 0
        %2747 = vmatprep.subr.mxu0 0.0
        %2748 = vmatpush1.msra.mxu0 %v2715
        %2749 = vmatprep.subr.mxu0 0.0
        %2750 = vmatpush1.msra.mxu0 %v2716
        %2751 = vmatprep.subr.mxu0 0.0
        %2752 = vmatpush1.msra.mxu0 %v2717
        %2753 = vmatprep.subr.mxu0 0.0
        %2754 = vmatpush1.msra.mxu0 %v2718
        %2755 = vmatprep.subr.mxu0 0.0
        %2756 = vmatpush1.msra.mxu0 %v2719
        %2757 = vmatprep.subr.mxu0 0.0
        %2758 = vmatpush1.msra.mxu0 %v2720
        %2759 = vmatprep.subr.mxu0 0.0
        %2760 = vmatpush1.msra.mxu0 %v2721
        %2761 = vmatprep.subr.mxu0 0.0
        %2762 = vmatpush1.msra.mxu0 %v2722
        %2763 = vmatprep.subr.mxu0 0.0
        %2764 = vmatpush1.msra.mxu0 %v2723
        %2765 = vmatprep.subr.mxu0 0.0
        %2766 = vmatpush1.msra.mxu0 %v2724
        %2767 = vmatprep.subr.mxu0 0.0
        %2768 = vmatpush1.msra.mxu0 %v2725
        %2769 = vmatprep.subr.mxu0 0.0
        %2770 = vmatpush1.msra.mxu0 %v2726
        %2771 = vmatprep.subr.mxu0 0.0
        %2772 = vmatpush1.msra.mxu0 %v2727
        %2773 = vmatprep.subr.mxu0 0.0
        %2774 = vmatpush1.msra.mxu0 %v2728
        %2775 = vmatprep.subr.mxu0 0.0
        %2776 = vmatpush1.msra.mxu0 %v2729
        %2777 = vmatprep.subr.mxu0 0.0
        %2778 = vmatpush1.msra.mxu0 %v2730
        %2779 = vmatprep.subr.mxu0 0.0
        %2780 = vmatpush1.msra.mxu0 %v2731
        %2781 = vmatprep.subr.mxu0 0.0
        %2782 = vmatpush1.msra.mxu0 %v2732
        %2783 = vmatprep.subr.mxu0 0.0
        %2784 = vmatpush1.msra.mxu0 %v2733
        %2785 = vmatprep.subr.mxu0 0.0
        %2786 = vmatpush1.msra.mxu0 %v2734
        %2787 = vmatprep.subr.mxu0 0.0
        %2788 = vmatpush1.msra.mxu0 %v2745
        %2789 = vmatprep.subr.mxu0 0.0
        %2790 = vmatpush1.msra.mxu0 0.0
        %2791 = vmatprep.subr.mxu0 0.0
        %2792 = vmatpush1.msra.mxu0 0.0
        %2793 = vmatprep.subr.mxu0 0.0
        %2794 = vmatpush1.msra.mxu0 0.0
        %2795 = vmatprep.subr.mxu0 0.0
        %2796 = vmatpush1.msra.mxu0 0.0
        %2797 = vmatprep.subr.mxu0 0.0
        %2798 = vmatpush1.msra.mxu0 0.0
        %2799 = vmatprep.subr.mxu0 0.0
        %2800 = vmatpush1.msra.mxu0 0.0
        %2801 = vmatprep.subr.mxu0 0.0
        %2802 = vmatpush1.msra.mxu0 0.0
        %2803 = vmatprep.subr.mxu0 0.0
        %2804 = vmatpush1.msra.mxu0 0.0
        %2805 = vmatprep.subr.mxu0 0.0
        %2806 = vmatpush1.msra.mxu0 0.0
        %2807 = vmatprep.subr.mxu0 0.0
        %2808 = vmatpush1.msra.mxu0 0.0
        %2809 = vmatprep.subr.mxu0 0.0
        %2810 = vmatpush1.msra.mxu0 0.0
        %2811 = vmatprep.mubr.f32.mxu0 %v2738
        %2812 = vmatmul.mubr.f32.gmra.mrb[0].mxu0 %v2711
        %v2813 = vpop.f32.mrb[0].mxu0
        %v2814 = vadd.f32 0.0, %v2813
        %v2815 = vpop.f32.mrb[0].mxu0
        %2816 = vmatprep.mubr.f32.mxu0 %v2741
        %2817 = vmatmul.mubr.f32.gmra.mrb[0].mxu0 %v2713
        %v2818 = vpop.f32.mrb[0].mxu0
        %v2819 = vadd.f32 0.0, %v2818
        %v2820 = vpop.f32.mrb[0].mxu0
        %2821 = vdwg.mxu0
        %v2822 = vlaneseq
        %v2823 = vshrl.u32 %v2822, 7
        %v2824 = vadd.s32 %v2823, 8
        %vm2825 = vcmp.eq.s32.totalorder %v2823, 0
        %vm2826 = vcmp.eq.s32.totalorder %v2824, 0
        %v2827 = vsel %vm2825, %v2814, 0.0
        %v2828 = vsel %vm2826, %v2819, 0.0
        %vm2829 = vcmask 326656
        %2830 = vst.msk [vmem:[#allocation7] sm:$0xff] %vm2829, %v2827
        %2831 = vst.msk [vmem:[#allocation7 + $0x28] sm:$0xff] %vm2829, %v2828
        %vm2832 = vcmp.eq.s32.totalorder %v2823, 1
        %vm2833 = vcmp.eq.s32.totalorder %v2824, 1
        %v2834 = vsel %vm2832, %v2814, 0.0
        %v2835 = vsel %vm2833, %v2819, 0.0
        %2838 = vrot.lane.b32.xlu0 %v2834, 40
        %v2839 = vpop.permute.xlu0 %2838
        %2840 = vrot.lane.b32.xlu0 %v2835, 40
        %v2841 = vpop.permute.xlu0 %2840
        %vm2844 = vcmask 654656
        %2845 = vst.msk [vmem:[#allocation7] sm:$0xff] %vm2844, %v2839
        %2846 = vst.msk [vmem:[#allocation7 + $0x28] sm:$0xff] %vm2844, %v2841
        %vm2847 = vcmp.eq.s32.totalorder %v2823, 2
        %vm2848 = vcmp.eq.s32.totalorder %v2824, 2
        %v2849 = vsel %vm2847, %v2814, 0.0
        %v2850 = vsel %vm2848, %v2819, 0.0
        %2853 = vrot.lane.b32.xlu0 %v2849, 80
        %v2854 = vpop.permute.xlu0 %2853
        %2855 = vrot.lane.b32.xlu0 %v2850, 80
        %v2856 = vpop.permute.xlu0 %2855
        %vm2859 = vcmask 982656
        %2860 = vst.msk [vmem:[#allocation7] sm:$0xff] %vm2859, %v2854
        %2861 = vst.msk [vmem:[#allocation7 + $0x28] sm:$0xff] %vm2859, %v2856
        %vm2862 = vcmp.eq.s32.totalorder %v2823, 3
        %vm2863 = vcmp.eq.s32.totalorder %v2824, 3
        %v2864 = vsel %vm2862, %v2814, 0.0
        %v2865 = vsel %vm2863, %v2819, 0.0
        %2868 = vrot.lane.b32.xlu0 %v2864, 120
        %v2869 = vpop.permute.xlu0 %2868
        %2870 = vrot.lane.b32.xlu0 %v2865, 120
        %v2871 = vpop.permute.xlu0 %2870
        %vm2874 = vcmask 1048512
        %2875 = vst.msk [vmem:[#allocation7] sm:$0xff] %vm2874, %v2869
        %vm2876 = vcmask 261120
        %2877 = vst.msk [vmem:[#allocation7 + $0x8] sm:$0xff] %vm2876, %v2869
        %2878 = vst.msk [vmem:[#allocation7 + $0x28] sm:$0xff] %vm2874, %v2871
        %2879 = vst.msk [vmem:[#allocation7 + $0x30] sm:$0xff] %vm2876, %v2871
        %vm2880 = vcmp.eq.s32.totalorder %v2823, 4
        %vm2881 = vcmp.eq.s32.totalorder %v2824, 4
        %v2882 = vsel %vm2880, %v2814, 0.0
        %v2883 = vsel %vm2881, %v2819, 0.0
        %2886 = vrot.lane.b32.xlu0 %v2882, 32
        %v2887 = vpop.permute.xlu0 %2886
        %2888 = vrot.lane.b32.xlu0 %v2883, 32
        %v2889 = vpop.permute.xlu0 %2888
        %vm2892 = vcmask 589056
        %2893 = vst.msk [vmem:[#allocation7 + $0x8] sm:$0xff] %vm2892, %v2887
        %2894 = vst.msk [vmem:[#allocation7 + $0x30] sm:$0xff] %vm2892, %v2889
        %vm2895 = vcmp.eq.s32.totalorder %v2823, 5
        %vm2896 = vcmp.eq.s32.totalorder %v2824, 5
        %v2897 = vsel %vm2895, %v2814, 0.0
        %v2898 = vsel %vm2896, %v2819, 0.0
        %2901 = vrot.lane.b32.xlu0 %v2897, 72
        %v2902 = vpop.permute.xlu0 %2901
        %2903 = vrot.lane.b32.xlu0 %v2898, 72
        %v2904 = vpop.permute.xlu0 %2903
        %vm2907 = vcmask 917056
        %2908 = vst.msk [vmem:[#allocation7 + $0x8] sm:$0xff] %vm2907, %v2902
        %2909 = vst.msk [vmem:[#allocation7 + $0x30] sm:$0xff] %vm2907, %v2904
        %vm2910 = vcmp.eq.s32.totalorder %v2823, 6
        %vm2911 = vcmp.eq.s32.totalorder %v2824, 6
        %v2912 = vsel %vm2910, %v2814, 0.0
        %v2913 = vsel %vm2911, %v2819, 0.0
        %2916 = vrot.lane.b32.xlu0 %v2912, 112
        %v2917 = vpop.permute.xlu0 %2916
        %2918 = vrot.lane.b32.xlu0 %v2913, 112
        %v2919 = vpop.permute.xlu0 %2918
        %vm2922 = vcmask 1048448
        %2923 = vst.msk [vmem:[#allocation7 + $0x8] sm:$0xff] %vm2922, %v2917
        %vm2924 = vcmask 195584
        %2925 = vst.msk [vmem:[#allocation7 + $0x10] sm:$0xff] %vm2924, %v2917
        %2926 = vst.msk [vmem:[#allocation7 + $0x30] sm:$0xff] %vm2922, %v2919
        %2927 = vst.msk [vmem:[#allocation7 + $0x38] sm:$0xff] %vm2924, %v2919
        %vm2928 = vcmp.eq.s32.totalorder %v2823, 7
        %vm2929 = vcmp.eq.s32.totalorder %v2824, 7
        %v2930 = vsel %vm2928, %v2814, 0.0
        %v2931 = vsel %vm2929, %v2819, 0.0
        %2934 = vrot.lane.b32.xlu0 %v2930, 24
        %v2935 = vpop.permute.xlu0 %2934
        %2936 = vrot.lane.b32.xlu0 %v2931, 24
        %v2937 = vpop.permute.xlu0 %2936
        %vm2940 = vcmask 523456
        %2941 = vst.msk [vmem:[#allocation7 + $0x10] sm:$0xff] %vm2940, %v2935
        %2942 = vst.msk [vmem:[#allocation7 + $0x38] sm:$0xff] %vm2940, %v2937
        %vm2943 = vcmp.eq.s32.totalorder %v2823, 8
        %vm2944 = vcmp.eq.s32.totalorder %v2824, 8
        %v2945 = vsel %vm2943, %v2814, 0.0
        %v2946 = vsel %vm2944, %v2819, 0.0
        %2949 = vrot.lane.b32.xlu0 %v2945, 64
        %v2950 = vpop.permute.xlu0 %2949
        %2951 = vrot.lane.b32.xlu0 %v2946, 64
        %v2952 = vpop.permute.xlu0 %2951
        %vm2955 = vcmask 851456
        %2956 = vst.msk [vmem:[#allocation7 + $0x10] sm:$0xff] %vm2955, %v2950
        %2957 = vst.msk [vmem:[#allocation7 + $0x38] sm:$0xff] %vm2955, %v2952
        %vm2958 = vcmp.eq.s32.totalorder %v2823, 9
        %vm2959 = vcmp.eq.s32.totalorder %v2824, 9
        %v2960 = vsel %vm2958, %v2814, 0.0
        %v2961 = vsel %vm2959, %v2819, 0.0
        %2964 = vrot.lane.b32.xlu0 %v2960, 104
        %v2965 = vpop.permute.xlu0 %2964
        %2966 = vrot.lane.b32.xlu0 %v2961, 104
        %v2967 = vpop.permute.xlu0 %2966
        %vm2970 = vcmask 1048384
        %2971 = vst.msk [vmem:[#allocation7 + $0x10] sm:$0xff] %vm2970, %v2965
        %vm2972 = vcmask 130048
        %2973 = vst.msk [vmem:[#allocation7 + $0x18] sm:$0xff] %vm2972, %v2965
        %2974 = vst.msk [vmem:[#allocation7 + $0x38] sm:$0xff] %vm2970, %v2967
        %2975 = vst.msk [vmem:[#allocation7 + $0x40] sm:$0xff] %vm2972, %v2967
        %vm2976 = vcmp.eq.s32.totalorder %v2823, 10
        %vm2977 = vcmp.eq.s32.totalorder %v2824, 10
        %v2978 = vsel %vm2976, %v2814, 0.0
        %v2979 = vsel %vm2977, %v2819, 0.0
        %2982 = vrot.lane.b32.xlu0 %v2978, 16
        %v2983 = vpop.permute.xlu0 %2982
        %2984 = vrot.lane.b32.xlu0 %v2979, 16
        %v2985 = vpop.permute.xlu0 %2984
        %vm2988 = vcmask 457856
        %2989 = vst.msk [vmem:[#allocation7 + $0x18] sm:$0xff] %vm2988, %v2983
        %2990 = vst.msk [vmem:[#allocation7 + $0x40] sm:$0xff] %vm2988, %v2985
        %vm2991 = vcmp.eq.s32.totalorder %v2823, 11
        %vm2992 = vcmp.eq.s32.totalorder %v2824, 11
        %v2993 = vsel %vm2991, %v2814, 0.0
        %v2994 = vsel %vm2992, %v2819, 0.0
        %2997 = vrot.lane.b32.xlu0 %v2993, 56
        %v2998 = vpop.permute.xlu0 %2997
        %2999 = vrot.lane.b32.xlu0 %v2994, 56
        %v3000 = vpop.permute.xlu0 %2999
        %vm3003 = vcmask 785856
        %3004 = vst.msk [vmem:[#allocation7 + $0x18] sm:$0xff] %vm3003, %v2998
        %3005 = vst.msk [vmem:[#allocation7 + $0x40] sm:$0xff] %vm3003, %v3000
        %vm3006 = vcmp.eq.s32.totalorder %v2823, 12
        %vm3007 = vcmp.eq.s32.totalorder %v2824, 12
        %v3008 = vsel %vm3006, %v2814, 0.0
        %v3009 = vsel %vm3007, %v2819, 0.0
        %3012 = vrot.lane.b32.xlu0 %v3008, 96
        %v3013 = vpop.permute.xlu0 %3012
        %3014 = vrot.lane.b32.xlu0 %v3009, 96
        %v3015 = vpop.permute.xlu0 %3014
        %vm3018 = vcmask 1048320
        %3019 = vst.msk [vmem:[#allocation7 + $0x18] sm:$0xff] %vm3018, %v3013
        %vm3020 = vcmask 64512
        %3021 = vst.msk [vmem:[#allocation7 + $0x20] sm:$0xff] %vm3020, %v3013
        %3022 = vst.msk [vmem:[#allocation7 + $0x40] sm:$0xff] %vm3018, %v3015
        %3023 = vst.msk [vmem:[#allocation7 + $0x48] sm:$0xff] %vm3020, %v3015
        %vm3024 = vcmp.eq.s32.totalorder %v2823, 13
        %vm3025 = vcmp.eq.s32.totalorder %v2824, 13
        %v3026 = vsel %vm3024, %v2814, 0.0
        %v3027 = vsel %vm3025, %v2819, 0.0
        %3030 = vrot.lane.b32.xlu0 %v3026, 8
        %v3031 = vpop.permute.xlu0 %3030
        %3032 = vrot.lane.b32.xlu0 %v3027, 8
        %v3033 = vpop.permute.xlu0 %3032
        %vm3036 = vcmask 392256
        %3037 = vst.msk [vmem:[#allocation7 + $0x20] sm:$0xff] %vm3036, %v3031
        %3038 = vst.msk [vmem:[#allocation7 + $0x48] sm:$0xff] %vm3036, %v3033
        %vm3039 = vcmp.eq.s32.totalorder %v2823, 14
        %vm3040 = vcmp.eq.s32.totalorder %v2824, 14
        %v3041 = vsel %vm3039, %v2814, 0.0
        %v3042 = vsel %vm3040, %v2819, 0.0
        %3045 = vrot.lane.b32.xlu0 %v3041, 48
        %v3046 = vpop.permute.xlu0 %3045
        %3047 = vrot.lane.b32.xlu0 %v3042, 48
        %v3048 = vpop.permute.xlu0 %3047
        %vm3051 = vcmask 720256
        %3052 = vst.msk [vmem:[#allocation7 + $0x20] sm:$0xff] %vm3051, %v3046
        %3053 = vst.msk [vmem:[#allocation7 + $0x48] sm:$0xff] %vm3051, %v3048
        %vm3054 = vcmp.eq.s32.totalorder %v2823, 15
        %vm3055 = vcmp.eq.s32.totalorder %v2824, 15
        %v3056 = vsel %vm3054, %v2814, 0.0
        %v3057 = vsel %vm3055, %v2819, 0.0
        %3060 = vrot.lane.b32.xlu0 %v3056, 88
        %v3061 = vpop.permute.xlu0 %3060
        %3062 = vrot.lane.b32.xlu0 %v3057, 88
        %v3063 = vpop.permute.xlu0 %3062
        %vm3066 = vcmask 1048256
        %3067 = vst.msk [vmem:[#allocation7 + $0x20] sm:$0xff] %vm3066, %v3061
        %3068 = vst.msk [vmem:[#allocation7 + $0x48] sm:$0xff] %vm3066, %v3063
        %v3069 = vld [vmem:[#allocation7] sm:$0xff]
        %v3070 = vld [vmem:[#allocation7 + $0x8] sm:$0xff]
        %v3071 = vld [vmem:[#allocation7 + $0x10] sm:$0xff]
        %v3072 = vld [vmem:[#allocation7 + $0x18] sm:$0xff]
        %v3073 = vld [vmem:[#allocation7 + $0x20] sm:$0xff]
        %v3074 = vld [vmem:[#allocation7 + $0x28] sm:$0xff]
        %v3075 = vld [vmem:[#allocation7 + $0x30] sm:$0xff]
        %v3076 = vld [vmem:[#allocation7 + $0x38] sm:$0xff]
        %v3077 = vld [vmem:[#allocation7 + $0x40] sm:$0xff]
        %v3078 = vld [vmem:[#allocation7 + $0x48] sm:$0xff]
        %v3079 = vld [vmem:[%s7] sm:$0xff]
        %v3080 = vld [vmem:[%s7 + $0x8] sm:$0xff]
        %v3081 = vld [vmem:[%s7 + $0x10] sm:$0xff]
        %v3082 = vld [vmem:[%s7 + $0x18] sm:$0xff]
        %v3083 = vld [vmem:[%s7 + $0x20] sm:$0xff]
        %v3084 = vld [vmem:[%s7 + $0x28] sm:$0xff]
        %v3085 = vld [vmem:[%s7 + $0x30] sm:$0xff]
        %v3086 = vld [vmem:[%s7 + $0x38] sm:$0xff]
        %v3087 = vld [vmem:[%s7 + $0x40] sm:$0xff]
        %v3088 = vld [vmem:[%s7 + $0x48] sm:$0xff]
        %v3089 = vld [vmem:[%s7 + $0x50] sm:$0xff]
        %v3090 = vld [vmem:[%s7 + $0x58] sm:$0xff]
        %v3091 = vld [vmem:[%s7 + $0x60] sm:$0xff]
        %v3092 = vld [vmem:[%s7 + $0x68] sm:$0xff]
        %v3093 = vld [vmem:[%s7 + $0x70] sm:$0xff]
        %v3094 = vld [vmem:[%s7 + $0x78] sm:$0xff]
        %v3095 = vld [vmem:[%s7 + $0x80] sm:$0xff]
        %v3096 = vld [vmem:[%s7 + $0x88] sm:$0xff]
        %v3097 = vld [vmem:[%s7 + $0x90] sm:$0xff]
        %v3098 = vld [vmem:[%s7 + $0x98] sm:$0xff]
        %v3099 = vld [vmem:[%s7 + $0xa0] sm:$0xff]
        %v3100 = vld [vmem:[%s7 + $0xa8] sm:$0xff]
        %v3101 = vld [vmem:[%s7 + $0xb0] sm:$0xff]
        %v3102 = vld [vmem:[%s7 + $0xb8] sm:$0xff]
        %v3103 = vld [vmem:[%s7 + $0xc0] sm:$0xff]
        %v3104 = vld [vmem:[%s7 + $0xc8] sm:$0xff]
        %v3105 = vld [vmem:[%s7 + $0xd0] sm:$0xff]
        %v3106 = vld [vmem:[%s7 + $0xd8] sm:$0xff]
        %v3107 = vld [vmem:[%s7 + $0xe0] sm:$0xff]
        %v3108 = vld [vmem:[%s7 + $0xe8] sm:$0xff]
        %v3109 = vld [vmem:[%s7 + $0xf0] sm:$0xff]
        %v3110 = vld [vmem:[%s7 + $0xf8] sm:$0xff]
        %v3111 = vld [vmem:[%s7 + $0x100] sm:$0xff]
        %v3112 = vld [vmem:[%s7 + $0x108] sm:$0xff]
        %v3113 = vld [vmem:[%s7 + $0x110] sm:$0xff]
        %v3114 = vld [vmem:[%s7 + $0x118] sm:$0xff]
        %v3115 = vld [vmem:[%s7 + $0x120] sm:$0xff]
        %v3116 = vld [vmem:[%s7 + $0x128] sm:$0xff]
        %v3117 = vld [vmem:[%s7 + $0x130] sm:$0xff]
        %v3118 = vld [vmem:[%s7 + $0x138] sm:$0xff]
        %v3119 = vld [vmem:[%s7 + $0x140] sm:$0xff]
        %v3120 = vld [vmem:[%s7 + $0x148] sm:$0xff]
        %v3121 = vld [vmem:[%s7 + $0x150] sm:$0xff]
        %v3122 = vld [vmem:[%s7 + $0x158] sm:$0xff]
        %v3123 = vld [vmem:[%s7 + $0x160] sm:$0xff]
        %v3124 = vld [vmem:[%s7 + $0x168] sm:$0xff]
        %v3125 = vld [vmem:[%s7 + $0x170] sm:$0xff]
        %v3126 = vld [vmem:[%s7 + $0x178] sm:$0xff]
        %v3127 = vld [vmem:[%s7 + $0x180] sm:$0xff]
        %v3128 = vld [vmem:[%s7 + $0x188] sm:$0xff]
        %v3129 = vld [vmem:[%s7 + $0x190] sm:$0xff]
        %v3130 = vld [vmem:[%s7 + $0x198] sm:$0xff]
        %v3131 = vld [vmem:[%s7 + $0x1a0] sm:$0xff]
        %v3132 = vld [vmem:[%s7 + $0x1a8] sm:$0xff]
        %v3133 = vld [vmem:[%s7 + $0x1b0] sm:$0xff]
        %v3134 = vld [vmem:[%s7 + $0x1b8] sm:$0xff]
        %v3135 = vld [vmem:[%s7 + $0x1c0] sm:$0xff]
        %v3136 = vld [vmem:[%s7 + $0x1c8] sm:$0xff]
        %v3137 = vld [vmem:[%s7 + $0x1d0] sm:$0xff]
        %v3138 = vld [vmem:[%s7 + $0x1d8] sm:$0xff]
        %v3139 = vld [vmem:[%s7 + $0x1e0] sm:$0xff]
        %v3140 = vld [vmem:[%s7 + $0x1e8] sm:$0xff]
        %v3141 = vld [vmem:[%s7 + $0x1f0] sm:$0xff]
        %v3142 = vld [vmem:[%s7 + $0x1f8] sm:$0xff]
        %v3143 = vld [vmem:[%s7 + $0x200] sm:$0xff]
        %v3144 = vld [vmem:[%s7 + $0x208] sm:$0xff]
        %v3145 = vld [vmem:[%s7 + $0x210] sm:$0xff]
        %v3146 = vld [vmem:[%s7 + $0x218] sm:$0xff]
        %v3147 = vld [vmem:[%s7 + $0x220] sm:$0xff]
        %v3148 = vld [vmem:[%s7 + $0x228] sm:$0xff]
        %v3149 = vld [vmem:[%s7 + $0x230] sm:$0xff]
        %v3150 = vld [vmem:[%s7 + $0x238] sm:$0xff]
        %v3151 = vld [vmem:[%s7 + $0x240] sm:$0xff]
        %v3152 = vld [vmem:[%s7 + $0x248] sm:$0xff]
        %v3153 = vld [vmem:[%s7 + $0x250] sm:$0xff]
        %v3154 = vld [vmem:[%s7 + $0x258] sm:$0xff]
        %v3155 = vld [vmem:[%s7 + $0x260] sm:$0xff]
        %v3156 = vld [vmem:[%s7 + $0x268] sm:$0xff]
        %v3157 = vld [vmem:[%s7 + $0x270] sm:$0xff]
        %v3158 = vld [vmem:[%s7 + $0x278] sm:$0xff]
        %3159 = vmatprep.subr.mxu0 0.0
        %3160 = vmatpush1.msra.mxu0 %v3079
        %3161 = vmatprep.subr.mxu0 0.0
        %3162 = vmatpush1.msra.mxu0 %v3080
        %3163 = vmatprep.subr.mxu0 0.0
        %3164 = vmatpush1.msra.mxu0 %v3081
        %3165 = vmatprep.subr.mxu0 0.0
        %3166 = vmatpush1.msra.mxu0 %v3082
        %3167 = vmatprep.subr.mxu0 0.0
        %3168 = vmatpush1.msra.mxu0 %v3083
        %3169 = vmatprep.subr.mxu0 0.0
        %3170 = vmatpush1.msra.mxu0 %v3084
        %3171 = vmatprep.subr.mxu0 0.0
        %3172 = vmatpush1.msra.mxu0 %v3085
        %3173 = vmatprep.subr.mxu0 0.0
        %3174 = vmatpush1.msra.mxu0 %v3086
        %3175 = vmatprep.subr.mxu0 0.0
        %3176 = vmatpush1.msra.mxu0 %v3087
        %3177 = vmatprep.subr.mxu0 0.0
        %3178 = vmatpush1.msra.mxu0 %v3088
        %3179 = vmatprep.subr.mxu0 0.0
        %3180 = vmatpush1.msra.mxu0 %v3089
        %3181 = vmatprep.subr.mxu0 0.0
        %3182 = vmatpush1.msra.mxu0 %v3090
        %3183 = vmatprep.subr.mxu0 0.0
        %3184 = vmatpush1.msra.mxu0 %v3091
        %3185 = vmatprep.subr.mxu0 0.0
        %3186 = vmatpush1.msra.mxu0 %v3092
        %3187 = vmatprep.subr.mxu0 0.0
        %3188 = vmatpush1.msra.mxu0 %v3093
        %3189 = vmatprep.subr.mxu0 0.0
        %3190 = vmatpush1.msra.mxu0 %v3094
        %3191 = vmatprep.subr.mxu0 0.0
        %3192 = vmatpush1.msra.mxu0 %v3095
        %3193 = vmatprep.subr.mxu0 0.0
        %3194 = vmatpush1.msra.mxu0 %v3096
        %3195 = vmatprep.subr.mxu0 0.0
        %3196 = vmatpush1.msra.mxu0 %v3097
        %3197 = vmatprep.subr.mxu0 0.0
        %3198 = vmatpush1.msra.mxu0 %v3098
        %3199 = vmatprep.subr.mxu0 0.0
        %3200 = vmatpush1.msra.mxu0 %v3099
        %3201 = vmatprep.subr.mxu0 0.0
        %3202 = vmatpush1.msra.mxu0 %v3100
        %3203 = vmatprep.subr.mxu0 0.0
        %3204 = vmatpush1.msra.mxu0 %v3101
        %3205 = vmatprep.subr.mxu0 0.0
        %3206 = vmatpush1.msra.mxu0 %v3102
        %3207 = vmatprep.subr.mxu0 0.0
        %3208 = vmatpush1.msra.mxu0 %v3103
        %3209 = vmatprep.subr.mxu0 0.0
        %3210 = vmatpush1.msra.mxu0 %v3104
        %3211 = vmatprep.subr.mxu0 0.0
        %3212 = vmatpush1.msra.mxu0 %v3105
        %3213 = vmatprep.subr.mxu0 0.0
        %3214 = vmatpush1.msra.mxu0 %v3106
        %3215 = vmatprep.subr.mxu0 0.0
        %3216 = vmatpush1.msra.mxu0 %v3107
        %3217 = vmatprep.subr.mxu0 0.0
        %3218 = vmatpush1.msra.mxu0 %v3108
        %3219 = vmatprep.subr.mxu0 0.0
        %3220 = vmatpush1.msra.mxu0 %v3109
        %3221 = vmatprep.subr.mxu0 0.0
        %3222 = vmatpush1.msra.mxu0 %v3110
        %3223 = vmatprep.mubr.f32.mxu0 %v3070
        %3224 = vmatmul.mubr.f32.gmra.mrb[0].mxu0 %v3069
        %v3225 = vpop.f32.mrb[0].mxu0
        %v3226 = vadd.f32 0.0, %v3225
        %v3227 = vpop.f32.mrb[0].mxu0
        %3228 = vmatprep.mubr.f32.mxu0 %v3075
        %3229 = vmatmul.mubr.f32.gmra.mrb[0].mxu0 %v3074
        %v3230 = vpop.f32.mrb[0].mxu0
        %v3231 = vadd.f32 0.0, %v3230
        %v3232 = vpop.f32.mrb[0].mxu0
        %3233 = vdwg.mxu0
        %3234 = vmatprep.subr.mxu0 0.0
        %3235 = vmatpush1.msra.mxu0 %v3111
        %3236 = vmatprep.subr.mxu0 0.0
        %3237 = vmatpush1.msra.mxu0 %v3112
        %3238 = vmatprep.subr.mxu0 0.0
        %3239 = vmatpush1.msra.mxu0 %v3113
        %3240 = vmatprep.subr.mxu0 0.0
        %3241 = vmatpush1.msra.mxu0 %v3114
        %3242 = vmatprep.subr.mxu0 0.0
        %3243 = vmatpush1.msra.mxu0 %v3115
        %3244 = vmatprep.subr.mxu0 0.0
        %3245 = vmatpush1.msra.mxu0 %v3116
        %3246 = vmatprep.subr.mxu0 0.0
        %3247 = vmatpush1.msra.mxu0 %v3117
        %3248 = vmatprep.subr.mxu0 0.0
        %3249 = vmatpush1.msra.mxu0 %v3118
        %3250 = vmatprep.subr.mxu0 0.0
        %3251 = vmatpush1.msra.mxu0 %v3119
        %3252 = vmatprep.subr.mxu0 0.0
        %3253 = vmatpush1.msra.mxu0 %v3120
        %3254 = vmatprep.subr.mxu0 0.0
        %3255 = vmatpush1.msra.mxu0 %v3121
        %3256 = vmatprep.subr.mxu0 0.0
        %3257 = vmatpush1.msra.mxu0 %v3122
        %3258 = vmatprep.subr.mxu0 0.0
        %3259 = vmatpush1.msra.mxu0 %v3123
        %3260 = vmatprep.subr.mxu0 0.0
        %3261 = vmatpush1.msra.mxu0 %v3124
        %3262 = vmatprep.subr.mxu0 0.0
        %3263 = vmatpush1.msra.mxu0 %v3125
        %3264 = vmatprep.subr.mxu0 0.0
        %3265 = vmatpush1.msra.mxu0 %v3126
        %3266 = vmatprep.subr.mxu0 0.0
        %3267 = vmatpush1.msra.mxu0 %v3127
        %3268 = vmatprep.subr.mxu0 0.0
        %3269 = vmatpush1.msra.mxu0 %v3128
        %3270 = vmatprep.subr.mxu0 0.0
        %3271 = vmatpush1.msra.mxu0 %v3129
        %3272 = vmatprep.subr.mxu0 0.0
        %3273 = vmatpush1.msra.mxu0 %v3130
        %3274 = vmatprep.subr.mxu0 0.0
        %3275 = vmatpush1.msra.mxu0 %v3131
        %3276 = vmatprep.subr.mxu0 0.0
        %3277 = vmatpush1.msra.mxu0 %v3132
        %3278 = vmatprep.subr.mxu0 0.0
        %3279 = vmatpush1.msra.mxu0 %v3133
        %3280 = vmatprep.subr.mxu0 0.0
        %3281 = vmatpush1.msra.mxu0 %v3134
        %3282 = vmatprep.subr.mxu0 0.0
        %3283 = vmatpush1.msra.mxu0 %v3135
        %3284 = vmatprep.subr.mxu0 0.0
        %3285 = vmatpush1.msra.mxu0 %v3136
        %3286 = vmatprep.subr.mxu0 0.0
        %3287 = vmatpush1.msra.mxu0 %v3137
        %3288 = vmatprep.subr.mxu0 0.0
        %3289 = vmatpush1.msra.mxu0 %v3138
        %3290 = vmatprep.subr.mxu0 0.0
        %3291 = vmatpush1.msra.mxu0 %v3139
        %3292 = vmatprep.subr.mxu0 0.0
        %3293 = vmatpush1.msra.mxu0 %v3140
        %3294 = vmatprep.subr.mxu0 0.0
        %3295 = vmatpush1.msra.mxu0 %v3141
        %3296 = vmatprep.subr.mxu0 0.0
        %3297 = vmatpush1.msra.mxu0 %v3142
        %3298 = vmatprep.mubr.f32.mxu0 %v3072
        %3299 = vmatmul.mubr.f32.gmra.mrb[0].mxu0 %v3071
        %v3300 = vpop.f32.mrb[0].mxu0
        %v3301 = vadd.f32 %v3226, %v3300
        %v3302 = vpop.f32.mrb[0].mxu0
        %3303 = vmatprep.mubr.f32.mxu0 %v3077
        %3304 = vmatmul.mubr.f32.gmra.mrb[0].mxu0 %v3076
        %v3305 = vpop.f32.mrb[0].mxu0
        %v3306 = vadd.f32 %v3231, %v3305
        %v3307 = vpop.f32.mrb[0].mxu0
        %3308 = vdwg.mxu0
        %3309 = vmatprep.subr.mxu0 0.0
        %3310 = vmatpush1.msra.mxu0 %v3143
        %3311 = vmatprep.subr.mxu0 0.0
        %3312 = vmatpush1.msra.mxu0 %v3144
        %3313 = vmatprep.subr.mxu0 0.0
        %3314 = vmatpush1.msra.mxu0 %v3145
        %3315 = vmatprep.subr.mxu0 0.0
        %3316 = vmatpush1.msra.mxu0 %v3146
        %3317 = vmatprep.subr.mxu0 0.0
        %3318 = vmatpush1.msra.mxu0 %v3147
        %3319 = vmatprep.subr.mxu0 0.0
        %3320 = vmatpush1.msra.mxu0 %v3148
        %3321 = vmatprep.subr.mxu0 0.0
        %3322 = vmatpush1.msra.mxu0 %v3149
        %3323 = vmatprep.subr.mxu0 0.0
        %3324 = vmatpush1.msra.mxu0 %v3150
        %3325 = vmatprep.subr.mxu0 0.0
        %3326 = vmatpush1.msra.mxu0 %v3151
        %3327 = vmatprep.subr.mxu0 0.0
        %3328 = vmatpush1.msra.mxu0 %v3152
        %3329 = vmatprep.subr.mxu0 0.0
        %3330 = vmatpush1.msra.mxu0 %v3153
        %3331 = vmatprep.subr.mxu0 0.0
        %3332 = vmatpush1.msra.mxu0 %v3154
        %3333 = vmatprep.subr.mxu0 0.0
        %3334 = vmatpush1.msra.mxu0 %v3155
        %3335 = vmatprep.subr.mxu0 0.0
        %3336 = vmatpush1.msra.mxu0 %v3156
        %3337 = vmatprep.subr.mxu0 0.0
        %3338 = vmatpush1.msra.mxu0 %v3157
        %3339 = vmatprep.subr.mxu0 0.0
        %3340 = vmatpush1.msra.mxu0 %v3158
        %3341 = vmatprep.subr.mxu0 0.0
        %3342 = vmatpush1.msra.mxu0 0.0
        %3343 = vmatprep.subr.mxu0 0.0
        %3344 = vmatpush1.msra.mxu0 0.0
        %3345 = vmatprep.subr.mxu0 0.0
        %3346 = vmatpush1.msra.mxu0 0.0
        %3347 = vmatprep.subr.mxu0 0.0
        %3348 = vmatpush1.msra.mxu0 0.0
        %3349 = vmatprep.subr.mxu0 0.0
        %3350 = vmatpush1.msra.mxu0 0.0
        %3351 = vmatprep.subr.mxu0 0.0
        %3352 = vmatpush1.msra.mxu0 0.0
        %3353 = vmatprep.subr.mxu0 0.0
        %3354 = vmatpush1.msra.mxu0 0.0
        %3355 = vmatprep.subr.mxu0 0.0
        %3356 = vmatpush1.msra.mxu0 0.0
        %3357 = vmatprep.subr.mxu0 0.0
        %3358 = vmatpush1.msra.mxu0 0.0
        %3359 = vmatprep.subr.mxu0 0.0
        %3360 = vmatpush1.msra.mxu0 0.0
        %3361 = vmatprep.subr.mxu0 0.0
        %3362 = vmatpush1.msra.mxu0 0.0
        %3363 = vmatprep.subr.mxu0 0.0
        %3364 = vmatpush1.msra.mxu0 0.0
        %3365 = vmatprep.subr.mxu0 0.0
        %3366 = vmatpush1.msra.mxu0 0.0
        %3367 = vmatprep.subr.mxu0 0.0
        %3368 = vmatpush1.msra.mxu0 0.0
        %3369 = vmatprep.subr.mxu0 0.0
        %3370 = vmatpush1.msra.mxu0 0.0
        %3371 = vmatprep.subr.mxu0 0.0
        %3372 = vmatpush1.msra.mxu0 0.0
        %3373 = vmatprep.mubr.f32.mxu0 0.0
        %3374 = vmatmul.mubr.f32.gmra.mrb[0].mxu0 %v3073
        %v3375 = vpop.f32.mrb[0].mxu0
        %v3376 = vadd.f32 %v3301, %v3375
        %v3377 = vpop.f32.mrb[0].mxu0
        %3378 = vmatprep.mubr.f32.mxu0 0.0
        %3379 = vmatmul.mubr.f32.gmra.mrb[0].mxu0 %v3078
        %v3380 = vpop.f32.mrb[0].mxu0
        %v3381 = vadd.f32 %v3306, %v3380
        %v3382 = vpop.f32.mrb[0].mxu0
        %3383 = vdwg.mxu0
        %vm3384 = vcmask 982016
        %v3385 = vsel %vm3384, %v3376, 0.0
        %v3386 = vsel %vm3384, %v3381, 0.0
        %v3387 = vadd.f32 %v3385, %v3386
        %v3388 = vrot.slane %v3387, 4
        %v3389 = vadd.f32 %v3387, %v3388
        %v3390 = vrot.slane %v3389, 2
        %v3391 = vadd.f32 %v3389, %v3390
        %v3392 = vrot.slane %v3391, 1
        %v3393 = vadd.f32 %v3391, %v3392
        %v3394 = vld [vmem:[%s8] sm:$0x1]
        %v3395 = vadd.f32 %v3393, %v3394
        %v3396 = vmax.f32 %v3395, 0.0
        %v3397 = vld [vmem:[%s9] sm:$0xff]
        %v3398 = vld [vmem:[%s9 + $0x8] sm:$0xff]
        %v3399 = vld [vmem:[%s9 + $0x10] sm:$0xff]
        %v3400 = vld [vmem:[%s9 + $0x18] sm:$0xff]
        %v3401 = vld [vmem:[%s9 + $0x20] sm:$0xff]
        %v3402 = vld [vmem:[%s9 + $0x28] sm:$0xff]
        %v3403 = vld [vmem:[%s9 + $0x30] sm:$0xff]
        %v3404 = vld [vmem:[%s9 + $0x38] sm:$0xff]
        %v3405 = vld [vmem:[%s9 + $0x40] sm:$0xff]
        %v3406 = vld [vmem:[%s9 + $0x48] sm:$0xff]
        %v3407 = vld [vmem:[%s9 + $0x50] sm:$0xff]
        %v3408 = vld [vmem:[%s9 + $0x58] sm:$0xff]
        %v3409 = vld [vmem:[%s9 + $0x60] sm:$0xff]
        %v3410 = vld [vmem:[%s9 + $0x68] sm:$0xff]
        %v3411 = vld [vmem:[%s9 + $0x70] sm:$0xff]
        %v3412 = vld [vmem:[%s10] sm:$0x1]
        %v3414 = vsel %vm3384, %v3396, 0
        %3416 = vmatprep.subr.mxu0 0.0
        %3417 = vmatpush1.msra.mxu0 %v3397
        %3418 = vmatprep.subr.mxu0 0.0
        %3419 = vmatpush1.msra.mxu0 %v3398
        %3420 = vmatprep.subr.mxu0 0.0
        %3421 = vmatpush1.msra.mxu0 %v3399
        %3422 = vmatprep.subr.mxu0 0.0
        %3423 = vmatpush1.msra.mxu0 %v3400
        %3424 = vmatprep.subr.mxu0 0.0
        %3425 = vmatpush1.msra.mxu0 %v3401
        %3426 = vmatprep.subr.mxu0 0.0
        %3427 = vmatpush1.msra.mxu0 %v3402
        %3428 = vmatprep.subr.mxu0 0.0
        %3429 = vmatpush1.msra.mxu0 %v3403
        %3430 = vmatprep.subr.mxu0 0.0
        %3431 = vmatpush1.msra.mxu0 %v3404
        %3432 = vmatprep.subr.mxu0 0.0
        %3433 = vmatpush1.msra.mxu0 %v3405
        %3434 = vmatprep.subr.mxu0 0.0
        %3435 = vmatpush1.msra.mxu0 %v3406
        %3436 = vmatprep.subr.mxu0 0.0
        %3437 = vmatpush1.msra.mxu0 %v3407
        %3438 = vmatprep.subr.mxu0 0.0
        %3439 = vmatpush1.msra.mxu0 %v3408
        %3440 = vmatprep.subr.mxu0 0.0
        %3441 = vmatpush1.msra.mxu0 %v3409
        %3442 = vmatprep.subr.mxu0 0.0
        %3443 = vmatpush1.msra.mxu0 %v3410
        %3444 = vmatprep.subr.mxu0 0.0
        %3445 = vmatpush1.msra.mxu0 %v3411
        %3446 = vmatprep.subr.mxu0 0.0
        %3447 = vmatpush1.msra.mxu0 0.0
        %3448 = vmatprep.subr.mxu0 0.0
        %3449 = vmatpush1.msra.mxu0 0.0
        %3450 = vmatprep.subr.mxu0 0.0
        %3451 = vmatpush1.msra.mxu0 0.0
        %3452 = vmatprep.subr.mxu0 0.0
        %3453 = vmatpush1.msra.mxu0 0.0
        %3454 = vmatprep.subr.mxu0 0.0
        %3455 = vmatpush1.msra.mxu0 0.0
        %3456 = vmatprep.subr.mxu0 0.0
        %3457 = vmatpush1.msra.mxu0 0.0
        %3458 = vmatprep.subr.mxu0 0.0
        %3459 = vmatpush1.msra.mxu0 0.0
        %3460 = vmatprep.subr.mxu0 0.0
        %3461 = vmatpush1.msra.mxu0 0.0
        %3462 = vmatprep.subr.mxu0 0.0
        %3463 = vmatpush1.msra.mxu0 0.0
        %3464 = vmatprep.subr.mxu0 0.0
        %3465 = vmatpush1.msra.mxu0 0.0
        %3466 = vmatprep.subr.mxu0 0.0
        %3467 = vmatpush1.msra.mxu0 0.0
        %3468 = vmatprep.subr.mxu0 0.0
        %3469 = vmatpush1.msra.mxu0 0.0
        %3470 = vmatprep.subr.mxu0 0.0
        %3471 = vmatpush1.msra.mxu0 0.0
        %3472 = vmatprep.subr.mxu0 0.0
        %3473 = vmatpush1.msra.mxu0 0.0
        %3474 = vmatprep.subr.mxu0 0.0
        %3475 = vmatpush1.msra.mxu0 0.0
        %3476 = vmatprep.subr.mxu0 0.0
        %3477 = vmatpush1.msra.mxu0 0.0
        %3478 = vmatprep.subr.mxu0 0.0
        %3479 = vmatpush1.msra.mxu0 0.0
        %3480 = vmatprep.mubr.f32.mxu0 0.0
        %3481 = vmatmul.mubr.f32.gmra.mrb[0].mxu0 %v3414
        %v3482 = vpop.f32.mrb[0].mxu0
        %v3483 = vadd.f32 %v3412, %v3482
        %v3484 = vpop.f32.mrb[0].mxu0
        %3485 = vdwg.mxu0
        %v3486 = vmax.f32 %v3483, 0.0
        %v3487 = vld [vmem:[%s11] sm:$0xff]
        %v3488 = vld [vmem:[%s11 + $0x8] sm:$0xff]
        %v3489 = vld [vmem:[%s11 + $0x10] sm:$0xff]
        %v3490 = vld [vmem:[%s11 + $0x18] sm:$0xff]
        %v3491 = vld [vmem:[%s11 + $0x20] sm:$0xff]
        %v3492 = vld [vmem:[%s11 + $0x28] sm:$0xff]
        %v3493 = vld [vmem:[%s11 + $0x30] sm:$0xff]
        %v3494 = vld [vmem:[%s11 + $0x38] sm:$0xff]
        %v3495 = vld [vmem:[%s11 + $0x40] sm:$0xff]
        %v3496 = vld [vmem:[%s11 + $0x48] sm:$0xff]
        %v3497 = vld [vmem:[%s11 + $0x50] sm:$0xf]
        %v3498 = vld [vmem:[%s12] sm:$0x1]
        %vm3499 = vcmask 687104
        %v3501 = vsel %vm3499, %v3486, 0
        %vm3503 = vcmask 1043456
        %v3505 = vsel %vm3503, %v3497, 0
        %3507 = vmatprep.subr.mxu0 0.0
        %3508 = vmatpush1.msra.mxu0 %v3487
        %3509 = vmatprep.subr.mxu0 0.0
        %3510 = vmatpush1.msra.mxu0 %v3488
        %3511 = vmatprep.subr.mxu0 0.0
        %3512 = vmatpush1.msra.mxu0 %v3489
        %3513 = vmatprep.subr.mxu0 0.0
        %3514 = vmatpush1.msra.mxu0 %v3490
        %3515 = vmatprep.subr.mxu0 0.0
        %3516 = vmatpush1.msra.mxu0 %v3491
        %3517 = vmatprep.subr.mxu0 0.0
        %3518 = vmatpush1.msra.mxu0 %v3492
        %3519 = vmatprep.subr.mxu0 0.0
        %3520 = vmatpush1.msra.mxu0 %v3493
        %3521 = vmatprep.subr.mxu0 0.0
        %3522 = vmatpush1.msra.mxu0 %v3494
        %3523 = vmatprep.subr.mxu0 0.0
        %3524 = vmatpush1.msra.mxu0 %v3495
        %3525 = vmatprep.subr.mxu0 0.0
        %3526 = vmatpush1.msra.mxu0 %v3496
        %3527 = vmatprep.subr.mxu0 0.0
        %3528 = vmatpush1.msra.mxu0 %v3505
        %3529 = vmatprep.subr.mxu0 0.0
        %3530 = vmatpush1.msra.mxu0 0.0
        %3531 = vmatprep.subr.mxu0 0.0
        %3532 = vmatpush1.msra.mxu0 0.0
        %3533 = vmatprep.subr.mxu0 0.0
        %3534 = vmatpush1.msra.mxu0 0.0
        %3535 = vmatprep.subr.mxu0 0.0
        %3536 = vmatpush1.msra.mxu0 0.0
        %3537 = vmatprep.subr.mxu0 0.0
        %3538 = vmatpush1.msra.mxu0 0.0
        %3539 = vmatprep.subr.mxu0 0.0
        %3540 = vmatpush1.msra.mxu0 0.0
        %3541 = vmatprep.subr.mxu0 0.0
        %3542 = vmatpush1.msra.mxu0 0.0
        %3543 = vmatprep.subr.mxu0 0.0
        %3544 = vmatpush1.msra.mxu0 0.0
        %3545 = vmatprep.subr.mxu0 0.0
        %3546 = vmatpush1.msra.mxu0 0.0
        %3547 = vmatprep.subr.mxu0 0.0
        %3548 = vmatpush1.msra.mxu0 0.0
        %3549 = vmatprep.subr.mxu0 0.0
        %3550 = vmatpush1.msra.mxu0 0.0
        %3551 = vmatprep.subr.mxu0 0.0
        %3552 = vmatpush1.msra.mxu0 0.0
        %3553 = vmatprep.subr.mxu0 0.0
        %3554 = vmatpush1.msra.mxu0 0.0
        %3555 = vmatprep.subr.mxu0 0.0
        %3556 = vmatpush1.msra.mxu0 0.0
        %3557 = vmatprep.subr.mxu0 0.0
        %3558 = vmatpush1.msra.mxu0 0.0
        %3559 = vmatprep.subr.mxu0 0.0
        %3560 = vmatpush1.msra.mxu0 0.0
        %3561 = vmatprep.subr.mxu0 0.0
        %3562 = vmatpush1.msra.mxu0 0.0
        %3563 = vmatprep.subr.mxu0 0.0
        %3564 = vmatpush1.msra.mxu0 0.0
        %3565 = vmatprep.subr.mxu0 0.0
        %3566 = vmatpush1.msra.mxu0 0.0
        %3567 = vmatprep.subr.mxu0 0.0
        %3568 = vmatpush1.msra.mxu0 0.0
        %3569 = vmatprep.subr.mxu0 0.0
        %3570 = vmatpush1.msra.mxu0 0.0
        %3571 = vmatprep.mubr.f32.mxu0 0.0
        %3572 = vmatmul.mubr.f32.gmra.mrb[0].mxu0 %v3501
        %v3573 = vpop.f32.mrb[0].mxu0
        %v3574 = vadd.f32 %v3498, %v3573
        %v3575 = vpop.f32.mrb[0].mxu0
        %3576 = vdwg.mxu0
        %vm3577 = vcmask 73728
        %3578 = vst.msk [vmem:[%s430] sm:$0x1] %vm3577, %v3574
        %s3579 = sand.u32 %s313, 1
        %s3580 = scalar_lea.sflag [#allocation9], %s3579
        %s3581 = sand.u32 %s313, 1
        %s3582 = scalar_lea.vmem [#allocation8], %s3581
        // Predicated region
        $region73: #{net_forward.1} parent=71 // pred_check
          %p3583 = pneg %p323
        $region74: #{net_forward.1} parent=71 // pred_check_branch
          %3585 = sbr.rel (%p3583) target = $region76
        $region75: #{net_forward.1} parent=71 // pred_region
          %s3587 = ssub.s32 16, 16
          %3588 = vsyncadd %s3580, %s3587
          %s3589 = smul.addr %s27, 16
          %s3590 = scalar_lea.hbm %s13, %s3589
          %s3592 = sshll.u32 %s3582, 4
          %s3593 = int_to_ptr.vmem [resolvable:$true] %s3592
          %3595 = dma.vmem_to_hbm [thread:$0]  %s3593, 16, %s3590, %s3580
        $region76: #{net_forward.1} parent=71 // pred_fallthru
          _
      $region72: #{net_forward.1} parent=5 // pred_fallthru
        _
      %p3596 = scmp.le.s32.totalorder 2, %s22
      // Predicated region
      $region77: #{net_forward.1} parent=5 // pred_check
        %p3597 = pneg %p3596
      $region78: #{net_forward.1} parent=5 // pred_check_branch
        %3599 = sbr.rel (%p3597) target = $region80
      $region79: #{net_forward.1} parent=5 // pred_region
        %s3600 = ssub.s32 %s22, 2
        // Predicated region
        $region81: #{net_forward.1} parent=79 // pred_check
          %p3601 = pneg %p329
        $region82: #{net_forward.1} parent=79 // pred_check_branch
          %3603 = sbr.rel (%p3601) target = $region84
        $region83: #{net_forward.1} parent=79 // pred_region
          %s3604 = sand.u32 %s314, 1
          %s3605 = scalar_lea.sflag [#allocation9], %s3604
          %s3606 = sand.u32 %s314, 1
          %s3607 = scalar_lea.vmem [#allocation8], %s3606
          %3608 = dma.done %s3605, 16
        $region84: #{net_forward.1} parent=79 // pred_fallthru
          _
      $region80: #{net_forward.1} parent=5 // pred_fallthru
        _
    $region6: #{net_forward.1} parent=1 // loop_footer
      %s26 = sadd.s32 1, %s22
    $region7: #{net_forward.1} parent=1 // loop_footer_branch
      %21 = sbr.rel target = $region3
    $region8: #{net_forward.1} parent=1 // loop_exit
      _
    %3609 = vsyncpa [#allocation9], 1
    %s3610 = scalar_lea.sflag [#allocation9], 1
    %3611 = vsyncpa %s3610, 1

</llo_original>
